<compile_context>
chip_gen: v7x
topology: tpu7x:2x2x1
jax: 0.10.0
libtpu: 0.0.40
codegen_flags: <defaults>
</compile_context>

<pallas_src>
import functools

import jax
import jax.numpy as jnp
from jax import lax
from jax.experimental import pallas as pl
from jax.experimental.pallas import tpu as pltpu


_VMEM_LIMIT_BYTES = 48 * 1024 * 1024   # explicit scoped-VMEM budget (leave headroom on v7x)


# ---------------------------------------------------------------------------
# Shared LSTM cell math (gates already contain x@W_ih + b; gate order i, f, g, o).
# Kept in f32 on all generations (v5e VPU/EUP have no bf16 path).
# ---------------------------------------------------------------------------
def _cell_from_gates(gates, c, H):
    i = jax.nn.sigmoid(gates[:, 0 * H:1 * H])
    f = jax.nn.sigmoid(gates[:, 1 * H:2 * H])
    g = jnp.tanh(gates[:, 2 * H:3 * H])
    o = jax.nn.sigmoid(gates[:, 3 * H:4 * H])
    c_new = f * c + i * g
    h_new = o * jnp.tanh(c_new)
    return h_new, c_new


# ---------------------------------------------------------------------------
# Kernel 1: T-tiled bidirectional encoder LSTM (interleaved fwd/bwd) -> fused mu/logvar head.
# Grid axis 0 = T tiles ("arbitrary"); h/c state persists in VMEM scratch across tiles.
# ---------------------------------------------------------------------------
def _encoder_kernel(embf_ref, embb_ref,                 # (Tt*Bp, E) fwd / bwd emb tiles
                    wih_f_ref, whh_f_ref, b_f_ref,      # forward LSTM
                    wih_b_ref, whh_b_ref, b_b_ref,      # backward LSTM
                    wmulv_ref, bmulv_ref,               # fused [mu|logvar] head
                    mu_ref, logvar_ref,                 # (Bp, L) outputs (resident)
                    gxf_sc, gxb_sc,                     # (Tt*Bp, 4H) per-tile gate scratch
                    hf_sc, cf_sc, hb_sc, cb_sc):        # (Bp, H) persistent carries
    Bp, L = mu_ref.shape
    H = hf_sc.shape[1]
    Tt = gxf_sc.shape[0] // Bp
    tb = pl.program_id(0)

    @pl.when(tb == 0)
    def _():
        hf_sc[...] = jnp.zeros_like(hf_sc)
        cf_sc[...] = jnp.zeros_like(cf_sc)
        hb_sc[...] = jnp.zeros_like(hb_sc)
        cb_sc[...] = jnp.zeros_like(cb_sc)

    # Hoisted per-tile input projections (+ folded bias): two MXU matmuls instead of 2*Tt tiny ones.
    gxf_sc[...] = (jnp.dot(embf_ref[...], wih_f_ref[...],
                           preferred_element_type=jnp.float32) + b_f_ref[...])
    gxb_sc[...] = (jnp.dot(embb_ref[...], wih_b_ref[...],
                           preferred_element_type=jnp.float32) + b_b_ref[...])

    whh_f = whh_f_ref[...]
    whh_b = whh_b_ref[...]
    mxu_dtype = whh_f.dtype

    def body(s, carry):
        hf, cf, hb, cb = carry
        rf = pl.ds(pl.multiple_of(s * Bp, 8), Bp)
        rb = pl.ds(pl.multiple_of((Tt - 1 - s) * Bp, 8), Bp)
        # forward direction: within-tile step s
        gf = gxf_sc[rf, :] + jnp.dot(hf.astype(mxu_dtype), whh_f,
                                     preferred_element_type=jnp.float32)
        hf, cf = _cell_from_gates(gf, cf, H)
        # backward direction: within-tile step Tt-1-s of the reversed tile (independent chain,
        # interleaved to halve serial latency on a single core)
        gb = gxb_sc[rb, :] + jnp.dot(hb.astype(mxu_dtype), whh_b,
                                     preferred_element_type=jnp.float32)
        hb, cb = _cell_from_gates(gb, cb, H)
        return hf, cf, hb, cb

    hf, cf, hb, cb = lax.fori_loop(
        0, Tt, body, (hf_sc[...], cf_sc[...], hb_sc[...], cb_sc[...]), unroll=2)
    hf_sc[...] = hf
    cf_sc[...] = cf
    hb_sc[...] = hb
    cb_sc[...] = cb

    @pl.when(tb == pl.num_programs(0) - 1)
    def _():
        # torch.cat((hn[0], hn[1]), dim=1) followed by ONE fused head matmul.
        hidden = jnp.concatenate([hf_sc[...], hb_sc[...]], axis=1)        # (Bp, 2H)
        head = (jnp.dot(hidden.astype(mxu_dtype), wmulv_ref[...],
                        preferred_element_type=jnp.float32) + bmulv_ref[...])
        mu_ref[...] = head[:, :L]
        logvar_ref[...] = head[:, L:]


# ---------------------------------------------------------------------------
# Kernel 2: T-tiled decoder — reparameterize + fc_dec_init on tile 0, then LSTM recurrence.
# Emits hidden states (bf16 when MXU dtype is bf16); fc_out runs as a separate tiled matmul.
# ---------------------------------------------------------------------------
def _decoder_rnn_kernel(mu_ref, logvar_ref, eps_ref,    # (Bp, L)
                        emb_ref,                        # (Tt*Bp, E) emb tile
                        wdi_ref, bdi_ref,               # fc_dec_init (L, 2H), (1, 2H)
                        wih_e_ref, wih_z_ref,           # split decoder W_ih: (E,4H), (L,4H)
                        whh_ref, b_ref,                 # (H,4H), (1,4H)
                        hs_ref,                         # (Tt, Bp, H) hidden-state tile out
                        gx_sc, gz_sc, h_sc, c_sc):      # scratch (gz/h/c persistent)
    Tt, Bp, H = hs_ref.shape
    tb = pl.program_id(0)
    mxu_dtype = whh_ref.dtype

    @pl.when(tb == 0)
    def _():
        # reparameterize: z = mu + eps * exp(0.5 * logvar)
        z = mu_ref[...] + eps_ref[...] * jnp.exp(0.5 * logvar_ref[...])
        zc = z.astype(mxu_dtype)
        hidden_init = (jnp.dot(zc, wdi_ref[...], preferred_element_type=jnp.float32)
                       + bdi_ref[...])
        h_sc[...] = hidden_init[:, :H]
        c_sc[...] = hidden_init[:, H:]
        # Time-invariant z-gate contribution + bias: computed once (replaces per-step concat).
        gz_sc[...] = (jnp.dot(zc, wih_z_ref[...], preferred_element_type=jnp.float32)
                      + b_ref[...])

    # Hoisted per-tile input projection; gz + bias folded in HERE (one broadcast add per tile)
    # so the serial per-step chain is only  gx_sc[rows] + h@Whh.
    gx = jnp.dot(emb_ref[...], wih_e_ref[...], preferred_element_type=jnp.float32)
    gx_sc[...] = (gx.reshape(Tt, Bp, 4 * H) + gz_sc[...]).reshape(Tt * Bp, 4 * H)

    whh = whh_ref[...]

    def body(s, carry):
        h, c = carry
        rows = pl.ds(pl.multiple_of(s * Bp, 8), Bp)
        gates = gx_sc[rows, :] + jnp.dot(h.astype(mxu_dtype), whh,
                                         preferred_element_type=jnp.float32)
        h_new, c_new = _cell_from_gates(gates, c, H)
        hs_ref[s] = h_new.astype(hs_ref.dtype)
        return h_new, c_new

    h, c = lax.fori_loop(0, Tt, body, (h_sc[...], c_sc[...]), unroll=2)
    h_sc[...] = h
    c_sc[...] = c


# ---------------------------------------------------------------------------
# Kernel 3: fc_out — tiled, lane-dense (T*Bp, H) @ (H, Vp) + b, vocab axis OUTER so each
# weight tile is fetched from HBM exactly once.
# ---------------------------------------------------------------------------
def _out_proj_kernel(hs_ref, w_ref, b_ref, o_ref):
    o_ref[...] = (jnp.dot(hs_ref[...], w_ref[...], preferred_element_type=jnp.float32)
                  + b_ref[...])


# ---------------------------------------------------------------------------
# Wrapper / glue
# ---------------------------------------------------------------------------
def _round_up(x, m):
    return (x + m - 1) // m * m


def _pick_tile(n, candidates):
    for c in candidates:
        if n % c == 0:
            return c
    return n  # full-extent block (always legal)


def _pick_t_tile(T, Bp, E, H, emb_itemsize, budget_bytes=12 * 1024 * 1024):
    """Largest divisor of T whose per-tile VMEM footprint (double-buffered emb tiles for both
    directions + two f32 gate scratches) fits the budget."""
    per_step = Bp * (4 * E * emb_itemsize + 8 * H * 4)
    tt = int(max(1, min(T, budget_bytes // max(per_step, 1))))
    while T % tt:
        tt -= 1
    return tt


def _fc_out(hs_2d, wout_p, bout_p, v_true):
    M, H = hs_2d.shape
    Vp = wout_p.shape[1]
    tm = _pick_tile(M, (1024, 512, 256, 128, 64, 32, 16, 8))
    tn = _pick_tile(Vp, (1024, 512, 256, 128))

    out = pl.pallas_call(
        _out_proj_kernel,
        out_shape=jax.ShapeDtypeStruct((M, Vp), jnp.float32),
        grid=(Vp // tn, M // tm),      # vocab OUTER: each (H, tn) W tile DMA'd once, reused
        in_specs=[pl.BlockSpec((tm, H), lambda j, i: (i, 0)),
                  pl.BlockSpec((H, tn), lambda j, i: (0, j)),
                  pl.BlockSpec((1, tn), lambda j, i: (0, j))],
        out_specs=pl.BlockSpec((tm, tn), lambda j, i: (i, j)),
        compiler_params=pltpu.CompilerParams(
            dimension_semantics=("parallel", "parallel"),
            vmem_limit_bytes=_VMEM_LIMIT_BYTES),
    )(hs_2d, wout_p, bout_p)
    return out[:, :v_true]             # strip vocab padding


def vae_forward(params, x, eps, *, t_tile=None):
    """Equivalent of VAE.forward(x): returns (logits[B,T,V], mu[B,L], logvar[B,L])."""
    B, T = x.shape
    emb_tab_enc = params["emb_enc_k"]
    emb_tab_dec = params["emb_dec_k"]
    mxu_dtype = emb_tab_enc.dtype      # compute dtype for MXU operands (bf16 by default)
    E = emb_tab_enc.shape[1]
    H = params["whh_f"].shape[0]
    L = params["wmu"].shape[1]
    V = params["wout"].shape[1]

    # Sublane-pad batch: 16 rows for bf16 activations (packed sublane tile), 8 for f32.
    pad_b = 16 if mxu_dtype == jnp.bfloat16 else 8
    Bp = _round_up(B, pad_b)
    if Bp != B:
        x_p = jnp.pad(x, ((0, Bp - B), (0, 0)))      # padded rows: token 0 (discarded later)
        eps_p = jnp.pad(eps, ((0, Bp - B), (0, 0)))
    else:
        x_p, eps_p = x, eps

    # time-major, row-flattened embeddings: row t*Bp + b  <->  (t, b)
    # TODO(synk): replace with an in-kernel scalar-prefetch row-gather to avoid this HBM copy.
    emb_enc = jnp.transpose(emb_tab_enc[x_p], (1, 0, 2)).reshape(T * Bp, E)
    emb_dec = jnp.transpose(emb_tab_dec[x_p], (1, 0, 2)).reshape(T * Bp, E)

    if t_tile is None:
        Tt = _pick_t_tile(T, Bp, E, H, jnp.dtype(mxu_dtype).itemsize)
    else:
        assert T % t_tile == 0, "t_tile must divide T"
        Tt = t_tile
    Tb = T // Tt

    cast = lambda w: w.astype(mxu_dtype)
    wih_f, whh_f = cast(params["wih_f"]), cast(params["whh_f"])
    wih_b, whh_b = cast(params["wih_b"]), cast(params["whh_b"])
    # fused mu / logvar head
    wmulv = cast(jnp.concatenate([params["wmu"], params["wlv"]], axis=1))   # (2H, 2L)
    bmulv = jnp.concatenate([params["bmu"], params["blv"]], axis=1)         # (1, 2L) f32

    mu_p, logvar_p = pl.pallas_call(
        _encoder_kernel,
        out_shape=(jax.ShapeDtypeStruct((Bp, L), jnp.float32),
                   jax.ShapeDtypeStruct((Bp, L), jnp.float32)),
        grid=(Tb,),
        in_specs=[
            pl.BlockSpec((Tt * Bp, E), lambda t: (t, 0)),             # emb tile, fwd order
            pl.BlockSpec((Tt * Bp, E), lambda t: (Tb - 1 - t, 0)),    # emb tile, reversed
            pl.BlockSpec((E, 4 * H), lambda t: (0, 0)),
            pl.BlockSpec((H, 4 * H), lambda t: (0, 0)),
            pl.BlockSpec((1, 4 * H), lambda t: (0, 0)),
            pl.BlockSpec((E, 4 * H), lambda t: (0, 0)),
            pl.BlockSpec((H, 4 * H), lambda t: (0, 0)),
            pl.BlockSpec((1, 4 * H), lambda t: (0, 0)),
            pl.BlockSpec((2 * H, 2 * L), lambda t: (0, 0)),
            pl.BlockSpec((1, 2 * L), lambda t: (0, 0)),
        ],
        out_specs=(pl.BlockSpec((Bp, L), lambda t: (0, 0)),
                   pl.BlockSpec((Bp, L), lambda t: (0, 0))),
        scratch_shapes=[pltpu.VMEM((Tt * Bp, 4 * H), jnp.float32),
                        pltpu.VMEM((Tt * Bp, 4 * H), jnp.float32),
                        pltpu.VMEM((Bp, H), jnp.float32),
                        pltpu.VMEM((Bp, H), jnp.float32),
                        pltpu.VMEM((Bp, H), jnp.float32),
                        pltpu.VMEM((Bp, H), jnp.float32)],
        compiler_params=pltpu.CompilerParams(
            dimension_semantics=("arbitrary",),
            vmem_limit_bytes=_VMEM_LIMIT_BYTES),
    )(emb_enc, emb_enc,
      wih_f, whh_f, params["b_f"],
      wih_b, whh_b, params["b_b"],
      wmulv, bmulv)

    # Split decoder W_ih into embedding part and z part (removes per-step concat).
    wih_e = cast(params["wih_d"][:E])
    wih_z = cast(params["wih_d"][E:])
    wdi = cast(params["wdi"])
    whh_d = cast(params["whh_d"])
    hs_dtype = mxu_dtype   # bf16 hs halves the decoder -> fc_out HBM round trip

    hs = pl.pallas_call(
        _decoder_rnn_kernel,
        out_shape=jax.ShapeDtypeStruct((T, Bp, H), hs_dtype),
        grid=(Tb,),
        in_specs=[
            pl.BlockSpec((Bp, L), lambda t: (0, 0)),        # mu
            pl.BlockSpec((Bp, L), lambda t: (0, 0)),        # logvar
            pl.BlockSpec((Bp, L), lambda t: (0, 0)),        # eps
            pl.BlockSpec((Tt * Bp, E), lambda t: (t, 0)),   # emb_dec tile
            pl.BlockSpec((L, 2 * H), lambda t: (0, 0)),     # wdi
            pl.BlockSpec((1, 2 * H), lambda t: (0, 0)),     # bdi
            pl.BlockSpec((E, 4 * H), lambda t: (0, 0)),     # wih_e
            pl.BlockSpec((L, 4 * H), lambda t: (0, 0)),     # wih_z
            pl.BlockSpec((H, 4 * H), lambda t: (0, 0)),     # whh_d
            pl.BlockSpec((1, 4 * H), lambda t: (0, 0)),     # b_d
        ],
        out_specs=pl.BlockSpec((Tt, Bp, H), lambda t: (t, 0, 0)),
        scratch_shapes=[pltpu.VMEM((Tt * Bp, 4 * H), jnp.float32),
                        pltpu.VMEM((Bp, 4 * H), jnp.float32),
                        pltpu.VMEM((Bp, H), jnp.float32),
                        pltpu.VMEM((Bp, H), jnp.float32)],
        compiler_params=pltpu.CompilerParams(
            dimension_semantics=("arbitrary",),
            vmem_limit_bytes=_VMEM_LIMIT_BYTES),
    )(mu_p, logvar_p, eps_p, emb_dec,
      wdi, params["bdi"], wih_e, wih_z, whh_d, params["b_d"])

    # fc_out as a standalone, fully tiled, vocab-outer matmul over (T*Bp) x Vp.
    logits_flat = _fc_out(hs.reshape(T * Bp, H), params["wout_p"], params["bout_p"], V)
    logits = jnp.transpose(logits_flat.reshape(T, Bp, V), (1, 0, 2))[:B]   # (B, T, V)
    return logits, mu_p[:B], logvar_p[:B]


def init_params(key, vocab_size, embedding_dim, hidden_dim, latent_dim, pad_idx,
                mxu_dtype=jnp.bfloat16):
    V, E, H, L = vocab_size, embedding_dim, hidden_dim, latent_dim
    ks = jax.random.split(key, 19)

    def uni(k, shape, scale):
        return jax.random.uniform(k, shape, jnp.float32, -scale, scale)

    s_lstm = 1.0 / float(jnp.sqrt(H))
    s_fc2h = 1.0 / float(jnp.sqrt(2 * H))
    s_lat = 1.0 / float(jnp.sqrt(L))
    s_h = 1.0 / float(jnp.sqrt(H))

    params = {}
    params["emb_enc"] = (0.1 * jax.random.normal(ks[0], (V, E), jnp.float32)).at[pad_idx].set(0.0)
    params["wih_f"] = uni(ks[1], (E, 4 * H), s_lstm)
    params["whh_f"] = uni(ks[2], (H, 4 * H), s_lstm)
    params["b_f"] = uni(ks[3], (1, 4 * H), s_lstm)        # b_ih + b_hh folded
    params["wih_b"] = uni(ks[4], (E, 4 * H), s_lstm)
    params["whh_b"] = uni(ks[5], (H, 4 * H), s_lstm)
    params["b_b"] = uni(ks[6], (1, 4 * H), s_lstm)
    params["wmu"] = uni(ks[7], (2 * H, L), s_fc2h)
    params["bmu"] = uni(ks[8], (1, L), s_fc2h)
    params["wlv"] = uni(ks[9], (2 * H, L), s_fc2h)
    params["blv"] = uni(ks[10], (1, L), s_fc2h)
    params["wdi"] = uni(ks[11], (L, 2 * H), s_lat)
    params["bdi"] = uni(ks[12], (1, 2 * H), s_lat)
    params["emb_dec"] = (0.1 * jax.random.normal(ks[13], (V, E), jnp.float32)).at[pad_idx].set(0.0)
    params["wih_d"] = uni(ks[14], (E + L, 4 * H), s_lstm)
    params["whh_d"] = uni(ks[15], (H, 4 * H), s_lstm)
    params["b_d"] = uni(ks[16], (1, 4 * H), s_lstm)
    params["wout"] = uni(ks[17], (H, V), s_h)
    params["bout"] = uni(ks[18], (1, V), s_h)

    # Kernel-ready copies (review): embedding tables in MXU dtype (gathered activations are
    # then already bf16), and fc_out weight/bias pre-padded to a lane-dense Vp ONCE here.
    params["emb_enc_k"] = params["emb_enc"].astype(mxu_dtype)
    params["emb_dec_k"] = params["emb_dec"].astype(mxu_dtype)
    Vp = _round_up(V, 128)
    params["wout_p"] = jnp.pad(params["wout"], ((0, 0), (0, Vp - V))).astype(mxu_dtype)
    params["bout_p"] = jnp.pad(params["bout"], ((0, 0), (0, Vp - V)))
    return params


# Pure-JAX f32 reference (same math) used only to sanity-check the kernels.
def vae_forward_ref(params, x, eps):
    H = params["whh_f"].shape[0]
    B = x.shape[0]
    init = (jnp.zeros((B, H), jnp.float32), jnp.zeros((B, H), jnp.float32))

    def mk_step(wih, whh, b):
        def step(carry, x_t):
            h, c = carry
            gates = x_t @ wih + h @ whh + b
            h, c = _cell_from_gates(gates, c, H)
            return (h, c), h
        return step

    emb_tm = jnp.transpose(params["emb_enc"][x], (1, 0, 2))
    (h_f, _), _ = lax.scan(mk_step(params["wih_f"], params["whh_f"], params["b_f"]), init, emb_tm)
    (h_b, _), _ = lax.scan(mk_step(params["wih_b"], params["whh_b"], params["b_b"]), init, emb_tm[::-1])
    hidden = jnp.concatenate([h_f, h_b], axis=1)
    mu = hidden @ params["wmu"] + params["bmu"]
    logvar = hidden @ params["wlv"] + params["blv"]
    z = mu + eps * jnp.exp(0.5 * logvar)
    hi = z @ params["wdi"] + params["bdi"]
    h0, c0 = hi[:, :H], hi[:, H:]
    emb_dec_tm = jnp.transpose(params["emb_dec"][x], (1, 0, 2))

    def dec_step(carry, x_t):
        h, c = carry
        xt = jnp.concatenate([x_t, z], axis=1)
        gates = xt @ params["wih_d"] + h @ params["whh_d"] + params["b_d"]
        h, c = _cell_from_gates(gates, c, H)
        return (h, c), h

    _, hs = lax.scan(dec_step, (h0, c0), emb_dec_tm)            # (T, B, H)
    logits_tm = jnp.dot(hs, params["wout"]) + params["bout"]    # (T, B, V)
    return jnp.transpose(logits_tm, (1, 0, 2)), mu, logvar


if __name__ == "__main__":
    # Small, forward-consistent shapes (toy: H/L not multiples of 128 -> layout copies, correct).
    VOCAB, EMB, HID, LAT, SEQ, BATCH, PAD = 50, 16, 32, 8, 8, 4, 0

    key = jax.random.PRNGKey(0)
    kp, kx, ke = jax.random.split(key, 3)
    params = init_params(kp, VOCAB, EMB, HID, LAT, PAD, mxu_dtype=jnp.bfloat16)
    x = jax.random.randint(kx, (BATCH, SEQ), 0, VOCAB, dtype=jnp.int32)
    # torch.randn_like(std) -> deterministic eps generated here and fed to the kernel.
    eps = jax.random.normal(ke, (BATCH, LAT), jnp.float32)

    # t_tile=2 exercises the multi-tile T grid (persistent carries, pl.when init/finalize,
    # reversed backward tiles).
    fwd = jax.jit(functools.partial(vae_forward, t_tile=2))
    logits, mu, logvar = fwd(params, x, eps)
    jax.block_until_ready((logits, mu, logvar))

    assert logits.shape == (BATCH, SEQ, VOCAB)
    assert mu.shape == (BATCH, LAT) and logvar.shape == (BATCH, LAT)

    logits_r, mu_r, logvar_r = vae_forward_ref(params, x, eps)
    # bf16 MXU operands (f32 accumulation) -> loosened tolerance vs the pure-f32 reference.
    assert jnp.allclose(mu, mu_r, atol=5e-2, rtol=5e-2)
    assert jnp.allclose(logvar, logvar_r, atol=5e-2, rtol=5e-2)
    assert jnp.allclose(logits, logits_r, atol=5e-2, rtol=5e-2)

    print("KERNEL_OK")
</pallas_src>

<mosaic_0001>
module attributes {stable_mosaic.version = 11 : i64} {
  func.func @_decoder_rnn_kernel(%arg0: i32, %arg1: memref<16x8xf32, #tpu.memory_space<vmem>>, %arg2: memref<16x8xf32, #tpu.memory_space<vmem>>, %arg3: memref<16x8xf32, #tpu.memory_space<vmem>>, %arg4: memref<32x16xbf16, #tpu.memory_space<vmem>>, %arg5: memref<8x64xbf16, #tpu.memory_space<vmem>>, %arg6: memref<1x64xf32, #tpu.memory_space<vmem>>, %arg7: memref<16x128xbf16, #tpu.memory_space<vmem>>, %arg8: memref<8x128xbf16, #tpu.memory_space<vmem>>, %arg9: memref<32x128xbf16, #tpu.memory_space<vmem>>, %arg10: memref<1x128xf32, #tpu.memory_space<vmem>>, %arg11: memref<2x16x32xbf16, #tpu.memory_space<vmem>>, %arg12: memref<32x128xf32, #tpu.memory_space<vmem>>, %arg13: memref<16x128xf32, #tpu.memory_space<vmem>>, %arg14: memref<16x32xf32, #tpu.memory_space<vmem>>, %arg15: memref<16x32xf32, #tpu.memory_space<vmem>>) attributes {dimension_semantics = [#tpu.dimension_semantics<arbitrary>], iteration_bounds = array<i64: 4>, scalar_prefetch = 0 : i64, scratch_operands = 4 : i64, tpu.core_type = #tpu.core_type<tc>, window_params = [{pipeline_mode = #tpu.pipeline_mode<synchronous>, transform_indices = @transform_0, window_bounds = array<i64: 16, 8>}, {pipeline_mode = #tpu.pipeline_mode<synchronous>, transform_indices = @transform_1, window_bounds = array<i64: 16, 8>}, {pipeline_mode = #tpu.pipeline_mode<synchronous>, transform_indices = @transform_2, window_bounds = array<i64: 16, 8>}, {transform_indices = @transform_3, window_bounds = array<i64: 32, 16>}, {pipeline_mode = #tpu.pipeline_mode<synchronous>, transform_indices = @transform_4, window_bounds = array<i64: 8, 64>}, {pipeline_mode = #tpu.pipeline_mode<synchronous>, transform_indices = @transform_5, window_bounds = array<i64: 1, 64>}, {pipeline_mode = #tpu.pipeline_mode<synchronous>, transform_indices = @transform_6, window_bounds = array<i64: 16, 128>}, {pipeline_mode = #tpu.pipeline_mode<synchronous>, transform_indices = @transform_7, window_bounds = array<i64: 8, 128>}, {pipeline_mode = #tpu.pipeline_mode<synchronous>, transform_indices = @transform_8, window_bounds = array<i64: 32, 128>}, {pipeline_mode = #tpu.pipeline_mode<synchronous>, transform_indices = @transform_9, window_bounds = array<i64: 1, 128>}, {transform_indices = @transform_10, window_bounds = array<i64: 2, 16, 32>}]} {
    %c0_i32 = arith.constant 0 : i32
    %0 = arith.cmpi eq, %arg0, %c0_i32 : i32
    %1 = arith.extui %0 : i1 to i32
    %c0_i32_0 = arith.constant 0 : i32
    %2 = arith.cmpi ne, %1, %c0_i32_0 : i32
    scf.if %2 {
      %c0_34 = arith.constant 0 : index
      %c0_35 = arith.constant 0 : index
      %92 = vector.load %arg1[%c0_34, %c0_35] : memref<16x8xf32, #tpu.memory_space<vmem>>, vector<16x8xf32>
      %c0_36 = arith.constant 0 : index
      %c0_37 = arith.constant 0 : index
      %93 = vector.load %arg3[%c0_36, %c0_37] : memref<16x8xf32, #tpu.memory_space<vmem>>, vector<16x8xf32>
      %c0_38 = arith.constant 0 : index
      %c0_39 = arith.constant 0 : index
      %94 = vector.load %arg2[%c0_38, %c0_39] : memref<16x8xf32, #tpu.memory_space<vmem>>, vector<16x8xf32>
      %cst_40 = arith.constant 5.000000e-01 : f32
      %95 = vector.broadcast %cst_40 : f32 to vector<16x8xf32>
      %96 = arith.mulf %95, %94 : vector<16x8xf32>
      %97 = math.exp %96 : vector<16x8xf32>
      %98 = arith.mulf %93, %97 : vector<16x8xf32>
      %99 = arith.addf %92, %98 : vector<16x8xf32>
      %100 = arith.truncf %99 : vector<16x8xf32> to vector<16x8xbf16>
      %c0_41 = arith.constant 0 : index
      %c0_42 = arith.constant 0 : index
      %101 = vector.load %arg5[%c0_41, %c0_42] : memref<8x64xbf16, #tpu.memory_space<vmem>>, vector<8x64xbf16>
      %cst_43 = arith.constant dense<0.000000e+00> : vector<16x64xf32>
      %102 = tpu.matmul %100, %101, %cst_43 {dimension_numbers = #tpu.dot_dimension_numbers<[1], [0], [0], [1], [0, 0, 1, 1], [], []>} : vector<16x8xbf16>, vector<8x64xbf16>, vector<16x64xf32> -> vector<16x64xf32>
      %c0_44 = arith.constant 0 : index
      %c0_45 = arith.constant 0 : index
      %103 = vector.load %arg6[%c0_44, %c0_45] : memref<1x64xf32, #tpu.memory_space<vmem>>, vector<1x64xf32>
      %104 = vector.broadcast %103 : vector<1x64xf32> to vector<16x64xf32>
      %105 = arith.addf %102, %104 : vector<16x64xf32>
      %106 = vector.extract_strided_slice %105 {offsets = [0, 0], sizes = [16, 32], strides = [1, 1]} : vector<16x64xf32> to vector<16x32xf32>
      %c0_46 = arith.constant 0 : index
      %c0_47 = arith.constant 0 : index
      %107 = vector.load %arg14[%c0_46, %c0_47] : memref<16x32xf32, #tpu.memory_space<vmem>>, vector<16x32xf32>
      tpu.vector_store %arg14[%c0_46, %c0_47], %106 {strides = array<i32>} : memref<16x32xf32, #tpu.memory_space<vmem>>, vector<16x32xf32>,
      %108 = vector.extract_strided_slice %105 {offsets = [0, 32], sizes = [16, 32], strides = [1, 1]} : vector<16x64xf32> to vector<16x32xf32>
      %c0_48 = arith.constant 0 : index
      %c0_49 = arith.constant 0 : index
      %109 = vector.load %arg15[%c0_48, %c0_49] : memref<16x32xf32, #tpu.memory_space<vmem>>, vector<16x32xf32>
      tpu.vector_store %arg15[%c0_48, %c0_49], %108 {strides = array<i32>} : memref<16x32xf32, #tpu.memory_space<vmem>>, vector<16x32xf32>,
      %c0_50 = arith.constant 0 : index
      %c0_51 = arith.constant 0 : index
      %110 = vector.load %arg8[%c0_50, %c0_51] : memref<8x128xbf16, #tpu.memory_space<vmem>>, vector<8x128xbf16>
      %cst_52 = arith.constant dense<0.000000e+00> : vector<16x128xf32>
      %111 = tpu.matmul %100, %110, %cst_52 {dimension_numbers = #tpu.dot_dimension_numbers<[1], [0], [0], [1], [0, 0, 1, 1], [], []>} : vector<16x8xbf16>, vector<8x128xbf16>, vector<16x128xf32> -> vector<16x128xf32>
      %c0_53 = arith.constant 0 : index
      %c0_54 = arith.constant 0 : index
      %112 = vector.load %arg10[%c0_53, %c0_54] : memref<1x128xf32, #tpu.memory_space<vmem>>, vector<1x128xf32>
      %113 = vector.broadcast %112 : vector<1x128xf32> to vector<16x128xf32>
      %114 = arith.addf %111, %113 : vector<16x128xf32>
      %c0_55 = arith.constant 0 : index
      %c0_56 = arith.constant 0 : index
      %115 = vector.load %arg13[%c0_55, %c0_56] : memref<16x128xf32, #tpu.memory_space<vmem>>, vector<16x128xf32>
      tpu.vector_store %arg13[%c0_55, %c0_56], %114 {strides = array<i32>} : memref<16x128xf32, #tpu.memory_space<vmem>>, vector<16x128xf32>,
    } else {
    }
    %c0 = arith.constant 0 : index
    %c0_1 = arith.constant 0 : index
    %3 = vector.load %arg4[%c0, %c0_1] : memref<32x16xbf16, #tpu.memory_space<vmem>>, vector<32x16xbf16>
    %c0_2 = arith.constant 0 : index
    %c0_3 = arith.constant 0 : index
    %4 = vector.load %arg7[%c0_2, %c0_3] : memref<16x128xbf16, #tpu.memory_space<vmem>>, vector<16x128xbf16>
    %cst = arith.constant dense<0.000000e+00> : vector<32x128xf32>
    %5 = tpu.matmul %3, %4, %cst {dimension_numbers = #tpu.dot_dimension_numbers<[1], [0], [0], [1], [0, 0, 1, 1], [], []>} : vector<32x16xbf16>, vector<16x128xbf16>, vector<32x128xf32> -> vector<32x128xf32>
    %6 = vector.shape_cast %5 : vector<32x128xf32> to vector<2x16x128xf32>
    %c0_4 = arith.constant 0 : index
    %c0_5 = arith.constant 0 : index
    %7 = vector.load %arg13[%c0_4, %c0_5] : memref<16x128xf32, #tpu.memory_space<vmem>>, vector<16x128xf32>
    %8 = vector.shape_cast %7 : vector<16x128xf32> to vector<1x16x128xf32>
    %9 = vector.broadcast %8 : vector<1x16x128xf32> to vector<2x16x128xf32>
    %10 = arith.addf %6, %9 : vector<2x16x128xf32>
    %11 = vector.shape_cast %10 : vector<2x16x128xf32> to vector<32x128xf32>
    %c0_6 = arith.constant 0 : index
    %c0_7 = arith.constant 0 : index
    %12 = vector.load %arg12[%c0_6, %c0_7] : memref<32x128xf32, #tpu.memory_space<vmem>>, vector<32x128xf32>
    tpu.vector_store %arg12[%c0_6, %c0_7], %11 {strides = array<i32>} : memref<32x128xf32, #tpu.memory_space<vmem>>, vector<32x128xf32>,
    %c0_8 = arith.constant 0 : index
    %c0_9 = arith.constant 0 : index
    %13 = vector.load %arg9[%c0_8, %c0_9] : memref<32x128xbf16, #tpu.memory_space<vmem>>, vector<32x128xbf16>
    %c0_10 = arith.constant 0 : index
    %c0_11 = arith.constant 0 : index
    %14 = vector.load %arg14[%c0_10, %c0_11] : memref<16x32xf32, #tpu.memory_space<vmem>>, vector<16x32xf32>
    %c0_12 = arith.constant 0 : index
    %c0_13 = arith.constant 0 : index
    %15 = vector.load %arg15[%c0_12, %c0_13] : memref<16x32xf32, #tpu.memory_space<vmem>>, vector<16x32xf32>
    %c0_i32_14 = arith.constant 0 : i32
    %c16_i32 = arith.constant 16 : i32
    %16 = arith.muli %c0_i32_14, %c16_i32 : i32
    %17 = tpu.assume_multiple %16, 8 : i32
    %18 = arith.index_cast %17 : i32 to index
    %c0_15 = arith.constant 0 : index
    %19 = vector.load %arg12[%18, %c0_15] : memref<32x128xf32, #tpu.memory_space<vmem>>, vector<16x128xf32>
    %20 = arith.truncf %14 : vector<16x32xf32> to vector<16x32xbf16>
    %cst_16 = arith.constant dense<0.000000e+00> : vector<16x128xf32>
    %21 = tpu.matmul %20, %13, %cst_16 {dimension_numbers = #tpu.dot_dimension_numbers<[1], [0], [0], [1], [0, 0, 1, 1], [], []>} : vector<16x32xbf16>, vector<32x128xbf16>, vector<16x128xf32> -> vector<16x128xf32>
    %22 = arith.addf %19, %21 : vector<16x128xf32>
    %23 = vector.extract_strided_slice %22 {offsets = [0, 0], sizes = [16, 32], strides = [1, 1]} : vector<16x128xf32> to vector<16x32xf32>
    %24 = arith.negf %23 : vector<16x32xf32>
    %25 = math.exp %24 : vector<16x32xf32>
    %cst_17 = arith.constant 1.000000e+00 : f32
    %26 = vector.broadcast %cst_17 : f32 to vector<16x32xf32>
    %27 = arith.addf %26, %25 : vector<16x32xf32>
    %28 = arith.divf %26, %27 : vector<16x32xf32>
    %29 = vector.extract_strided_slice %22 {offsets = [0, 32], sizes = [16, 32], strides = [1, 1]} : vector<16x128xf32> to vector<16x32xf32>
    %30 = arith.negf %29 : vector<16x32xf32>
    %31 = math.exp %30 : vector<16x32xf32>
    %cst_18 = arith.constant 1.000000e+00 : f32
    %32 = vector.broadcast %cst_18 : f32 to vector<16x32xf32>
    %33 = arith.addf %32, %31 : vector<16x32xf32>
    %34 = arith.divf %32, %33 : vector<16x32xf32>
    %35 = vector.extract_strided_slice %22 {offsets = [0, 64], sizes = [16, 32], strides = [1, 1]} : vector<16x128xf32> to vector<16x32xf32>
    %36 = math.tanh %35 : vector<16x32xf32>
    %37 = vector.extract_strided_slice %22 {offsets = [0, 96], sizes = [16, 32], strides = [1, 1]} : vector<16x128xf32> to vector<16x32xf32>
    %38 = arith.negf %37 : vector<16x32xf32>
    %39 = math.exp %38 : vector<16x32xf32>
    %cst_19 = arith.constant 1.000000e+00 : f32
    %40 = vector.broadcast %cst_19 : f32 to vector<16x32xf32>
    %41 = arith.addf %40, %39 : vector<16x32xf32>
    %42 = arith.divf %40, %41 : vector<16x32xf32>
    %43 = arith.mulf %34, %15 : vector<16x32xf32>
    %44 = arith.mulf %28, %36 : vector<16x32xf32>
    %45 = arith.addf %43, %44 : vector<16x32xf32>
    %46 = math.tanh %45 : vector<16x32xf32>
    %47 = arith.mulf %42, %46 : vector<16x32xf32>
    %48 = arith.truncf %47 : vector<16x32xf32> to vector<16x32xbf16>
    %49 = arith.index_cast %c0_i32_14 : i32 to index
    %c0_20 = arith.constant 0 : index
    %c0_21 = arith.constant 0 : index
    %50 = vector.load %arg11[%49, %c0_20, %c0_21] : memref<2x16x32xbf16, #tpu.memory_space<vmem>>, vector<1x16x32xbf16>
    %51 = vector.shape_cast %50 : vector<1x16x32xbf16> to vector<16x32xbf16>
    %52 = vector.shape_cast %48 : vector<16x32xbf16> to vector<1x16x32xbf16>
    tpu.vector_store %arg11[%49, %c0_20, %c0_21], %52 {strides = array<i32>} : memref<2x16x32xbf16, #tpu.memory_space<vmem>>, vector<1x16x32xbf16>,
    %c1_i32 = arith.constant 1 : i32
    %c16_i32_22 = arith.constant 16 : i32
    %53 = arith.muli %c1_i32, %c16_i32_22 : i32
    %54 = tpu.assume_multiple %53, 8 : i32
    %55 = arith.index_cast %54 : i32 to index
    %c0_23 = arith.constant 0 : index
    %56 = vector.load %arg12[%55, %c0_23] : memref<32x128xf32, #tpu.memory_space<vmem>>, vector<16x128xf32>
    %57 = arith.truncf %47 : vector<16x32xf32> to vector<16x32xbf16>
    %cst_24 = arith.constant dense<0.000000e+00> : vector<16x128xf32>
    %58 = tpu.matmul %57, %13, %cst_24 {dimension_numbers = #tpu.dot_dimension_numbers<[1], [0], [0], [1], [0, 0, 1, 1], [], []>} : vector<16x32xbf16>, vector<32x128xbf16>, vector<16x128xf32> -> vector<16x128xf32>
    %59 = arith.addf %56, %58 : vector<16x128xf32>
    %60 = vector.extract_strided_slice %59 {offsets = [0, 0], sizes = [16, 32], strides = [1, 1]} : vector<16x128xf32> to vector<16x32xf32>
    %61 = arith.negf %60 : vector<16x32xf32>
    %62 = math.exp %61 : vector<16x32xf32>
    %cst_25 = arith.constant 1.000000e+00 : f32
    %63 = vector.broadcast %cst_25 : f32 to vector<16x32xf32>
    %64 = arith.addf %63, %62 : vector<16x32xf32>
    %65 = arith.divf %63, %64 : vector<16x32xf32>
    %66 = vector.extract_strided_slice %59 {offsets = [0, 32], sizes = [16, 32], strides = [1, 1]} : vector<16x128xf32> to vector<16x32xf32>
    %67 = arith.negf %66 : vector<16x32xf32>
    %68 = math.exp %67 : vector<16x32xf32>
    %cst_26 = arith.constant 1.000000e+00 : f32
    %69 = vector.broadcast %cst_26 : f32 to vector<16x32xf32>
    %70 = arith.addf %69, %68 : vector<16x32xf32>
    %71 = arith.divf %69, %70 : vector<16x32xf32>
    %72 = vector.extract_strided_slice %59 {offsets = [0, 64], sizes = [16, 32], strides = [1, 1]} : vector<16x128xf32> to vector<16x32xf32>
    %73 = math.tanh %72 : vector<16x32xf32>
    %74 = vector.extract_strided_slice %59 {offsets = [0, 96], sizes = [16, 32], strides = [1, 1]} : vector<16x128xf32> to vector<16x32xf32>
    %75 = arith.negf %74 : vector<16x32xf32>
    %76 = math.exp %75 : vector<16x32xf32>
    %cst_27 = arith.constant 1.000000e+00 : f32
    %77 = vector.broadcast %cst_27 : f32 to vector<16x32xf32>
    %78 = arith.addf %77, %76 : vector<16x32xf32>
    %79 = arith.divf %77, %78 : vector<16x32xf32>
    %80 = arith.mulf %71, %45 : vector<16x32xf32>
    %81 = arith.mulf %65, %73 : vector<16x32xf32>
    %82 = arith.addf %80, %81 : vector<16x32xf32>
    %83 = math.tanh %82 : vector<16x32xf32>
    %84 = arith.mulf %79, %83 : vector<16x32xf32>
    %85 = arith.truncf %84 : vector<16x32xf32> to vector<16x32xbf16>
    %86 = arith.index_cast %c1_i32 : i32 to index
    %c0_28 = arith.constant 0 : index
    %c0_29 = arith.constant 0 : index
    %87 = vector.load %arg11[%86, %c0_28, %c0_29] : memref<2x16x32xbf16, #tpu.memory_space<vmem>>, vector<1x16x32xbf16>
    %88 = vector.shape_cast %87 : vector<1x16x32xbf16> to vector<16x32xbf16>
    %89 = vector.shape_cast %85 : vector<16x32xbf16> to vector<1x16x32xbf16>
    tpu.vector_store %arg11[%86, %c0_28, %c0_29], %89 {strides = array<i32>} : memref<2x16x32xbf16, #tpu.memory_space<vmem>>, vector<1x16x32xbf16>,
    %c2_i32 = arith.constant 2 : i32
    %c0_30 = arith.constant 0 : index
    %c0_31 = arith.constant 0 : index
    %90 = vector.load %arg14[%c0_30, %c0_31] : memref<16x32xf32, #tpu.memory_space<vmem>>, vector<16x32xf32>
    tpu.vector_store %arg14[%c0_30, %c0_31], %84 {strides = array<i32>} : memref<16x32xf32, #tpu.memory_space<vmem>>, vector<16x32xf32>,
    %c0_32 = arith.constant 0 : index
    %c0_33 = arith.constant 0 : index
    %91 = vector.load %arg15[%c0_32, %c0_33] : memref<16x32xf32, #tpu.memory_space<vmem>>, vector<16x32xf32>
    tpu.vector_store %arg15[%c0_32, %c0_33], %82 {strides = array<i32>} : memref<16x32xf32, #tpu.memory_space<vmem>>, vector<16x32xf32>,
    return
  }
  func.func @transform_0(%arg0: i32) -> (i32, i32) {
    %c0_i32 = arith.constant 0 : i32
    %c0_i32_0 = arith.constant 0 : i32
    %c0_i32_1 = arith.constant 0 : i32
    return %c0_i32, %c0_i32_0 : i32, i32
  }
  func.func @transform_1(%arg0: i32) -> (i32, i32) {
    %c0_i32 = arith.constant 0 : i32
    %c0_i32_0 = arith.constant 0 : i32
    %c0_i32_1 = arith.constant 0 : i32
    return %c0_i32, %c0_i32_0 : i32, i32
  }
  func.func @transform_2(%arg0: i32) -> (i32, i32) {
    %c0_i32 = arith.constant 0 : i32
    %c0_i32_0 = arith.constant 0 : i32
    %c0_i32_1 = arith.constant 0 : i32
    return %c0_i32, %c0_i32_0 : i32, i32
  }
  func.func @transform_3(%arg0: i32) -> (i32, i32) {
    %c0_i32 = arith.constant 0 : i32
    %c0_i32_0 = arith.constant 0 : i32
    return %arg0, %c0_i32 : i32, i32
  }
  func.func @transform_4(%arg0: i32) -> (i32, i32) {
    %c0_i32 = arith.constant 0 : i32
    %c0_i32_0 = arith.constant 0 : i32
    %c0_i32_1 = arith.constant 0 : i32
    return %c0_i32, %c0_i32_0 : i32, i32
  }
  func.func @transform_5(%arg0: i32) -> (i32, i32) {
    %c0_i32 = arith.constant 0 : i32
    %c0_i32_0 = arith.constant 0 : i32
    %c0_i32_1 = arith.constant 0 : i32
    return %c0_i32, %c0_i32_0 : i32, i32
  }
  func.func @transform_6(%arg0: i32) -> (i32, i32) {
    %c0_i32 = arith.constant 0 : i32
    %c0_i32_0 = arith.constant 0 : i32
    %c0_i32_1 = arith.constant 0 : i32
    return %c0_i32, %c0_i32_0 : i32, i32
  }
  func.func @transform_7(%arg0: i32) -> (i32, i32) {
    %c0_i32 = arith.constant 0 : i32
    %c0_i32_0 = arith.constant 0 : i32
    %c0_i32_1 = arith.constant 0 : i32
    return %c0_i32, %c0_i32_0 : i32, i32
  }
  func.func @transform_8(%arg0: i32) -> (i32, i32) {
    %c0_i32 = arith.constant 0 : i32
    %c0_i32_0 = arith.constant 0 : i32
    %c0_i32_1 = arith.constant 0 : i32
    return %c0_i32, %c0_i32_0 : i32, i32
  }
  func.func @transform_9(%arg0: i32) -> (i32, i32) {
    %c0_i32 = arith.constant 0 : i32
    %c0_i32_0 = arith.constant 0 : i32
    %c0_i32_1 = arith.constant 0 : i32
    return %c0_i32, %c0_i32_0 : i32, i32
  }
  func.func @transform_10(%arg0: i32) -> (i32, i32, i32) {
    %c0_i32 = arith.constant 0 : i32
    %c0_i32_0 = arith.constant 0 : i32
    %c0_i32_1 = arith.constant 0 : i32
    return %arg0, %c0_i32, %c0_i32_0 : i32, i32, i32
  }
}

module attributes {stable_mosaic.version = 11 : i64} {
  func.func @_out_proj_kernel(%arg0: i32, %arg1: i32, %arg2: memref<128x32xbf16, #tpu.memory_space<vmem>>, %arg3: memref<32x128xbf16, #tpu.memory_space<vmem>>, %arg4: memref<1x128xf32, #tpu.memory_space<vmem>>, %arg5: memref<128x128xf32, #tpu.memory_space<vmem>>) attributes {dimension_semantics = [#tpu.dimension_semantics<parallel>, #tpu.dimension_semantics<parallel>], iteration_bounds = array<i64: 1, 1>, scalar_prefetch = 0 : i64, scratch_operands = 0 : i64, tpu.core_type = #tpu.core_type<tc>, window_params = [{transform_indices = @transform_0, window_bounds = array<i64: 128, 32>}, {transform_indices = @transform_1, window_bounds = array<i64: 32, 128>}, {transform_indices = @transform_2, window_bounds = array<i64: 1, 128>}, {transform_indices = @transform_3, window_bounds = array<i64: 128, 128>}]} {
    %c0 = arith.constant 0 : index
    %c0_0 = arith.constant 0 : index
    %0 = vector.load %arg2[%c0, %c0_0] : memref<128x32xbf16, #tpu.memory_space<vmem>>, vector<128x32xbf16>
    %c0_1 = arith.constant 0 : index
    %c0_2 = arith.constant 0 : index
    %1 = vector.load %arg3[%c0_1, %c0_2] : memref<32x128xbf16, #tpu.memory_space<vmem>>, vector<32x128xbf16>
    %cst = arith.constant dense<0.000000e+00> : vector<128x128xf32>
    %2 = tpu.matmul %0, %1, %cst {dimension_numbers = #tpu.dot_dimension_numbers<[1], [0], [0], [1], [0, 0, 1, 1], [], []>} : vector<128x32xbf16>, vector<32x128xbf16>, vector<128x128xf32> -> vector<128x128xf32>
    %c0_3 = arith.constant 0 : index
    %c0_4 = arith.constant 0 : index
    %3 = vector.load %arg4[%c0_3, %c0_4] : memref<1x128xf32, #tpu.memory_space<vmem>>, vector<1x128xf32>
    %4 = vector.broadcast %3 : vector<1x128xf32> to vector<128x128xf32>
    %5 = arith.addf %2, %4 : vector<128x128xf32>
    %c0_5 = arith.constant 0 : index
    %c0_6 = arith.constant 0 : index
    %6 = vector.load %arg5[%c0_5, %c0_6] : memref<128x128xf32, #tpu.memory_space<vmem>>, vector<128x128xf32>
    tpu.vector_store %arg5[%c0_5, %c0_6], %5 {strides = array<i32>} : memref<128x128xf32, #tpu.memory_space<vmem>>, vector<128x128xf32>,
    return
  }
  func.func @transform_0(%arg0: i32, %arg1: i32) -> (i32, i32) {
    %c0_i32 = arith.constant 0 : i32
    %c0_i32_0 = arith.constant 0 : i32
    return %arg1, %c0_i32 : i32, i32
  }
  func.func @transform_1(%arg0: i32, %arg1: i32) -> (i32, i32) {
    %c0_i32 = arith.constant 0 : i32
    %c0_i32_0 = arith.constant 0 : i32
    return %c0_i32, %arg0 : i32, i32
  }
  func.func @transform_2(%arg0: i32, %arg1: i32) -> (i32, i32) {
    %c0_i32 = arith.constant 0 : i32
    %c0_i32_0 = arith.constant 0 : i32
    return %c0_i32, %arg0 : i32, i32
  }
  func.func @transform_3(%arg0: i32, %arg1: i32) -> (i32, i32) {
    %c0_i32 = arith.constant 0 : i32
    return %arg1, %arg0 : i32, i32
  }
}

module attributes {stable_mosaic.version = 11 : i64} {
  func.func @_encoder_kernel(%arg0: i32, %arg1: memref<32x16xbf16, #tpu.memory_space<vmem>>, %arg2: memref<32x16xbf16, #tpu.memory_space<vmem>>, %arg3: memref<16x128xbf16, #tpu.memory_space<vmem>>, %arg4: memref<32x128xbf16, #tpu.memory_space<vmem>>, %arg5: memref<1x128xf32, #tpu.memory_space<vmem>>, %arg6: memref<16x128xbf16, #tpu.memory_space<vmem>>, %arg7: memref<32x128xbf16, #tpu.memory_space<vmem>>, %arg8: memref<1x128xf32, #tpu.memory_space<vmem>>, %arg9: memref<64x16xbf16, #tpu.memory_space<vmem>>, %arg10: memref<1x16xf32, #tpu.memory_space<vmem>>, %arg11: memref<16x8xf32, #tpu.memory_space<vmem>>, %arg12: memref<16x8xf32, #tpu.memory_space<vmem>>, %arg13: memref<32x128xf32, #tpu.memory_space<vmem>>, %arg14: memref<32x128xf32, #tpu.memory_space<vmem>>, %arg15: memref<16x32xf32, #tpu.memory_space<vmem>>, %arg16: memref<16x32xf32, #tpu.memory_space<vmem>>, %arg17: memref<16x32xf32, #tpu.memory_space<vmem>>, %arg18: memref<16x32xf32, #tpu.memory_space<vmem>>) attributes {dimension_semantics = [#tpu.dimension_semantics<arbitrary>], iteration_bounds = array<i64: 4>, scalar_prefetch = 0 : i64, scratch_operands = 6 : i64, tpu.core_type = #tpu.core_type<tc>, window_params = [{transform_indices = @transform_0, window_bounds = array<i64: 32, 16>}, {transform_indices = @transform_1, window_bounds = array<i64: 32, 16>}, {pipeline_mode = #tpu.pipeline_mode<synchronous>, transform_indices = @transform_2, window_bounds = array<i64: 16, 128>}, {pipeline_mode = #tpu.pipeline_mode<synchronous>, transform_indices = @transform_3, window_bounds = array<i64: 32, 128>}, {pipeline_mode = #tpu.pipeline_mode<synchronous>, transform_indices = @transform_4, window_bounds = array<i64: 1, 128>}, {pipeline_mode = #tpu.pipeline_mode<synchronous>, transform_indices = @transform_5, window_bounds = array<i64: 16, 128>}, {pipeline_mode = #tpu.pipeline_mode<synchronous>, transform_indices = @transform_6, window_bounds = array<i64: 32, 128>}, {pipeline_mode = #tpu.pipeline_mode<synchronous>, transform_indices = @transform_7, window_bounds = array<i64: 1, 128>}, {pipeline_mode = #tpu.pipeline_mode<synchronous>, transform_indices = @transform_8, window_bounds = array<i64: 64, 16>}, {pipeline_mode = #tpu.pipeline_mode<synchronous>, transform_indices = @transform_9, window_bounds = array<i64: 1, 16>}, {pipeline_mode = #tpu.pipeline_mode<synchronous>, transform_indices = @transform_10, window_bounds = array<i64: 16, 8>}, {pipeline_mode = #tpu.pipeline_mode<synchronous>, transform_indices = @transform_11, window_bounds = array<i64: 16, 8>}]} {
    %c0_i32 = arith.constant 0 : i32
    %0 = arith.cmpi eq, %arg0, %c0_i32 : i32
    %1 = arith.extui %0 : i1 to i32
    %c0_i32_0 = arith.constant 0 : i32
    %2 = arith.cmpi ne, %1, %c0_i32_0 : i32
    scf.if %2 {
      %cst_64 = arith.constant 0.000000e+00 : f32
      %160 = vector.broadcast %cst_64 : f32 to vector<16x32xf32>
      %c0_65 = arith.constant 0 : index
      %c0_66 = arith.constant 0 : index
      %161 = vector.load %arg15[%c0_65, %c0_66] : memref<16x32xf32, #tpu.memory_space<vmem>>, vector<16x32xf32>
      tpu.vector_store %arg15[%c0_65, %c0_66], %160 {strides = array<i32>} : memref<16x32xf32, #tpu.memory_space<vmem>>, vector<16x32xf32>,
      %cst_67 = arith.constant 0.000000e+00 : f32
      %162 = vector.broadcast %cst_67 : f32 to vector<16x32xf32>
      %c0_68 = arith.constant 0 : index
      %c0_69 = arith.constant 0 : index
      %163 = vector.load %arg16[%c0_68, %c0_69] : memref<16x32xf32, #tpu.memory_space<vmem>>, vector<16x32xf32>
      tpu.vector_store %arg16[%c0_68, %c0_69], %162 {strides = array<i32>} : memref<16x32xf32, #tpu.memory_space<vmem>>, vector<16x32xf32>,
      %cst_70 = arith.constant 0.000000e+00 : f32
      %164 = vector.broadcast %cst_70 : f32 to vector<16x32xf32>
      %c0_71 = arith.constant 0 : index
      %c0_72 = arith.constant 0 : index
      %165 = vector.load %arg17[%c0_71, %c0_72] : memref<16x32xf32, #tpu.memory_space<vmem>>, vector<16x32xf32>
      tpu.vector_store %arg17[%c0_71, %c0_72], %164 {strides = array<i32>} : memref<16x32xf32, #tpu.memory_space<vmem>>, vector<16x32xf32>,
      %cst_73 = arith.constant 0.000000e+00 : f32
      %166 = vector.broadcast %cst_73 : f32 to vector<16x32xf32>
      %c0_74 = arith.constant 0 : index
      %c0_75 = arith.constant 0 : index
      %167 = vector.load %arg18[%c0_74, %c0_75] : memref<16x32xf32, #tpu.memory_space<vmem>>, vector<16x32xf32>
      tpu.vector_store %arg18[%c0_74, %c0_75], %166 {strides = array<i32>} : memref<16x32xf32, #tpu.memory_space<vmem>>, vector<16x32xf32>,
    } else {
    }
    %c0 = arith.constant 0 : index
    %c0_1 = arith.constant 0 : index
    %3 = vector.load %arg1[%c0, %c0_1] : memref<32x16xbf16, #tpu.memory_space<vmem>>, vector<32x16xbf16>
    %c0_2 = arith.constant 0 : index
    %c0_3 = arith.constant 0 : index
    %4 = vector.load %arg3[%c0_2, %c0_3] : memref<16x128xbf16, #tpu.memory_space<vmem>>, vector<16x128xbf16>
    %cst = arith.constant dense<0.000000e+00> : vector<32x128xf32>
    %5 = tpu.matmul %3, %4, %cst {dimension_numbers = #tpu.dot_dimension_numbers<[1], [0], [0], [1], [0, 0, 1, 1], [], []>} : vector<32x16xbf16>, vector<16x128xbf16>, vector<32x128xf32> -> vector<32x128xf32>
    %c0_4 = arith.constant 0 : index
    %c0_5 = arith.constant 0 : index
    %6 = vector.load %arg5[%c0_4, %c0_5] : memref<1x128xf32, #tpu.memory_space<vmem>>, vector<1x128xf32>
    %7 = vector.broadcast %6 : vector<1x128xf32> to vector<32x128xf32>
    %8 = arith.addf %5, %7 : vector<32x128xf32>
    %c0_6 = arith.constant 0 : index
    %c0_7 = arith.constant 0 : index
    %9 = vector.load %arg13[%c0_6, %c0_7] : memref<32x128xf32, #tpu.memory_space<vmem>>, vector<32x128xf32>
    tpu.vector_store %arg13[%c0_6, %c0_7], %8 {strides = array<i32>} : memref<32x128xf32, #tpu.memory_space<vmem>>, vector<32x128xf32>,
    %c0_8 = arith.constant 0 : index
    %c0_9 = arith.constant 0 : index
    %10 = vector.load %arg2[%c0_8, %c0_9] : memref<32x16xbf16, #tpu.memory_space<vmem>>, vector<32x16xbf16>
    %c0_10 = arith.constant 0 : index
    %c0_11 = arith.constant 0 : index
    %11 = vector.load %arg6[%c0_10, %c0_11] : memref<16x128xbf16, #tpu.memory_space<vmem>>, vector<16x128xbf16>
    %cst_12 = arith.constant dense<0.000000e+00> : vector<32x128xf32>
    %12 = tpu.matmul %10, %11, %cst_12 {dimension_numbers = #tpu.dot_dimension_numbers<[1], [0], [0], [1], [0, 0, 1, 1], [], []>} : vector<32x16xbf16>, vector<16x128xbf16>, vector<32x128xf32> -> vector<32x128xf32>
    %c0_13 = arith.constant 0 : index
    %c0_14 = arith.constant 0 : index
    %13 = vector.load %arg8[%c0_13, %c0_14] : memref<1x128xf32, #tpu.memory_space<vmem>>, vector<1x128xf32>
    %14 = vector.broadcast %13 : vector<1x128xf32> to vector<32x128xf32>
    %15 = arith.addf %12, %14 : vector<32x128xf32>
    %c0_15 = arith.constant 0 : index
    %c0_16 = arith.constant 0 : index
    %16 = vector.load %arg14[%c0_15, %c0_16] : memref<32x128xf32, #tpu.memory_space<vmem>>, vector<32x128xf32>
    tpu.vector_store %arg14[%c0_15, %c0_16], %15 {strides = array<i32>} : memref<32x128xf32, #tpu.memory_space<vmem>>, vector<32x128xf32>,
    %c0_17 = arith.constant 0 : index
    %c0_18 = arith.constant 0 : index
    %17 = vector.load %arg4[%c0_17, %c0_18] : memref<32x128xbf16, #tpu.memory_space<vmem>>, vector<32x128xbf16>
    %c0_19 = arith.constant 0 : index
    %c0_20 = arith.constant 0 : index
    %18 = vector.load %arg7[%c0_19, %c0_20] : memref<32x128xbf16, #tpu.memory_space<vmem>>, vector<32x128xbf16>
    %c0_21 = arith.constant 0 : index
    %c0_22 = arith.constant 0 : index
    %19 = vector.load %arg15[%c0_21, %c0_22] : memref<16x32xf32, #tpu.memory_space<vmem>>, vector<16x32xf32>
    %c0_23 = arith.constant 0 : index
    %c0_24 = arith.constant 0 : index
    %20 = vector.load %arg16[%c0_23, %c0_24] : memref<16x32xf32, #tpu.memory_space<vmem>>, vector<16x32xf32>
    %c0_25 = arith.constant 0 : index
    %c0_26 = arith.constant 0 : index
    %21 = vector.load %arg17[%c0_25, %c0_26] : memref<16x32xf32, #tpu.memory_space<vmem>>, vector<16x32xf32>
    %c0_27 = arith.constant 0 : index
    %c0_28 = arith.constant 0 : index
    %22 = vector.load %arg18[%c0_27, %c0_28] : memref<16x32xf32, #tpu.memory_space<vmem>>, vector<16x32xf32>
    %c0_i32_29 = arith.constant 0 : i32
    %c16_i32 = arith.constant 16 : i32
    %23 = arith.muli %c0_i32_29, %c16_i32 : i32
    %24 = tpu.assume_multiple %23, 8 : i32
    %c1_i32 = arith.constant 1 : i32
    %25 = arith.subi %c1_i32, %c0_i32_29 : i32
    %c16_i32_30 = arith.constant 16 : i32
    %26 = arith.muli %25, %c16_i32_30 : i32
    %27 = tpu.assume_multiple %26, 8 : i32
    %28 = arith.index_cast %24 : i32 to index
    %c0_31 = arith.constant 0 : index
    %29 = vector.load %arg13[%28, %c0_31] : memref<32x128xf32, #tpu.memory_space<vmem>>, vector<16x128xf32>
    %30 = arith.truncf %19 : vector<16x32xf32> to vector<16x32xbf16>
    %cst_32 = arith.constant dense<0.000000e+00> : vector<16x128xf32>
    %31 = tpu.matmul %30, %17, %cst_32 {dimension_numbers = #tpu.dot_dimension_numbers<[1], [0], [0], [1], [0, 0, 1, 1], [], []>} : vector<16x32xbf16>, vector<32x128xbf16>, vector<16x128xf32> -> vector<16x128xf32>
    %32 = arith.addf %29, %31 : vector<16x128xf32>
    %33 = vector.extract_strided_slice %32 {offsets = [0, 0], sizes = [16, 32], strides = [1, 1]} : vector<16x128xf32> to vector<16x32xf32>
    %34 = arith.negf %33 : vector<16x32xf32>
    %35 = math.exp %34 : vector<16x32xf32>
    %cst_33 = arith.constant 1.000000e+00 : f32
    %36 = vector.broadcast %cst_33 : f32 to vector<16x32xf32>
    %37 = arith.addf %36, %35 : vector<16x32xf32>
    %38 = arith.divf %36, %37 : vector<16x32xf32>
    %39 = vector.extract_strided_slice %32 {offsets = [0, 32], sizes = [16, 32], strides = [1, 1]} : vector<16x128xf32> to vector<16x32xf32>
    %40 = arith.negf %39 : vector<16x32xf32>
    %41 = math.exp %40 : vector<16x32xf32>
    %cst_34 = arith.constant 1.000000e+00 : f32
    %42 = vector.broadcast %cst_34 : f32 to vector<16x32xf32>
    %43 = arith.addf %42, %41 : vector<16x32xf32>
    %44 = arith.divf %42, %43 : vector<16x32xf32>
    %45 = vector.extract_strided_slice %32 {offsets = [0, 64], sizes = [16, 32], strides = [1, 1]} : vector<16x128xf32> to vector<16x32xf32>
    %46 = math.tanh %45 : vector<16x32xf32>
    %47 = vector.extract_strided_slice %32 {offsets = [0, 96], sizes = [16, 32], strides = [1, 1]} : vector<16x128xf32> to vector<16x32xf32>
    %48 = arith.negf %47 : vector<16x32xf32>
    %49 = math.exp %48 : vector<16x32xf32>
    %cst_35 = arith.constant 1.000000e+00 : f32
    %50 = vector.broadcast %cst_35 : f32 to vector<16x32xf32>
    %51 = arith.addf %50, %49 : vector<16x32xf32>
    %52 = arith.divf %50, %51 : vector<16x32xf32>
    %53 = arith.mulf %44, %20 : vector<16x32xf32>
    %54 = arith.mulf %38, %46 : vector<16x32xf32>
    %55 = arith.addf %53, %54 : vector<16x32xf32>
    %56 = math.tanh %55 : vector<16x32xf32>
    %57 = arith.mulf %52, %56 : vector<16x32xf32>
    %58 = arith.index_cast %27 : i32 to index
    %c0_36 = arith.constant 0 : index
    %59 = vector.load %arg14[%58, %c0_36] : memref<32x128xf32, #tpu.memory_space<vmem>>, vector<16x128xf32>
    %60 = arith.truncf %21 : vector<16x32xf32> to vector<16x32xbf16>
    %cst_37 = arith.constant dense<0.000000e+00> : vector<16x128xf32>
    %61 = tpu.matmul %60, %18, %cst_37 {dimension_numbers = #tpu.dot_dimension_numbers<[1], [0], [0], [1], [0, 0, 1, 1], [], []>} : vector<16x32xbf16>, vector<32x128xbf16>, vector<16x128xf32> -> vector<16x128xf32>
    %62 = arith.addf %59, %61 : vector<16x128xf32>
    %63 = vector.extract_strided_slice %62 {offsets = [0, 0], sizes = [16, 32], strides = [1, 1]} : vector<16x128xf32> to vector<16x32xf32>
    %64 = arith.negf %63 : vector<16x32xf32>
    %65 = math.exp %64 : vector<16x32xf32>
    %cst_38 = arith.constant 1.000000e+00 : f32
    %66 = vector.broadcast %cst_38 : f32 to vector<16x32xf32>
    %67 = arith.addf %66, %65 : vector<16x32xf32>
    %68 = arith.divf %66, %67 : vector<16x32xf32>
    %69 = vector.extract_strided_slice %62 {offsets = [0, 32], sizes = [16, 32], strides = [1, 1]} : vector<16x128xf32> to vector<16x32xf32>
    %70 = arith.negf %69 : vector<16x32xf32>
    %71 = math.exp %70 : vector<16x32xf32>
    %cst_39 = arith.constant 1.000000e+00 : f32
    %72 = vector.broadcast %cst_39 : f32 to vector<16x32xf32>
    %73 = arith.addf %72, %71 : vector<16x32xf32>
    %74 = arith.divf %72, %73 : vector<16x32xf32>
    %75 = vector.extract_strided_slice %62 {offsets = [0, 64], sizes = [16, 32], strides = [1, 1]} : vector<16x128xf32> to vector<16x32xf32>
    %76 = math.tanh %75 : vector<16x32xf32>
    %77 = vector.extract_strided_slice %62 {offsets = [0, 96], sizes = [16, 32], strides = [1, 1]} : vector<16x128xf32> to vector<16x32xf32>
    %78 = arith.negf %77 : vector<16x32xf32>
    %79 = math.exp %78 : vector<16x32xf32>
    %cst_40 = arith.constant 1.000000e+00 : f32
    %80 = vector.broadcast %cst_40 : f32 to vector<16x32xf32>
    %81 = arith.addf %80, %79 : vector<16x32xf32>
    %82 = arith.divf %80, %81 : vector<16x32xf32>
    %83 = arith.mulf %74, %22 : vector<16x32xf32>
    %84 = arith.mulf %68, %76 : vector<16x32xf32>
    %85 = arith.addf %83, %84 : vector<16x32xf32>
    %86 = math.tanh %85 : vector<16x32xf32>
    %87 = arith.mulf %82, %86 : vector<16x32xf32>
    %c1_i32_41 = arith.constant 1 : i32
    %c16_i32_42 = arith.constant 16 : i32
    %88 = arith.muli %c1_i32_41, %c16_i32_42 : i32
    %89 = tpu.assume_multiple %88, 8 : i32
    %c1_i32_43 = arith.constant 1 : i32
    %90 = arith.subi %c1_i32_43, %c1_i32_41 : i32
    %c16_i32_44 = arith.constant 16 : i32
    %91 = arith.muli %90, %c16_i32_44 : i32
    %92 = tpu.assume_multiple %91, 8 : i32
    %93 = arith.index_cast %89 : i32 to index
    %c0_45 = arith.constant 0 : index
    %94 = vector.load %arg13[%93, %c0_45] : memref<32x128xf32, #tpu.memory_space<vmem>>, vector<16x128xf32>
    %95 = arith.truncf %57 : vector<16x32xf32> to vector<16x32xbf16>
    %cst_46 = arith.constant dense<0.000000e+00> : vector<16x128xf32>
    %96 = tpu.matmul %95, %17, %cst_46 {dimension_numbers = #tpu.dot_dimension_numbers<[1], [0], [0], [1], [0, 0, 1, 1], [], []>} : vector<16x32xbf16>, vector<32x128xbf16>, vector<16x128xf32> -> vector<16x128xf32>
    %97 = arith.addf %94, %96 : vector<16x128xf32>
    %98 = vector.extract_strided_slice %97 {offsets = [0, 0], sizes = [16, 32], strides = [1, 1]} : vector<16x128xf32> to vector<16x32xf32>
    %99 = arith.negf %98 : vector<16x32xf32>
    %100 = math.exp %99 : vector<16x32xf32>
    %cst_47 = arith.constant 1.000000e+00 : f32
    %101 = vector.broadcast %cst_47 : f32 to vector<16x32xf32>
    %102 = arith.addf %101, %100 : vector<16x32xf32>
    %103 = arith.divf %101, %102 : vector<16x32xf32>
    %104 = vector.extract_strided_slice %97 {offsets = [0, 32], sizes = [16, 32], strides = [1, 1]} : vector<16x128xf32> to vector<16x32xf32>
    %105 = arith.negf %104 : vector<16x32xf32>
    %106 = math.exp %105 : vector<16x32xf32>
    %cst_48 = arith.constant 1.000000e+00 : f32
    %107 = vector.broadcast %cst_48 : f32 to vector<16x32xf32>
    %108 = arith.addf %107, %106 : vector<16x32xf32>
    %109 = arith.divf %107, %108 : vector<16x32xf32>
    %110 = vector.extract_strided_slice %97 {offsets = [0, 64], sizes = [16, 32], strides = [1, 1]} : vector<16x128xf32> to vector<16x32xf32>
    %111 = math.tanh %110 : vector<16x32xf32>
    %112 = vector.extract_strided_slice %97 {offsets = [0, 96], sizes = [16, 32], strides = [1, 1]} : vector<16x128xf32> to vector<16x32xf32>
    %113 = arith.negf %112 : vector<16x32xf32>
    %114 = math.exp %113 : vector<16x32xf32>
    %cst_49 = arith.constant 1.000000e+00 : f32
    %115 = vector.broadcast %cst_49 : f32 to vector<16x32xf32>
    %116 = arith.addf %115, %114 : vector<16x32xf32>
    %117 = arith.divf %115, %116 : vector<16x32xf32>
    %118 = arith.mulf %109, %55 : vector<16x32xf32>
    %119 = arith.mulf %103, %111 : vector<16x32xf32>
    %120 = arith.addf %118, %119 : vector<16x32xf32>
    %121 = math.tanh %120 : vector<16x32xf32>
    %122 = arith.mulf %117, %121 : vector<16x32xf32>
    %123 = arith.index_cast %92 : i32 to index
    %c0_50 = arith.constant 0 : index
    %124 = vector.load %arg14[%123, %c0_50] : memref<32x128xf32, #tpu.memory_space<vmem>>, vector<16x128xf32>
    %125 = arith.truncf %87 : vector<16x32xf32> to vector<16x32xbf16>
    %cst_51 = arith.constant dense<0.000000e+00> : vector<16x128xf32>
    %126 = tpu.matmul %125, %18, %cst_51 {dimension_numbers = #tpu.dot_dimension_numbers<[1], [0], [0], [1], [0, 0, 1, 1], [], []>} : vector<16x32xbf16>, vector<32x128xbf16>, vector<16x128xf32> -> vector<16x128xf32>
    %127 = arith.addf %124, %126 : vector<16x128xf32>
    %128 = vector.extract_strided_slice %127 {offsets = [0, 0], sizes = [16, 32], strides = [1, 1]} : vector<16x128xf32> to vector<16x32xf32>
    %129 = arith.negf %128 : vector<16x32xf32>
    %130 = math.exp %129 : vector<16x32xf32>
    %cst_52 = arith.constant 1.000000e+00 : f32
    %131 = vector.broadcast %cst_52 : f32 to vector<16x32xf32>
    %132 = arith.addf %131, %130 : vector<16x32xf32>
    %133 = arith.divf %131, %132 : vector<16x32xf32>
    %134 = vector.extract_strided_slice %127 {offsets = [0, 32], sizes = [16, 32], strides = [1, 1]} : vector<16x128xf32> to vector<16x32xf32>
    %135 = arith.negf %134 : vector<16x32xf32>
    %136 = math.exp %135 : vector<16x32xf32>
    %cst_53 = arith.constant 1.000000e+00 : f32
    %137 = vector.broadcast %cst_53 : f32 to vector<16x32xf32>
    %138 = arith.addf %137, %136 : vector<16x32xf32>
    %139 = arith.divf %137, %138 : vector<16x32xf32>
    %140 = vector.extract_strided_slice %127 {offsets = [0, 64], sizes = [16, 32], strides = [1, 1]} : vector<16x128xf32> to vector<16x32xf32>
    %141 = math.tanh %140 : vector<16x32xf32>
    %142 = vector.extract_strided_slice %127 {offsets = [0, 96], sizes = [16, 32], strides = [1, 1]} : vector<16x128xf32> to vector<16x32xf32>
    %143 = arith.negf %142 : vector<16x32xf32>
    %144 = math.exp %143 : vector<16x32xf32>
    %cst_54 = arith.constant 1.000000e+00 : f32
    %145 = vector.broadcast %cst_54 : f32 to vector<16x32xf32>
    %146 = arith.addf %145, %144 : vector<16x32xf32>
    %147 = arith.divf %145, %146 : vector<16x32xf32>
    %148 = arith.mulf %139, %85 : vector<16x32xf32>
    %149 = arith.mulf %133, %141 : vector<16x32xf32>
    %150 = arith.addf %148, %149 : vector<16x32xf32>
    %151 = math.tanh %150 : vector<16x32xf32>
    %152 = arith.mulf %147, %151 : vector<16x32xf32>
    %c2_i32 = arith.constant 2 : i32
    %c0_55 = arith.constant 0 : index
    %c0_56 = arith.constant 0 : index
    %153 = vector.load %arg15[%c0_55, %c0_56] : memref<16x32xf32, #tpu.memory_space<vmem>>, vector<16x32xf32>
    tpu.vector_store %arg15[%c0_55, %c0_56], %122 {strides = array<i32>} : memref<16x32xf32, #tpu.memory_space<vmem>>, vector<16x32xf32>,
    %c0_57 = arith.constant 0 : index
    %c0_58 = arith.constant 0 : index
    %154 = vector.load %arg16[%c0_57, %c0_58] : memref<16x32xf32, #tpu.memory_space<vmem>>, vector<16x32xf32>
    tpu.vector_store %arg16[%c0_57, %c0_58], %120 {strides = array<i32>} : memref<16x32xf32, #tpu.memory_space<vmem>>, vector<16x32xf32>,
    %c0_59 = arith.constant 0 : index
    %c0_60 = arith.constant 0 : index
    %155 = vector.load %arg17[%c0_59, %c0_60] : memref<16x32xf32, #tpu.memory_space<vmem>>, vector<16x32xf32>
    tpu.vector_store %arg17[%c0_59, %c0_60], %152 {strides = array<i32>} : memref<16x32xf32, #tpu.memory_space<vmem>>, vector<16x32xf32>,
    %c0_61 = arith.constant 0 : index
    %c0_62 = arith.constant 0 : index
    %156 = vector.load %arg18[%c0_61, %c0_62] : memref<16x32xf32, #tpu.memory_space<vmem>>, vector<16x32xf32>
    tpu.vector_store %arg18[%c0_61, %c0_62], %150 {strides = array<i32>} : memref<16x32xf32, #tpu.memory_space<vmem>>, vector<16x32xf32>,
    %c3_i32 = arith.constant 3 : i32
    %157 = arith.cmpi eq, %arg0, %c3_i32 : i32
    %158 = arith.extui %157 : i1 to i32
    %c0_i32_63 = arith.constant 0 : i32
    %159 = arith.cmpi ne, %158, %c0_i32_63 : i32
    scf.if %159 {
      %c0_64 = arith.constant 0 : index
      %c0_65 = arith.constant 0 : index
      %160 = vector.load %arg15[%c0_64, %c0_65] : memref<16x32xf32, #tpu.memory_space<vmem>>, vector<16x32xf32>
      %c0_66 = arith.constant 0 : index
      %c0_67 = arith.constant 0 : index
      %161 = vector.load %arg17[%c0_66, %c0_67] : memref<16x32xf32, #tpu.memory_space<vmem>>, vector<16x32xf32>
      %162 = tpu.concatenate %160, %161 in 1 : vector<16x32xf32>, vector<16x32xf32> -> vector<16x64xf32>
      %163 = arith.truncf %162 : vector<16x64xf32> to vector<16x64xbf16>
      %c0_68 = arith.constant 0 : index
      %c0_69 = arith.constant 0 : index
      %164 = vector.load %arg9[%c0_68, %c0_69] : memref<64x16xbf16, #tpu.memory_space<vmem>>, vector<64x16xbf16>
      %cst_70 = arith.constant dense<0.000000e+00> : vector<16x16xf32>
      %165 = tpu.matmul %163, %164, %cst_70 {dimension_numbers = #tpu.dot_dimension_numbers<[1], [0], [0], [1], [0, 0, 1, 1], [], []>} : vector<16x64xbf16>, vector<64x16xbf16>, vector<16x16xf32> -> vector<16x16xf32>
      %c0_71 = arith.constant 0 : index
      %c0_72 = arith.constant 0 : index
      %166 = vector.load %arg10[%c0_71, %c0_72] : memref<1x16xf32, #tpu.memory_space<vmem>>, vector<1x16xf32>
      %167 = vector.broadcast %166 : vector<1x16xf32> to vector<16x16xf32>
      %168 = arith.addf %165, %167 : vector<16x16xf32>
      %169 = vector.extract_strided_slice %168 {offsets = [0, 0], sizes = [16, 8], strides = [1, 1]} : vector<16x16xf32> to vector<16x8xf32>
      %c0_73 = arith.constant 0 : index
      %c0_74 = arith.constant 0 : index
      %170 = vector.load %arg11[%c0_73, %c0_74] : memref<16x8xf32, #tpu.memory_space<vmem>>, vector<16x8xf32>
      tpu.vector_store %arg11[%c0_73, %c0_74], %169 {strides = array<i32>} : memref<16x8xf32, #tpu.memory_space<vmem>>, vector<16x8xf32>,
      %171 = vector.extract_strided_slice %168 {offsets = [0, 8], sizes = [16, 8], strides = [1, 1]} : vector<16x16xf32> to vector<16x8xf32>
      %c0_75 = arith.constant 0 : index
      %c0_76 = arith.constant 0 : index
      %172 = vector.load %arg12[%c0_75, %c0_76] : memref<16x8xf32, #tpu.memory_space<vmem>>, vector<16x8xf32>
      tpu.vector_store %arg12[%c0_75, %c0_76], %171 {strides = array<i32>} : memref<16x8xf32, #tpu.memory_space<vmem>>, vector<16x8xf32>,
    } else {
    }
    return
  }
  func.func @transform_0(%arg0: i32) -> (i32, i32) {
    %c0_i32 = arith.constant 0 : i32
    %c0_i32_0 = arith.constant 0 : i32
    return %arg0, %c0_i32 : i32, i32
  }
  func.func @transform_1(%arg0: i32) -> (i32, i32) {
    %c3_i32 = arith.constant 3 : i32
    %0 = arith.subi %c3_i32, %arg0 : i32
    %c0_i32 = arith.constant 0 : i32
    %c0_i32_0 = arith.constant 0 : i32
    return %0, %c0_i32 : i32, i32
  }
  func.func @transform_2(%arg0: i32) -> (i32, i32) {
    %c0_i32 = arith.constant 0 : i32
    %c0_i32_0 = arith.constant 0 : i32
    %c0_i32_1 = arith.constant 0 : i32
    return %c0_i32, %c0_i32_0 : i32, i32
  }
  func.func @transform_3(%arg0: i32) -> (i32, i32) {
    %c0_i32 = arith.constant 0 : i32
    %c0_i32_0 = arith.constant 0 : i32
    %c0_i32_1 = arith.constant 0 : i32
    return %c0_i32, %c0_i32_0 : i32, i32
  }
  func.func @transform_4(%arg0: i32) -> (i32, i32) {
    %c0_i32 = arith.constant 0 : i32
    %c0_i32_0 = arith.constant 0 : i32
    %c0_i32_1 = arith.constant 0 : i32
    return %c0_i32, %c0_i32_0 : i32, i32
  }
  func.func @transform_5(%arg0: i32) -> (i32, i32) {
    %c0_i32 = arith.constant 0 : i32
    %c0_i32_0 = arith.constant 0 : i32
    %c0_i32_1 = arith.constant 0 : i32
    return %c0_i32, %c0_i32_0 : i32, i32
  }
  func.func @transform_6(%arg0: i32) -> (i32, i32) {
    %c0_i32 = arith.constant 0 : i32
    %c0_i32_0 = arith.constant 0 : i32
    %c0_i32_1 = arith.constant 0 : i32
    return %c0_i32, %c0_i32_0 : i32, i32
  }
  func.func @transform_7(%arg0: i32) -> (i32, i32) {
    %c0_i32 = arith.constant 0 : i32
    %c0_i32_0 = arith.constant 0 : i32
    %c0_i32_1 = arith.constant 0 : i32
    return %c0_i32, %c0_i32_0 : i32, i32
  }
  func.func @transform_8(%arg0: i32) -> (i32, i32) {
    %c0_i32 = arith.constant 0 : i32
    %c0_i32_0 = arith.constant 0 : i32
    %c0_i32_1 = arith.constant 0 : i32
    return %c0_i32, %c0_i32_0 : i32, i32
  }
  func.func @transform_9(%arg0: i32) -> (i32, i32) {
    %c0_i32 = arith.constant 0 : i32
    %c0_i32_0 = arith.constant 0 : i32
    %c0_i32_1 = arith.constant 0 : i32
    return %c0_i32, %c0_i32_0 : i32, i32
  }
  func.func @transform_10(%arg0: i32) -> (i32, i32) {
    %c0_i32 = arith.constant 0 : i32
    %c0_i32_0 = arith.constant 0 : i32
    %c0_i32_1 = arith.constant 0 : i32
    return %c0_i32, %c0_i32_0 : i32, i32
  }
  func.func @transform_11(%arg0: i32) -> (i32, i32) {
    %c0_i32 = arith.constant 0 : i32
    %c0_i32_0 = arith.constant 0 : i32
    %c0_i32_1 = arith.constant 0 : i32
    return %c0_i32, %c0_i32_0 : i32, i32
  }
}

</mosaic_0001>

<llo_original>
// kernel: vae_forward.5
$region0: #{vae_forward.5}
  #allocation0 [shape = 'u32[]', space=smem, size = 0x4, offset = 0x4, fixed_abs, tag = 'smem constant byte address 0x4 - core index']
  #allocation1 [shape = 'u32[144,128]{1,0:T(1,128)}', space=vmem, size = 0x12000, scoped, tag = 'internal scratch']
  %s0 = inlined_call_operand.vmem [shape: bf16[128,32], index: 0, kind: input, shape index: {}]
  %s1 = inlined_call_operand.vmem [shape: bf16[32,128], index: 1, kind: input, shape index: {}]
  %s2 = inlined_call_operand.vmem [shape: f32[1,128], index: 2, kind: input, shape index: {}]
  %s3 = inlined_call_operand.vmem [shape: f32[128,128], index: 3, kind: output, shape index: {}]
  %s4 = sld [smem:[#allocation0]]
  $region22: #{vae_forward.5} parent=0
    _
  %s6 = ssub.s32 1, %s4
  %s7 = scalar_select 0, %s6, %s4
  // Predicated region
  $region2: #{vae_forward.5} parent=0 // pred_check
    _
  $region3: #{vae_forward.5} parent=0 // pred_check_branch
    %9 = sbr.rel (0) target = $region5
  $region4: #{vae_forward.5} parent=0 // pred_region
    _
  $region5: #{vae_forward.5} parent=0 // pred_fallthru
    _
  // Predicated region
  $region6: #{vae_forward.5} parent=0 // pred_check
    _
  $region7: #{vae_forward.5} parent=0 // pred_check_branch
    %11 = sbr.rel (0) target = $region9
  $region8: #{vae_forward.5} parent=0 // pred_region
    _
  $region9: #{vae_forward.5} parent=0 // pred_fallthru
    _
  // Predicated region
  $region10: #{vae_forward.5} parent=0 // pred_check
    _
  $region11: #{vae_forward.5} parent=0 // pred_check_branch
    %13 = sbr.rel (0) target = $region13
  $region12: #{vae_forward.5} parent=0 // pred_region
    _
  $region13: #{vae_forward.5} parent=0 // pred_fallthru
    _
  %v15 = vld [vmem:[%s0] sm:$0xf]
  %v16 = vld [vmem:[%s0 + $0x4] sm:$0xf]
  %v17 = vld [vmem:[%s0 + $0x8] sm:$0xf]
  %v18 = vld [vmem:[%s0 + $0xc] sm:$0xf]
  %v19 = vld [vmem:[%s0 + $0x10] sm:$0xf]
  %v20 = vld [vmem:[%s0 + $0x14] sm:$0xf]
  %v21 = vld [vmem:[%s0 + $0x18] sm:$0xf]
  %v22 = vld [vmem:[%s0 + $0x1c] sm:$0xf]
  %v23 = vld [vmem:[%s0 + $0x20] sm:$0xf]
  %v24 = vld [vmem:[%s0 + $0x24] sm:$0xf]
  %v25 = vld [vmem:[%s0 + $0x28] sm:$0xf]
  %v26 = vld [vmem:[%s0 + $0x2c] sm:$0xf]
  %v27 = vld [vmem:[%s0 + $0x30] sm:$0xf]
  %v28 = vld [vmem:[%s0 + $0x34] sm:$0xf]
  %v29 = vld [vmem:[%s0 + $0x38] sm:$0xf]
  %v30 = vld [vmem:[%s0 + $0x3c] sm:$0xf]
  %v31 = vld [vmem:[%s1] sm:$0xf]
  %v32 = vld [vmem:[%s1 + $0x4] sm:$0xf]
  %v33 = vld [vmem:[%s1 + $0x8] sm:$0xf]
  %v34 = vld [vmem:[%s1 + $0xc] sm:$0xf]
  %v35 = vld [vmem:[%s2] sm:$0x1]
  %v37 = vlaneseq
  %v38 = vshrl.u32 %v37, 7
  %v39 = vsub.s32 0, %v38
  %v40 = vrot.slane %v35, %v39
  %v58 = vunpack.c.l.b16 %v15
  %v59 = vunpack.c.l.b16 %v16
  %v60 = vunpack.c.l.b16 %v17
  %v61 = vunpack.c.l.b16 %v18
  %v62 = vunpack.c.l.b16 %v19
  %v63 = vunpack.c.l.b16 %v20
  %v64 = vunpack.c.l.b16 %v21
  %v65 = vunpack.c.l.b16 %v22
  %v66 = vunpack.c.l.b16 %v23
  %v67 = vunpack.c.l.b16 %v24
  %v68 = vunpack.c.l.b16 %v25
  %v69 = vunpack.c.l.b16 %v26
  %v70 = vunpack.c.l.b16 %v27
  %v71 = vunpack.c.l.b16 %v28
  %v72 = vunpack.c.l.b16 %v29
  %v73 = vunpack.c.l.b16 %v30
  %v74 = vpack.c.b16 %v59, %v58
  %v75 = vpack.c.b16 %v61, %v60
  %v76 = vpack.c.b16 %v63, %v62
  %v77 = vpack.c.b16 %v65, %v64
  %v78 = vpack.c.b16 %v67, %v66
  %v79 = vpack.c.b16 %v69, %v68
  %v80 = vpack.c.b16 %v71, %v70
  %v81 = vpack.c.b16 %v73, %v72
  %v86 = vunpack.c.l.b16 %v31
  %v87 = vunpack.c.l.b16 %v32
  %v88 = vunpack.c.l.b16 %v33
  %v89 = vunpack.c.l.b16 %v34
  %v90 = vpack.c.b16 %v87, %v86
  %v91 = vpack.c.b16 %v89, %v88
  %vm94 = vcmask 261120
  %v96 = vsel %vm94, %v74, 0
  %v99 = vsel %vm94, %v75, 0
  %v102 = vsel %vm94, %v76, 0
  %v105 = vsel %vm94, %v77, 0
  %v108 = vsel %vm94, %v78, 0
  %v111 = vsel %vm94, %v79, 0
  %v114 = vsel %vm94, %v80, 0
  %v117 = vsel %vm94, %v81, 0
  %119 = vmatprep.subr.bf16.mxu0 0
  %120 = vmatpush1.bf16.msra.mxu0 %v90
  %121 = vmatprep.subr.bf16.mxu0 0
  %122 = vmatpush1.bf16.msra.mxu0 %v91
  %123 = vmatprep.subr.bf16.mxu0 0
  %124 = vmatpush1.bf16.msra.mxu0 0
  %125 = vmatprep.subr.bf16.mxu0 0
  %126 = vmatpush1.bf16.msra.mxu0 0
  %127 = vmatprep.subr.bf16.mxu0 0
  %128 = vmatpush1.bf16.msra.mxu0 0
  %129 = vmatprep.subr.bf16.mxu0 0
  %130 = vmatpush1.bf16.msra.mxu0 0
  %131 = vmatprep.subr.bf16.mxu0 0
  %132 = vmatpush1.bf16.msra.mxu0 0
  %133 = vmatprep.subr.bf16.mxu0 0
  %134 = vmatpush1.bf16.msra.mxu0 0
  %135 = vmatprep.subr.bf16.mxu0 0
  %136 = vmatpush1.bf16.msra.mxu0 0
  %137 = vmatprep.subr.bf16.mxu0 0
  %138 = vmatpush1.bf16.msra.mxu0 0
  %139 = vmatprep.subr.bf16.mxu0 0
  %140 = vmatpush1.bf16.msra.mxu0 0
  %141 = vmatprep.subr.bf16.mxu0 0
  %142 = vmatpush1.bf16.msra.mxu0 0
  %143 = vmatprep.subr.bf16.mxu0 0
  %144 = vmatpush1.bf16.msra.mxu0 0
  %145 = vmatprep.subr.bf16.mxu0 0
  %146 = vmatpush1.bf16.msra.mxu0 0
  %147 = vmatprep.subr.bf16.mxu0 0
  %148 = vmatpush1.bf16.msra.mxu0 0
  %149 = vmatprep.subr.bf16.mxu0 0
  %150 = vmatpush1.bf16.msra.mxu0 0
  %151 = vmatprep.mubr.bf16.mxu0 0
  %152 = vmatmul.mubr.bf16.gmra.mrb[0].mxu0 %v96
  %v153 = vpop.f32.mrb[0].mxu0
  %v154 = vadd.f32 %v40, %v153
  %v155 = vpop.f32.mrb[0].mxu0
  %v156 = vpop.f32.mrb[0].mxu0
  %v157 = vadd.f32 %v40, %v156
  %v158 = vpop.f32.mrb[0].mxu0
  %159 = vmatprep.mubr.bf16.mxu0 0
  %160 = vmatmul.mubr.bf16.gmra.mrb[0].mxu0 %v99
  %v161 = vpop.f32.mrb[0].mxu0
  %v162 = vadd.f32 %v40, %v161
  %v163 = vpop.f32.mrb[0].mxu0
  %v164 = vpop.f32.mrb[0].mxu0
  %v165 = vadd.f32 %v40, %v164
  %v166 = vpop.f32.mrb[0].mxu0
  %167 = vmatprep.mubr.bf16.mxu0 0
  %168 = vmatmul.mubr.bf16.gmra.mrb[0].mxu0 %v102
  %v169 = vpop.f32.mrb[0].mxu0
  %v170 = vadd.f32 %v40, %v169
  %v171 = vpop.f32.mrb[0].mxu0
  %v172 = vpop.f32.mrb[0].mxu0
  %v173 = vadd.f32 %v40, %v172
  %v174 = vpop.f32.mrb[0].mxu0
  %175 = vmatprep.mubr.bf16.mxu0 0
  %176 = vmatmul.mubr.bf16.gmra.mrb[0].mxu0 %v105
  %v177 = vpop.f32.mrb[0].mxu0
  %v178 = vadd.f32 %v40, %v177
  %v179 = vpop.f32.mrb[0].mxu0
  %v180 = vpop.f32.mrb[0].mxu0
  %v181 = vadd.f32 %v40, %v180
  %v182 = vpop.f32.mrb[0].mxu0
  %183 = vmatprep.mubr.bf16.mxu0 0
  %184 = vmatmul.mubr.bf16.gmra.mrb[0].mxu0 %v108
  %v185 = vpop.f32.mrb[0].mxu0
  %v186 = vadd.f32 %v40, %v185
  %v187 = vpop.f32.mrb[0].mxu0
  %v188 = vpop.f32.mrb[0].mxu0
  %v189 = vadd.f32 %v40, %v188
  %v190 = vpop.f32.mrb[0].mxu0
  %191 = vmatprep.mubr.bf16.mxu0 0
  %192 = vmatmul.mubr.bf16.gmra.mrb[0].mxu0 %v111
  %v193 = vpop.f32.mrb[0].mxu0
  %v194 = vadd.f32 %v40, %v193
  %v195 = vpop.f32.mrb[0].mxu0
  %v196 = vpop.f32.mrb[0].mxu0
  %v197 = vadd.f32 %v40, %v196
  %v198 = vpop.f32.mrb[0].mxu0
  %199 = vmatprep.mubr.bf16.mxu0 0
  %200 = vmatmul.mubr.bf16.gmra.mrb[0].mxu0 %v114
  %v201 = vpop.f32.mrb[0].mxu0
  %v202 = vadd.f32 %v40, %v201
  %v203 = vpop.f32.mrb[0].mxu0
  %v204 = vpop.f32.mrb[0].mxu0
  %v205 = vadd.f32 %v40, %v204
  %v206 = vpop.f32.mrb[0].mxu0
  %207 = vmatprep.mubr.bf16.mxu0 0
  %208 = vmatmul.mubr.bf16.gmra.mrb[0].mxu0 %v117
  %v209 = vpop.f32.mrb[0].mxu0
  %v210 = vadd.f32 %v40, %v209
  %v211 = vpop.f32.mrb[0].mxu0
  %v212 = vpop.f32.mrb[0].mxu0
  %v213 = vadd.f32 %v40, %v212
  %v214 = vpop.f32.mrb[0].mxu0
  %215 = vdwg.mxu0
  %216 = vst [vmem:[%s3] sm:$0xff] %v154
  %217 = vst [vmem:[%s3 + $0x8] sm:$0xff] %v157
  %218 = vst [vmem:[%s3 + $0x10] sm:$0xff] %v162
  %219 = vst [vmem:[%s3 + $0x18] sm:$0xff] %v165
  %220 = vst [vmem:[%s3 + $0x20] sm:$0xff] %v170
  %221 = vst [vmem:[%s3 + $0x28] sm:$0xff] %v173
  %222 = vst [vmem:[%s3 + $0x30] sm:$0xff] %v178
  %223 = vst [vmem:[%s3 + $0x38] sm:$0xff] %v181
  %224 = vst [vmem:[%s3 + $0x40] sm:$0xff] %v186
  %225 = vst [vmem:[%s3 + $0x48] sm:$0xff] %v189
  %226 = vst [vmem:[%s3 + $0x50] sm:$0xff] %v194
  %227 = vst [vmem:[%s3 + $0x58] sm:$0xff] %v197
  %228 = vst [vmem:[%s3 + $0x60] sm:$0xff] %v202
  %229 = vst [vmem:[%s3 + $0x68] sm:$0xff] %v205
  %230 = vst [vmem:[%s3 + $0x70] sm:$0xff] %v210
  %231 = vst [vmem:[%s3 + $0x78] sm:$0xff] %v213
  // Predicated region
  $region14: #{vae_forward.5} parent=0 // pred_check
    _
  $region15: #{vae_forward.5} parent=0 // pred_check_branch
    %233 = sbr.rel (0) target = $region17
  $region16: #{vae_forward.5} parent=0 // pred_region
    _
  $region17: #{vae_forward.5} parent=0 // pred_fallthru
    _
  // Predicated region
  $region18: #{vae_forward.5} parent=0 // pred_check
    _
  $region19: #{vae_forward.5} parent=0 // pred_check_branch
    %235 = sbr.rel (0) target = $region21
  $region20: #{vae_forward.5} parent=0 // pred_region
    _
  $region21: #{vae_forward.5} parent=0 // pred_fallthru
    _

// kernel: vae_forward.4
$region0: #{vae_forward.4}
  #allocation0 [shape = 'u32[]', space=smem, size = 0x4, offset = 0x4, fixed_abs, tag = 'smem constant byte address 0x4 - core index']
  #allocation1 [shape = 'u32[144,128]{1,0:T(1,128)}', space=vmem, size = 0x12000, scoped, tag = 'internal scratch']
  #allocation2 [shape = 'f32[32,128]{1,0:T(8,128)}', space=vmem, size = 0x4000, scoped, tag = 'scratch operand']
  #allocation3 [shape = 'f32[16,128]{1,0:T(8,128)}', space=vmem, size = 0x2000, scoped, tag = 'scratch operand']
  #allocation4 [shape = 'f32[16,32]{1,0:T(8,128)}', space=vmem, size = 0x2000, scoped, tag = 'scratch operand']
  #allocation5 [shape = 'f32[16,32]{1,0:T(8,128)}', space=vmem, size = 0x2000, scoped, tag = 'scratch operand']
  %s0 = inlined_call_operand.vmem [shape: f32[16,8], index: 0, kind: input, shape index: {}]
  %s1 = inlined_call_operand.vmem [shape: f32[16,8], index: 1, kind: input, shape index: {}]
  %s2 = inlined_call_operand.vmem [shape: f32[16,8], index: 2, kind: input, shape index: {}]
  %s3 = inlined_call_operand.vmem [shape: bf16[128,16], index: 3, kind: input, shape index: {}]
  %s4 = inlined_call_operand.vmem [shape: bf16[8,64], index: 4, kind: input, shape index: {}]
  %s5 = inlined_call_operand.vmem [shape: f32[1,64], index: 5, kind: input, shape index: {}]
  %s6 = inlined_call_operand.vmem [shape: bf16[16,128], index: 6, kind: input, shape index: {}]
  %s7 = inlined_call_operand.vmem [shape: bf16[8,128], index: 7, kind: input, shape index: {}]
  %s8 = inlined_call_operand.vmem [shape: bf16[32,128], index: 8, kind: input, shape index: {}]
  %s9 = inlined_call_operand.vmem [shape: f32[1,128], index: 9, kind: input, shape index: {}]
  %s10 = inlined_call_operand.vmem [shape: bf16[8,16,32], index: 10, kind: output, shape index: {}]
  %s11 = sld [smem:[#allocation0]]
  $region77: #{vae_forward.4} parent=0
    _
  %s13 = ssub.s32 1, %s11
  %s14 = scalar_select 0, %s13, %s11
  loop: start=0, step=1, limit=6
  $region2: #{vae_forward.4} parent=0 // loop_pre_header
    _
  $region3: #{vae_forward.4} parent=0 // loop_header
    %s16 = sphi 0, %s20
    %p17 = scmp.ge.s32.totalorder %s16, 6
    %s24 = sphi 0, %s24
    %s26 = sphi 0, %s24
    %s27 = sphi 0, %s26
    %s41 = sphi 0, %s27
    %s45 = sphi 0, %s45
    %s47 = sphi 0, %s45
    %s48 = sphi 0, %s47
    %s62 = sphi 0, %s48
    %s66 = sphi 0, %s66
    %s68 = sphi 0, %s66
    %s69 = sphi 0, %s68
    %s83 = sphi 0, %s69
    %s89 = sphi 0, %s91
    %s92 = sphi 0, %s89
    %s93 = sphi 0, %s92
    %s109 = sphi 0, %s93
    %s113 = sphi 0, %s113
    %s115 = sphi 0, %s113
    %s116 = sphi 0, %s115
    %s130 = sphi 0, %s116
    %s134 = sphi 0, %s134
    %s136 = sphi 0, %s134
    %s137 = sphi 0, %s136
    %s151 = sphi 0, %s137
    %s155 = sphi 0, %s155
    %s157 = sphi 0, %s155
    %s158 = sphi 0, %s157
    %s172 = sphi 0, %s158
    %s176 = sphi 0, %s176
    %s178 = sphi 0, %s176
    %s179 = sphi 0, %s178
    %s193 = sphi 0, %s179
    %s197 = sphi 0, %s197
    %s199 = sphi 0, %s197
    %s200 = sphi 0, %s199
    %s214 = sphi 0, %s200
    %s218 = sphi 0, %s218
    %s220 = sphi 0, %s218
    %s221 = sphi 0, %s220
    %s235 = sphi 0, %s221
    %s241 = sphi 0, %s243
    %s244 = sphi 0, %s241
    %s245 = sphi 0, %s244
    %s261 = sphi 0, %s245
  $region4: #{vae_forward.4} parent=0 // loop_header_branch
    %19 = sbr.rel (%p17) target = $region8
  $region5: #{vae_forward.4} parent=0 // loop_body
    %s21 = ssub.s32 %s16, 1
    %s22 = ssub.s32 %s16, 2
    %s23 = sadd.s32 %s16, 1
    %s25 = sadd.s32 %s24, 1
    %p28 = scmp.eq.s32.totalorder %s16, 3
    %p29 = scmp.ne.s32.totalorder %s24, %s26
    %p30 = scmp.eq.s32.totalorder %s16, 0
    %p31 = por %p29, %p30
    %p32 = scmp.ne.s32.totalorder %s24, %s26
    %p33 = scmp.eq.s32.totalorder %s21, 3
    %p34 = por %p32, %p33
    %p35 = scmp.ne.s32.totalorder %s26, %s27
    %p36 = scmp.eq.s32.totalorder %s21, 0
    %p37 = por %p35, %p36
    %p38 = scmp.ne.s32.totalorder %s26, %s27
    %p39 = scmp.eq.s32.totalorder %s22, 3
    %p40 = por %p38, %p39
    %p42 = scmp.ne.s32.totalorder %s27, %s41
    %p43 = scmp.eq.s32.totalorder %s22, 0
    %p44 = por %p42, %p43
    %s46 = sadd.s32 %s45, 1
    %p49 = scmp.eq.s32.totalorder %s16, 3
    %p50 = scmp.ne.s32.totalorder %s45, %s47
    %p51 = scmp.eq.s32.totalorder %s16, 0
    %p52 = por %p50, %p51
    %p53 = scmp.ne.s32.totalorder %s45, %s47
    %p54 = scmp.eq.s32.totalorder %s21, 3
    %p55 = por %p53, %p54
    %p56 = scmp.ne.s32.totalorder %s47, %s48
    %p57 = scmp.eq.s32.totalorder %s21, 0
    %p58 = por %p56, %p57
    %p59 = scmp.ne.s32.totalorder %s47, %s48
    %p60 = scmp.eq.s32.totalorder %s22, 3
    %p61 = por %p59, %p60
    %p63 = scmp.ne.s32.totalorder %s48, %s62
    %p64 = scmp.eq.s32.totalorder %s22, 0
    %p65 = por %p63, %p64
    %s67 = sadd.s32 %s66, 1
    %p70 = scmp.eq.s32.totalorder %s16, 3
    %p71 = scmp.ne.s32.totalorder %s66, %s68
    %p72 = scmp.eq.s32.totalorder %s16, 0
    %p73 = por %p71, %p72
    %p74 = scmp.ne.s32.totalorder %s66, %s68
    %p75 = scmp.eq.s32.totalorder %s21, 3
    %p76 = por %p74, %p75
    %p77 = scmp.ne.s32.totalorder %s68, %s69
    %p78 = scmp.eq.s32.totalorder %s21, 0
    %p79 = por %p77, %p78
    %p80 = scmp.ne.s32.totalorder %s68, %s69
    %p81 = scmp.eq.s32.totalorder %s22, 3
    %p82 = por %p80, %p81
    %p84 = scmp.ne.s32.totalorder %s69, %s83
    %p85 = scmp.eq.s32.totalorder %s22, 0
    %p86 = por %p84, %p85
    %s87 = ssub.s32 %s16, %s23
    %p88 = scmp.eq.s32.totalorder %s87, 0
    %s90 = sadd.s32 %s89, 1
    %s91 = scalar_select %p88, %s89, %s90
    %p94 = pneg %p88
    %p95 = scmp.eq.s32.totalorder %s16, 3
    %p96 = por %p94, %p95
    %p97 = scmp.ne.s32.totalorder %s89, %s92
    %p98 = scmp.eq.s32.totalorder %s16, 0
    %p99 = por %p97, %p98
    %p100 = scmp.ne.s32.totalorder %s89, %s92
    %p101 = scmp.eq.s32.totalorder %s21, 3
    %p102 = por %p100, %p101
    %p103 = scmp.ne.s32.totalorder %s92, %s93
    %p104 = scmp.eq.s32.totalorder %s21, 0
    %p105 = por %p103, %p104
    %p106 = scmp.ne.s32.totalorder %s92, %s93
    %p107 = scmp.eq.s32.totalorder %s22, 3
    %p108 = por %p106, %p107
    %p110 = scmp.ne.s32.totalorder %s93, %s109
    %p111 = scmp.eq.s32.totalorder %s22, 0
    %p112 = por %p110, %p111
    %s114 = sadd.s32 %s113, 1
    %p117 = scmp.eq.s32.totalorder %s16, 3
    %p118 = scmp.ne.s32.totalorder %s113, %s115
    %p119 = scmp.eq.s32.totalorder %s16, 0
    %p120 = por %p118, %p119
    %p121 = scmp.ne.s32.totalorder %s113, %s115
    %p122 = scmp.eq.s32.totalorder %s21, 3
    %p123 = por %p121, %p122
    %p124 = scmp.ne.s32.totalorder %s115, %s116
    %p125 = scmp.eq.s32.totalorder %s21, 0
    %p126 = por %p124, %p125
    %p127 = scmp.ne.s32.totalorder %s115, %s116
    %p128 = scmp.eq.s32.totalorder %s22, 3
    %p129 = por %p127, %p128
    %p131 = scmp.ne.s32.totalorder %s116, %s130
    %p132 = scmp.eq.s32.totalorder %s22, 0
    %p133 = por %p131, %p132
    %s135 = sadd.s32 %s134, 1
    %p138 = scmp.eq.s32.totalorder %s16, 3
    %p139 = scmp.ne.s32.totalorder %s134, %s136
    %p140 = scmp.eq.s32.totalorder %s16, 0
    %p141 = por %p139, %p140
    %p142 = scmp.ne.s32.totalorder %s134, %s136
    %p143 = scmp.eq.s32.totalorder %s21, 3
    %p144 = por %p142, %p143
    %p145 = scmp.ne.s32.totalorder %s136, %s137
    %p146 = scmp.eq.s32.totalorder %s21, 0
    %p147 = por %p145, %p146
    %p148 = scmp.ne.s32.totalorder %s136, %s137
    %p149 = scmp.eq.s32.totalorder %s22, 3
    %p150 = por %p148, %p149
    %p152 = scmp.ne.s32.totalorder %s137, %s151
    %p153 = scmp.eq.s32.totalorder %s22, 0
    %p154 = por %p152, %p153
    %s156 = sadd.s32 %s155, 1
    %p159 = scmp.eq.s32.totalorder %s16, 3
    %p160 = scmp.ne.s32.totalorder %s155, %s157
    %p161 = scmp.eq.s32.totalorder %s16, 0
    %p162 = por %p160, %p161
    %p163 = scmp.ne.s32.totalorder %s155, %s157
    %p164 = scmp.eq.s32.totalorder %s21, 3
    %p165 = por %p163, %p164
    %p166 = scmp.ne.s32.totalorder %s157, %s158
    %p167 = scmp.eq.s32.totalorder %s21, 0
    %p168 = por %p166, %p167
    %p169 = scmp.ne.s32.totalorder %s157, %s158
    %p170 = scmp.eq.s32.totalorder %s22, 3
    %p171 = por %p169, %p170
    %p173 = scmp.ne.s32.totalorder %s158, %s172
    %p174 = scmp.eq.s32.totalorder %s22, 0
    %p175 = por %p173, %p174
    %s177 = sadd.s32 %s176, 1
    %p180 = scmp.eq.s32.totalorder %s16, 3
    %p181 = scmp.ne.s32.totalorder %s176, %s178
    %p182 = scmp.eq.s32.totalorder %s16, 0
    %p183 = por %p181, %p182
    %p184 = scmp.ne.s32.totalorder %s176, %s178
    %p185 = scmp.eq.s32.totalorder %s21, 3
    %p186 = por %p184, %p185
    %p187 = scmp.ne.s32.totalorder %s178, %s179
    %p188 = scmp.eq.s32.totalorder %s21, 0
    %p189 = por %p187, %p188
    %p190 = scmp.ne.s32.totalorder %s178, %s179
    %p191 = scmp.eq.s32.totalorder %s22, 3
    %p192 = por %p190, %p191
    %p194 = scmp.ne.s32.totalorder %s179, %s193
    %p195 = scmp.eq.s32.totalorder %s22, 0
    %p196 = por %p194, %p195
    %s198 = sadd.s32 %s197, 1
    %p201 = scmp.eq.s32.totalorder %s16, 3
    %p202 = scmp.ne.s32.totalorder %s197, %s199
    %p203 = scmp.eq.s32.totalorder %s16, 0
    %p204 = por %p202, %p203
    %p205 = scmp.ne.s32.totalorder %s197, %s199
    %p206 = scmp.eq.s32.totalorder %s21, 3
    %p207 = por %p205, %p206
    %p208 = scmp.ne.s32.totalorder %s199, %s200
    %p209 = scmp.eq.s32.totalorder %s21, 0
    %p210 = por %p208, %p209
    %p211 = scmp.ne.s32.totalorder %s199, %s200
    %p212 = scmp.eq.s32.totalorder %s22, 3
    %p213 = por %p211, %p212
    %p215 = scmp.ne.s32.totalorder %s200, %s214
    %p216 = scmp.eq.s32.totalorder %s22, 0
    %p217 = por %p215, %p216
    %s219 = sadd.s32 %s218, 1
    %p222 = scmp.eq.s32.totalorder %s16, 3
    %p223 = scmp.ne.s32.totalorder %s218, %s220
    %p224 = scmp.eq.s32.totalorder %s16, 0
    %p225 = por %p223, %p224
    %p226 = scmp.ne.s32.totalorder %s218, %s220
    %p227 = scmp.eq.s32.totalorder %s21, 3
    %p228 = por %p226, %p227
    %p229 = scmp.ne.s32.totalorder %s220, %s221
    %p230 = scmp.eq.s32.totalorder %s21, 0
    %p231 = por %p229, %p230
    %p232 = scmp.ne.s32.totalorder %s220, %s221
    %p233 = scmp.eq.s32.totalorder %s22, 3
    %p234 = por %p232, %p233
    %p236 = scmp.ne.s32.totalorder %s221, %s235
    %p237 = scmp.eq.s32.totalorder %s22, 0
    %p238 = por %p236, %p237
    %s239 = ssub.s32 %s16, %s23
    %p240 = scmp.eq.s32.totalorder %s239, 0
    %s242 = sadd.s32 %s241, 1
    %s243 = scalar_select %p240, %s241, %s242
    %p246 = pneg %p240
    %p247 = scmp.eq.s32.totalorder %s16, 3
    %p248 = por %p246, %p247
    %p249 = scmp.ne.s32.totalorder %s241, %s244
    %p250 = scmp.eq.s32.totalorder %s16, 0
    %p251 = por %p249, %p250
    %p252 = scmp.ne.s32.totalorder %s241, %s244
    %p253 = scmp.eq.s32.totalorder %s21, 3
    %p254 = por %p252, %p253
    %p255 = scmp.ne.s32.totalorder %s244, %s245
    %p256 = scmp.eq.s32.totalorder %s21, 0
    %p257 = por %p255, %p256
    %p258 = scmp.ne.s32.totalorder %s244, %s245
    %p259 = scmp.eq.s32.totalorder %s22, 3
    %p260 = por %p258, %p259
    %p262 = scmp.ne.s32.totalorder %s245, %s261
    %p263 = scmp.eq.s32.totalorder %s22, 0
    %p264 = por %p262, %p263
    %p265 = scmp.le.s32.totalorder 1, %s16
    %p266 = scmp.lt.s32.totalorder %s16, 5
    %p267 = pnand %p265, %p266
    %p268 = pneg %p267
    // Predicated region
    $region9: #{vae_forward.4} parent=5 // pred_check
      _
    $region10: #{vae_forward.4} parent=5 // pred_check_branch
      %270 = sbr.rel (%p267) target = $region12
    $region11: #{vae_forward.4} parent=5 // pred_region
      %s271 = ssub.s32 %s16, 1
      // Predicated region
      $region13: #{vae_forward.4} parent=11 // pred_check
        %p272 = pneg %p37
      $region14: #{vae_forward.4} parent=11 // pred_check_branch
        %274 = sbr.rel (%p272) target = $region16
      $region15: #{vae_forward.4} parent=11 // pred_region
        _
      $region16: #{vae_forward.4} parent=11 // pred_fallthru
        _
      // Predicated region
      $region17: #{vae_forward.4} parent=11 // pred_check
        %p275 = pneg %p58
      $region18: #{vae_forward.4} parent=11 // pred_check_branch
        %277 = sbr.rel (%p275) target = $region20
      $region19: #{vae_forward.4} parent=11 // pred_region
        _
      $region20: #{vae_forward.4} parent=11 // pred_fallthru
        _
      // Predicated region
      $region21: #{vae_forward.4} parent=11 // pred_check
        %p278 = pneg %p79
      $region22: #{vae_forward.4} parent=11 // pred_check_branch
        %280 = sbr.rel (%p278) target = $region24
      $region23: #{vae_forward.4} parent=11 // pred_region
        _
      $region24: #{vae_forward.4} parent=11 // pred_fallthru
        _
      // Predicated region
      $region25: #{vae_forward.4} parent=11 // pred_check
        %p281 = pneg %p126
      $region26: #{vae_forward.4} parent=11 // pred_check_branch
        %283 = sbr.rel (%p281) target = $region28
      $region27: #{vae_forward.4} parent=11 // pred_region
        _
      $region28: #{vae_forward.4} parent=11 // pred_fallthru
        _
      // Predicated region
      $region29: #{vae_forward.4} parent=11 // pred_check
        %p284 = pneg %p147
      $region30: #{vae_forward.4} parent=11 // pred_check_branch
        %286 = sbr.rel (%p284) target = $region32
      $region31: #{vae_forward.4} parent=11 // pred_region
        _
      $region32: #{vae_forward.4} parent=11 // pred_fallthru
        _
      // Predicated region
      $region33: #{vae_forward.4} parent=11 // pred_check
        %p287 = pneg %p168
      $region34: #{vae_forward.4} parent=11 // pred_check_branch
        %289 = sbr.rel (%p287) target = $region36
      $region35: #{vae_forward.4} parent=11 // pred_region
        _
      $region36: #{vae_forward.4} parent=11 // pred_fallthru
        _
      // Predicated region
      $region37: #{vae_forward.4} parent=11 // pred_check
        %p290 = pneg %p189
      $region38: #{vae_forward.4} parent=11 // pred_check_branch
        %292 = sbr.rel (%p290) target = $region40
      $region39: #{vae_forward.4} parent=11 // pred_region
        _
      $region40: #{vae_forward.4} parent=11 // pred_fallthru
        _
      // Predicated region
      $region41: #{vae_forward.4} parent=11 // pred_check
        %p293 = pneg %p210
      $region42: #{vae_forward.4} parent=11 // pred_check_branch
        %295 = sbr.rel (%p293) target = $region44
      $region43: #{vae_forward.4} parent=11 // pred_region
        _
      $region44: #{vae_forward.4} parent=11 // pred_fallthru
        _
      // Predicated region
      $region45: #{vae_forward.4} parent=11 // pred_check
        %p296 = pneg %p231
      $region46: #{vae_forward.4} parent=11 // pred_check_branch
        %298 = sbr.rel (%p296) target = $region48
      $region47: #{vae_forward.4} parent=11 // pred_region
        _
      $region48: #{vae_forward.4} parent=11 // pred_fallthru
        _
    $region12: #{vae_forward.4} parent=5 // pred_fallthru
      _
    %p299 = scmp.lt.s32.totalorder %s16, 4
    // Predicated region
    $region49: #{vae_forward.4} parent=5 // pred_check
      %p300 = pneg %p299
    $region50: #{vae_forward.4} parent=5 // pred_check_branch
      %302 = sbr.rel (%p300) target = $region52
    $region51: #{vae_forward.4} parent=5 // pred_region
      // Predicated region
      $region53: #{vae_forward.4} parent=51 // pred_check
        %p303 = pneg %p99
      $region54: #{vae_forward.4} parent=51 // pred_check_branch
        %305 = sbr.rel (%p303) target = $region56
      $region55: #{vae_forward.4} parent=51 // pred_region
        %s306 = smul.u32 4, %s16
        %p307 = scmp.lt.s32.totalorder %s306, 15
        %s308 = scalar_select %p307, %s306, 15
        %s309 = smul.addr %s308, 4
        %s310 = scalar_lea.vmem %s3, %s309
        %s311 = smul.u32 4, %s16
      $region56: #{vae_forward.4} parent=51 // pred_fallthru
        _
    $region52: #{vae_forward.4} parent=5 // pred_fallthru
      _
    %p312 = scmp.le.s32.totalorder 1, %s16
    %p313 = scmp.lt.s32.totalorder %s16, 5
    %p314 = pnand %p312, %p313
    %p315 = pneg %p314
    // Predicated region
    $region57: #{vae_forward.4} parent=5 // pred_check
      _
    $region58: #{vae_forward.4} parent=5 // pred_check_branch
      %317 = sbr.rel (%p314) target = $region60
    $region59: #{vae_forward.4} parent=5 // pred_region
      %s318 = ssub.s32 %s16, 1
      %p319 = pneg %p37
      %p320 = pneg %p34
      %p321 = pneg %p58
      %p322 = pneg %p55
      %p323 = pneg %p79
      %p324 = pneg %p76
      %s325 = smul.u32 4, %s21
      %p326 = scmp.lt.s32.totalorder %s325, 15
      %s327 = scalar_select %p326, %s325, 15
      %s328 = smul.addr %s327, 4
      %s329 = scalar_lea.vmem %s3, %s328
      %p330 = pneg %p105
      %p331 = pneg %p102
      %p332 = pneg %p126
      %p333 = pneg %p123
      %p334 = pneg %p147
      %p335 = pneg %p144
      %p336 = pneg %p168
      %p337 = pneg %p165
      %p338 = pneg %p189
      %p339 = pneg %p186
      %p340 = pneg %p210
      %p341 = pneg %p207
      %p342 = pneg %p231
      %p343 = pneg %p228
      %p344 = pneg %p257
      %p345 = pneg %p254
      %s346 = smul.u32 2, %s21
      %p347 = scmp.lt.s32.totalorder %s346, 7
      %s348 = scalar_select %p347, %s346, 7
      %s349 = smul.addr %s348, 2
      %s350 = smul.addr %s349, 4
      %s351 = scalar_lea.vmem %s10, %s350
      %s352 = smul.u32 4, %s21
      %p353 = scmp.lt.s32.totalorder %s352, 15
      %s354 = scalar_select %p353, %s352, 15
      %s355 = smul.addr %s354, 4
      %s356 = scalar_lea.vmem %s3, %s355
      %s357 = smul.u32 4, %s21
      %s358 = smul.u32 2, %s21
      %p359 = scmp.lt.s32.totalorder %s358, 7
      %s360 = scalar_select %p359, %s358, 7
      %s361 = smul.addr %s360, 2
      %s362 = smul.addr %s361, 4
      %s363 = scalar_lea.vmem %s10, %s362
      %s364 = smul.u32 2, %s21
      %p366 = scmp.eq.s32.totalorder %s21, 0
      // Predicated region
      $region61: #{vae_forward.4} parent=59 // pred_check
        %p367 = pneg %p366
      $region62: #{vae_forward.4} parent=59 // pred_check_branch
        %369 = sbr.rel (%p367) target = $region64
      $region63: #{vae_forward.4} parent=59 // pred_region
        %v370 = vld [vmem:[%s0] sm:$0xff]
        %v371 = vld [vmem:[%s0 + $0x8] sm:$0xff]
        %v372 = vld [vmem:[%s2] sm:$0xff]
        %v373 = vld [vmem:[%s2 + $0x8] sm:$0xff]
        %v374 = vld [vmem:[%s1] sm:$0xff]
        %v375 = vld [vmem:[%s1 + $0x8] sm:$0xff]
        %v376 = vmul.f32 %v374, 0.5
        %v377 = vmul.f32 %v375, 0.5
        %v378 = vmul.f32 %v376, 1.442695
        %v379 = vpow.pop %v378
        %v380 = vmul.f32 %v377, 1.442695
        %v381 = vpow.pop %v380
        %v382 = vmul.f32 %v372, %v379
        %v383 = vmul.f32 %v373, %v381
        %v384 = vadd.f32 %v370, %v382
        %v385 = vadd.f32 %v371, %v383
        %v386 = vpack.c.bf16 %v385, %v384
        %v387 = vld [vmem:[%s4] sm:$0xf]
        %v388 = vld [vmem:[%s5] sm:$0x1]
        %v390 = vlaneseq
        %v391 = vshrl.u32 %v390, 7
        %v392 = vsub.s32 0, %v391
        %v393 = vrot.slane %v388, %v392
        %vm395 = vcmask 64512
        %v397 = vsel %vm395, %v386, 0
        %vm399 = vcmask 1043456
        %v401 = vsel %vm399, %v387, 0
        %403 = vmatprep.subr.bf16.mxu0 0
        %404 = vmatpush1.bf16.msra.mxu0 %v401
        %405 = vmatprep.subr.bf16.mxu0 0
        %406 = vmatpush1.bf16.msra.mxu0 0
        %407 = vmatprep.subr.bf16.mxu0 0
        %408 = vmatpush1.bf16.msra.mxu0 0
        %409 = vmatprep.subr.bf16.mxu0 0
        %410 = vmatpush1.bf16.msra.mxu0 0
        %411 = vmatprep.subr.bf16.mxu0 0
        %412 = vmatpush1.bf16.msra.mxu0 0
        %413 = vmatprep.subr.bf16.mxu0 0
        %414 = vmatpush1.bf16.msra.mxu0 0
        %415 = vmatprep.subr.bf16.mxu0 0
        %416 = vmatpush1.bf16.msra.mxu0 0
        %417 = vmatprep.subr.bf16.mxu0 0
        %418 = vmatpush1.bf16.msra.mxu0 0
        %419 = vmatprep.subr.bf16.mxu0 0
        %420 = vmatpush1.bf16.msra.mxu0 0
        %421 = vmatprep.subr.bf16.mxu0 0
        %422 = vmatpush1.bf16.msra.mxu0 0
        %423 = vmatprep.subr.bf16.mxu0 0
        %424 = vmatpush1.bf16.msra.mxu0 0
        %425 = vmatprep.subr.bf16.mxu0 0
        %426 = vmatpush1.bf16.msra.mxu0 0
        %427 = vmatprep.subr.bf16.mxu0 0
        %428 = vmatpush1.bf16.msra.mxu0 0
        %429 = vmatprep.subr.bf16.mxu0 0
        %430 = vmatpush1.bf16.msra.mxu0 0
        %431 = vmatprep.subr.bf16.mxu0 0
        %432 = vmatpush1.bf16.msra.mxu0 0
        %433 = vmatprep.subr.bf16.mxu0 0
        %434 = vmatpush1.bf16.msra.mxu0 0
        %435 = vmatprep.mubr.bf16.mxu0 0
        %436 = vmatmul.mubr.bf16.gmra.mrb[0].mxu0 %v397
        %v437 = vpop.f32.mrb[0].mxu0
        %v438 = vadd.f32 %v393, %v437
        %v439 = vpop.f32.mrb[0].mxu0
        %v440 = vpop.f32.mrb[0].mxu0
        %v441 = vadd.f32 %v393, %v440
        %v442 = vpop.f32.mrb[0].mxu0
        %443 = vdwg.mxu0
        %vm444 = vcmask 261120
        %445 = vst.msk [vmem:[#allocation4] sm:$0xff] %vm444, %v438
        %446 = vst.msk [vmem:[#allocation4 + $0x8] sm:$0xff] %vm444, %v441
        %449 = vrot.lane.b32.xlu0 %v438, 96
        %v450 = vpop.permute.xlu0 %449
        %451 = vrot.lane.b32.xlu0 %v441, 96
        %v452 = vpop.permute.xlu0 %451
        %455 = vst.msk [vmem:[#allocation5] sm:$0xff] %vm444, %v450
        %456 = vst.msk [vmem:[#allocation5 + $0x8] sm:$0xff] %vm444, %v452
        %v457 = vld [vmem:[%s7] sm:$0xf]
        %v458 = vld [vmem:[%s9] sm:$0x1]
        %v460 = vlaneseq
        %v461 = vshrl.u32 %v460, 7
        %v462 = vsub.s32 0, %v461
        %v463 = vrot.slane %v458, %v462
        %v466 = vsel %vm399, %v457, 0
        %468 = vmatprep.subr.bf16.mxu0 0
        %469 = vmatpush1.bf16.msra.mxu0 %v466
        %470 = vmatprep.subr.bf16.mxu0 0
        %471 = vmatpush1.bf16.msra.mxu0 0
        %472 = vmatprep.subr.bf16.mxu0 0
        %473 = vmatpush1.bf16.msra.mxu0 0
        %474 = vmatprep.subr.bf16.mxu0 0
        %475 = vmatpush1.bf16.msra.mxu0 0
        %476 = vmatprep.subr.bf16.mxu0 0
        %477 = vmatpush1.bf16.msra.mxu0 0
        %478 = vmatprep.subr.bf16.mxu0 0
        %479 = vmatpush1.bf16.msra.mxu0 0
        %480 = vmatprep.subr.bf16.mxu0 0
        %481 = vmatpush1.bf16.msra.mxu0 0
        %482 = vmatprep.subr.bf16.mxu0 0
        %483 = vmatpush1.bf16.msra.mxu0 0
        %484 = vmatprep.subr.bf16.mxu0 0
        %485 = vmatpush1.bf16.msra.mxu0 0
        %486 = vmatprep.subr.bf16.mxu0 0
        %487 = vmatpush1.bf16.msra.mxu0 0
        %488 = vmatprep.subr.bf16.mxu0 0
        %489 = vmatpush1.bf16.msra.mxu0 0
        %490 = vmatprep.subr.bf16.mxu0 0
        %491 = vmatpush1.bf16.msra.mxu0 0
        %492 = vmatprep.subr.bf16.mxu0 0
        %493 = vmatpush1.bf16.msra.mxu0 0
        %494 = vmatprep.subr.bf16.mxu0 0
        %495 = vmatpush1.bf16.msra.mxu0 0
        %496 = vmatprep.subr.bf16.mxu0 0
        %497 = vmatpush1.bf16.msra.mxu0 0
        %498 = vmatprep.subr.bf16.mxu0 0
        %499 = vmatpush1.bf16.msra.mxu0 0
        %500 = vmatprep.mubr.bf16.mxu0 0
        %501 = vmatmul.mubr.bf16.gmra.mrb[0].mxu0 %v397
        %v502 = vpop.f32.mrb[0].mxu0
        %v503 = vadd.f32 %v463, %v502
        %v504 = vpop.f32.mrb[0].mxu0
        %v505 = vpop.f32.mrb[0].mxu0
        %v506 = vadd.f32 %v463, %v505
        %v507 = vpop.f32.mrb[0].mxu0
        %508 = vdwg.mxu0
        %509 = vst [vmem:[#allocation3] sm:$0xff] %v503
        %510 = vst [vmem:[#allocation3 + $0x8] sm:$0xff] %v506
      $region64: #{vae_forward.4} parent=59 // pred_fallthru
        _
      %v511 = vld [vmem:[%s356] sm:$0xf]
      %v512 = vld [vmem:[%s356 + $0x4] sm:$0xf]
      %v513 = vld [vmem:[%s356 + $0x8] sm:$0xf]
      %v514 = vld [vmem:[%s356 + $0xc] sm:$0xf]
      %v515 = vld [vmem:[%s6] sm:$0xf]
      %v516 = vld [vmem:[%s6 + $0x4] sm:$0xf]
      %v521 = vunpack.c.l.b16 %v511
      %v522 = vunpack.c.l.b16 %v512
      %v523 = vunpack.c.l.b16 %v513
      %v524 = vunpack.c.l.b16 %v514
      %v525 = vpack.c.b16 %v522, %v521
      %v526 = vpack.c.b16 %v524, %v523
      %v529 = vunpack.c.l.b16 %v515
      %v530 = vunpack.c.l.b16 %v516
      %v531 = vpack.c.b16 %v530, %v529
      %vm533 = vcmask 130048
      %v535 = vsel %vm533, %v525, 0
      %v538 = vsel %vm533, %v526, 0
      %540 = vmatprep.subr.bf16.mxu0 0
      %541 = vmatpush1.bf16.msra.mxu0 %v531
      %542 = vmatprep.subr.bf16.mxu0 0
      %543 = vmatpush1.bf16.msra.mxu0 0
      %544 = vmatprep.subr.bf16.mxu0 0
      %545 = vmatpush1.bf16.msra.mxu0 0
      %546 = vmatprep.subr.bf16.mxu0 0
      %547 = vmatpush1.bf16.msra.mxu0 0
      %548 = vmatprep.subr.bf16.mxu0 0
      %549 = vmatpush1.bf16.msra.mxu0 0
      %550 = vmatprep.subr.bf16.mxu0 0
      %551 = vmatpush1.bf16.msra.mxu0 0
      %552 = vmatprep.subr.bf16.mxu0 0
      %553 = vmatpush1.bf16.msra.mxu0 0
      %554 = vmatprep.subr.bf16.mxu0 0
      %555 = vmatpush1.bf16.msra.mxu0 0
      %556 = vmatprep.subr.bf16.mxu0 0
      %557 = vmatpush1.bf16.msra.mxu0 0
      %558 = vmatprep.subr.bf16.mxu0 0
      %559 = vmatpush1.bf16.msra.mxu0 0
      %560 = vmatprep.subr.bf16.mxu0 0
      %561 = vmatpush1.bf16.msra.mxu0 0
      %562 = vmatprep.subr.bf16.mxu0 0
      %563 = vmatpush1.bf16.msra.mxu0 0
      %564 = vmatprep.subr.bf16.mxu0 0
      %565 = vmatpush1.bf16.msra.mxu0 0
      %566 = vmatprep.subr.bf16.mxu0 0
      %567 = vmatpush1.bf16.msra.mxu0 0
      %568 = vmatprep.subr.bf16.mxu0 0
      %569 = vmatpush1.bf16.msra.mxu0 0
      %570 = vmatprep.subr.bf16.mxu0 0
      %571 = vmatpush1.bf16.msra.mxu0 0
      %572 = vmatprep.mubr.bf16.mxu0 0
      %573 = vmatmul.mubr.bf16.gmra.mrb[0].mxu0 %v535
      %v574 = vpop.f32.mrb[0].mxu0
      %v575 = vadd.f32 0.0, %v574
      %v576 = vpop.f32.mrb[0].mxu0
      %v577 = vpop.f32.mrb[0].mxu0
      %v578 = vadd.f32 0.0, %v577
      %v579 = vpop.f32.mrb[0].mxu0
      %580 = vmatprep.mubr.bf16.mxu0 0
      %581 = vmatmul.mubr.bf16.gmra.mrb[0].mxu0 %v538
      %v582 = vpop.f32.mrb[0].mxu0
      %v583 = vadd.f32 0.0, %v582
      %v584 = vpop.f32.mrb[0].mxu0
      %v585 = vpop.f32.mrb[0].mxu0
      %v586 = vadd.f32 0.0, %v585
      %v587 = vpop.f32.mrb[0].mxu0
      %588 = vdwg.mxu0
      %v589 = vld [vmem:[#allocation3] sm:$0xff]
      %v590 = vld [vmem:[#allocation3 + $0x8] sm:$0xff]
      %v591 = vadd.f32 %v575, %v589
      %v592 = vadd.f32 %v578, %v590
      %v593 = vadd.f32 %v583, %v589
      %v594 = vadd.f32 %v586, %v590
      %595 = vst [vmem:[#allocation2] sm:$0xff] %v591
      %596 = vst [vmem:[#allocation2 + $0x8] sm:$0xff] %v592
      %597 = vst [vmem:[#allocation2 + $0x10] sm:$0xff] %v593
      %598 = vst [vmem:[#allocation2 + $0x18] sm:$0xff] %v594
      %v599 = vld [vmem:[%s8] sm:$0xf]
      %v600 = vld [vmem:[%s8 + $0x4] sm:$0xf]
      %v601 = vld [vmem:[%s8 + $0x8] sm:$0xf]
      %v602 = vld [vmem:[%s8 + $0xc] sm:$0xf]
      %v603 = vld [vmem:[#allocation4] sm:$0xff]
      %v604 = vld [vmem:[#allocation4 + $0x8] sm:$0xff]
      %v605 = vld [vmem:[#allocation5] sm:$0xff]
      %v606 = vld [vmem:[#allocation5 + $0x8] sm:$0xff]
      %v607 = vld [vmem:[#allocation2] sm:$0xff]
      %v608 = vld [vmem:[#allocation2 + $0x8] sm:$0xff]
      %v609 = vpack.c.bf16 %v604, %v603
      %v614 = vunpack.c.l.b16 %v599
      %v615 = vunpack.c.l.b16 %v600
      %v616 = vunpack.c.l.b16 %v601
      %v617 = vunpack.c.l.b16 %v602
      %v618 = vpack.c.b16 %v615, %v614
      %v619 = vpack.c.b16 %v617, %v616
      %vm622 = vcmask 261120
      %v624 = vsel %vm622, %v609, 0
      %626 = vmatprep.subr.bf16.mxu0 0
      %627 = vmatpush1.bf16.msra.mxu0 %v618
      %628 = vmatprep.subr.bf16.mxu0 0
      %629 = vmatpush1.bf16.msra.mxu0 %v619
      %630 = vmatprep.subr.bf16.mxu0 0
      %631 = vmatpush1.bf16.msra.mxu0 0
      %632 = vmatprep.subr.bf16.mxu0 0
      %633 = vmatpush1.bf16.msra.mxu0 0
      %634 = vmatprep.subr.bf16.mxu0 0
      %635 = vmatpush1.bf16.msra.mxu0 0
      %636 = vmatprep.subr.bf16.mxu0 0
      %637 = vmatpush1.bf16.msra.mxu0 0
      %638 = vmatprep.subr.bf16.mxu0 0
      %639 = vmatpush1.bf16.msra.mxu0 0
      %640 = vmatprep.subr.bf16.mxu0 0
      %641 = vmatpush1.bf16.msra.mxu0 0
      %642 = vmatprep.subr.bf16.mxu0 0
      %643 = vmatpush1.bf16.msra.mxu0 0
      %644 = vmatprep.subr.bf16.mxu0 0
      %645 = vmatpush1.bf16.msra.mxu0 0
      %646 = vmatprep.subr.bf16.mxu0 0
      %647 = vmatpush1.bf16.msra.mxu0 0
      %648 = vmatprep.subr.bf16.mxu0 0
      %649 = vmatpush1.bf16.msra.mxu0 0
      %650 = vmatprep.subr.bf16.mxu0 0
      %651 = vmatpush1.bf16.msra.mxu0 0
      %652 = vmatprep.subr.bf16.mxu0 0
      %653 = vmatpush1.bf16.msra.mxu0 0
      %654 = vmatprep.subr.bf16.mxu0 0
      %655 = vmatpush1.bf16.msra.mxu0 0
      %656 = vmatprep.subr.bf16.mxu0 0
      %657 = vmatpush1.bf16.msra.mxu0 0
      %658 = vmatprep.mubr.bf16.mxu0 0
      %659 = vmatmul.mubr.bf16.gmra.mrb[0].mxu0 %v624
      %v660 = vpop.f32.mrb[0].mxu0
      %v661 = vadd.f32 0.0, %v660
      %v662 = vpop.f32.mrb[0].mxu0
      %v663 = vpop.f32.mrb[0].mxu0
      %v664 = vadd.f32 0.0, %v663
      %v665 = vpop.f32.mrb[0].mxu0
      %666 = vdwg.mxu0
      %v667 = vadd.f32 %v607, %v661
      %v668 = vadd.f32 %v608, %v664
      %v669 = vxor.u32 %v667, 2147483648
      %v670 = vxor.u32 %v668, 2147483648
      %v671 = vmul.f32 %v669, 1.442695
      %v672 = vpow.pop %v671
      %v673 = vmul.f32 %v670, 1.442695
      %v674 = vpow.pop %v673
      %v675 = vadd.f32 %v672, 1.0
      %v676 = vadd.f32 %v674, 1.0
      %v677 = vrcp.pop %v675
      %v678 = vmul.f32 1.0, %v677
      %v679 = vrcp.pop %v676
      %v680 = vmul.f32 1.0, %v679
      %v681 = vtanh.pop %v667
      %v682 = vtanh.pop %v668
      %685 = vrot.lane.b32.xlu0 %v605, 32
      %v686 = vpop.permute.xlu0 %685
      %687 = vrot.lane.b32.xlu0 %v606, 32
      %v688 = vpop.permute.xlu0 %687
      %v691 = vmul.f32 %v678, %v686
      %v692 = vmul.f32 %v680, %v688
      %695 = vrot.lane.b32.xlu0 %v681, 64
      %v696 = vpop.permute.xlu0 %695
      %697 = vrot.lane.b32.xlu0 %v682, 64
      %v698 = vpop.permute.xlu0 %697
      %v701 = vmul.f32 %v678, %v696
      %v702 = vmul.f32 %v680, %v698
      %705 = vrot.lane.b32.xlu0 %v701, 32
      %v706 = vpop.permute.xlu0 %705
      %707 = vrot.lane.b32.xlu0 %v702, 32
      %v708 = vpop.permute.xlu0 %707
      %v711 = vadd.f32 %v691, %v706
      %v712 = vadd.f32 %v692, %v708
      %v713 = vtanh.pop %v711
      %v714 = vtanh.pop %v712
      %717 = vrot.lane.b32.xlu0 %v713, 64
      %v718 = vpop.permute.xlu0 %717
      %719 = vrot.lane.b32.xlu0 %v714, 64
      %v720 = vpop.permute.xlu0 %719
      %v723 = vmul.f32 %v678, %v718
      %v724 = vmul.f32 %v680, %v720
      %v725 = vpack.c.bf16 %v724, %v723
      %v727 = vunpack.c.l.b16 %v725
      %v728 = vunpack.c.h.b16 %v725
      %v729 = vpack.c.b16 %v727, %v727
      %v730 = vpack.c.b16 %v728, %v728
      %731 = vrot.lane.b32.xlu0 %v729, 32
      %v732 = vpop.permute.xlu0 %731
      %733 = vrot.lane.b32.xlu0 %v730, 32
      %v734 = vpop.permute.xlu0 %733
      %vm737 = vcmask 257024
      %738 = vst.msk [vmem:[%s363] sm:$0xf] %vm737, %v732
      %739 = vst.msk [vmem:[%s363 + $0x4] sm:$0xf] %vm737, %v734
      %s740 = scalar_lea.vmem [#allocation2], 16
      %v741 = vld [vmem:[%s740] sm:$0xff]
      %v742 = vld [vmem:[%s740 + $0x8] sm:$0xff]
      %743 = vrot.lane.b32.xlu0 %v725, 32
      %v744 = vpop.permute.xlu0 %743
      %v746 = vsel %vm622, %v744, 0
      %748 = vmatprep.subr.bf16.mxu0 0
      %749 = vmatpush1.bf16.msra.mxu0 %v618
      %750 = vmatprep.subr.bf16.mxu0 0
      %751 = vmatpush1.bf16.msra.mxu0 %v619
      %752 = vmatprep.subr.bf16.mxu0 0
      %753 = vmatpush1.bf16.msra.mxu0 0
      %754 = vmatprep.subr.bf16.mxu0 0
      %755 = vmatpush1.bf16.msra.mxu0 0
      %756 = vmatprep.subr.bf16.mxu0 0
      %757 = vmatpush1.bf16.msra.mxu0 0
      %758 = vmatprep.subr.bf16.mxu0 0
      %759 = vmatpush1.bf16.msra.mxu0 0
      %760 = vmatprep.subr.bf16.mxu0 0
      %761 = vmatpush1.bf16.msra.mxu0 0
      %762 = vmatprep.subr.bf16.mxu0 0
      %763 = vmatpush1.bf16.msra.mxu0 0
      %764 = vmatprep.subr.bf16.mxu0 0
      %765 = vmatpush1.bf16.msra.mxu0 0
      %766 = vmatprep.subr.bf16.mxu0 0
      %767 = vmatpush1.bf16.msra.mxu0 0
      %768 = vmatprep.subr.bf16.mxu0 0
      %769 = vmatpush1.bf16.msra.mxu0 0
      %770 = vmatprep.subr.bf16.mxu0 0
      %771 = vmatpush1.bf16.msra.mxu0 0
      %772 = vmatprep.subr.bf16.mxu0 0
      %773 = vmatpush1.bf16.msra.mxu0 0
      %774 = vmatprep.subr.bf16.mxu0 0
      %775 = vmatpush1.bf16.msra.mxu0 0
      %776 = vmatprep.subr.bf16.mxu0 0
      %777 = vmatpush1.bf16.msra.mxu0 0
      %778 = vmatprep.subr.bf16.mxu0 0
      %779 = vmatpush1.bf16.msra.mxu0 0
      %780 = vmatprep.mubr.bf16.mxu0 0
      %781 = vmatmul.mubr.bf16.gmra.mrb[0].mxu0 %v746
      %v782 = vpop.f32.mrb[0].mxu0
      %v783 = vadd.f32 0.0, %v782
      %v784 = vpop.f32.mrb[0].mxu0
      %v785 = vpop.f32.mrb[0].mxu0
      %v786 = vadd.f32 0.0, %v785
      %v787 = vpop.f32.mrb[0].mxu0
      %788 = vdwg.mxu0
      %v789 = vadd.f32 %v741, %v783
      %v790 = vadd.f32 %v742, %v786
      %v791 = vxor.u32 %v789, 2147483648
      %v792 = vxor.u32 %v790, 2147483648
      %v793 = vmul.f32 %v791, 1.442695
      %v794 = vpow.pop %v793
      %v795 = vmul.f32 %v792, 1.442695
      %v796 = vpow.pop %v795
      %v797 = vadd.f32 %v794, 1.0
      %v798 = vadd.f32 %v796, 1.0
      %v799 = vrcp.pop %v797
      %v800 = vmul.f32 1.0, %v799
      %v801 = vrcp.pop %v798
      %v802 = vmul.f32 1.0, %v801
      %v803 = vtanh.pop %v789
      %v804 = vtanh.pop %v790
      %v805 = vmul.f32 %v800, %v711
      %v806 = vmul.f32 %v802, %v712
      %809 = vrot.lane.b32.xlu0 %v803, 64
      %v810 = vpop.permute.xlu0 %809
      %811 = vrot.lane.b32.xlu0 %v804, 64
      %v812 = vpop.permute.xlu0 %811
      %v815 = vmul.f32 %v800, %v810
      %v816 = vmul.f32 %v802, %v812
      %819 = vrot.lane.b32.xlu0 %v815, 32
      %v820 = vpop.permute.xlu0 %819
      %821 = vrot.lane.b32.xlu0 %v816, 32
      %v822 = vpop.permute.xlu0 %821
      %v825 = vadd.f32 %v805, %v820
      %v826 = vadd.f32 %v806, %v822
      %v827 = vtanh.pop %v825
      %v828 = vtanh.pop %v826
      %831 = vrot.lane.b32.xlu0 %v827, 64
      %v832 = vpop.permute.xlu0 %831
      %833 = vrot.lane.b32.xlu0 %v828, 64
      %v834 = vpop.permute.xlu0 %833
      %v837 = vmul.f32 %v800, %v832
      %v838 = vmul.f32 %v802, %v834
      %v839 = vpack.c.bf16 %v838, %v837
      %v841 = vunpack.c.l.b16 %v839
      %v842 = vunpack.c.h.b16 %v839
      %v843 = vpack.c.b16 %v841, %v841
      %v844 = vpack.c.b16 %v842, %v842
      %845 = vrot.lane.b32.xlu0 %v843, 32
      %v846 = vpop.permute.xlu0 %845
      %847 = vrot.lane.b32.xlu0 %v844, 32
      %v848 = vpop.permute.xlu0 %847
      %s851 = scalar_lea.vmem %s363, 8
      %852 = vst.msk [vmem:[%s851] sm:$0xf] %vm737, %v846
      %853 = vst.msk [vmem:[%s851 + $0x4] sm:$0xf] %vm737, %v848
      %856 = vrot.lane.b32.xlu0 %v837, 32
      %v857 = vpop.permute.xlu0 %856
      %858 = vrot.lane.b32.xlu0 %v838, 32
      %v859 = vpop.permute.xlu0 %858
      %862 = vst.msk [vmem:[#allocation4] sm:$0xff] %vm622, %v857
      %863 = vst.msk [vmem:[#allocation4 + $0x8] sm:$0xff] %vm622, %v859
      %866 = vrot.lane.b32.xlu0 %v825, 96
      %v867 = vpop.permute.xlu0 %866
      %868 = vrot.lane.b32.xlu0 %v826, 96
      %v869 = vpop.permute.xlu0 %868
      %872 = vst.msk [vmem:[#allocation5] sm:$0xff] %vm622, %v867
      %873 = vst.msk [vmem:[#allocation5 + $0x8] sm:$0xff] %vm622, %v869
      %s874 = smul.u32 2, %s21
      %p875 = scmp.lt.s32.totalorder %s874, 7
      %s876 = scalar_select %p875, %s874, 7
      %s877 = smul.addr %s876, 2
      %s878 = smul.addr %s877, 4
      %s879 = scalar_lea.vmem %s10, %s878
      // Predicated region
      $region65: #{vae_forward.4} parent=59 // pred_check
        %p880 = pneg %p254
      $region66: #{vae_forward.4} parent=59 // pred_check_branch
        %882 = sbr.rel (%p880) target = $region68
      $region67: #{vae_forward.4} parent=59 // pred_region
        %s883 = smul.u32 2, %s21
      $region68: #{vae_forward.4} parent=59 // pred_fallthru
        _
    $region60: #{vae_forward.4} parent=5 // pred_fallthru
      _
    %p884 = scmp.le.s32.totalorder 2, %s16
    // Predicated region
    $region69: #{vae_forward.4} parent=5 // pred_check
      %p885 = pneg %p884
    $region70: #{vae_forward.4} parent=5 // pred_check_branch
      %887 = sbr.rel (%p885) target = $region72
    $region71: #{vae_forward.4} parent=5 // pred_region
      %s888 = ssub.s32 %s16, 2
      // Predicated region
      $region73: #{vae_forward.4} parent=71 // pred_check
        %p889 = pneg %p260
      $region74: #{vae_forward.4} parent=71 // pred_check_branch
        %891 = sbr.rel (%p889) target = $region76
      $region75: #{vae_forward.4} parent=71 // pred_region
        %s892 = smul.u32 2, %s22
        %p893 = scmp.lt.s32.totalorder %s892, 7
        %s894 = scalar_select %p893, %s892, 7
        %s895 = smul.addr %s894, 2
        %s896 = smul.addr %s895, 4
        %s897 = scalar_lea.vmem %s10, %s896
      $region76: #{vae_forward.4} parent=71 // pred_fallthru
        _
    $region72: #{vae_forward.4} parent=5 // pred_fallthru
      _
  $region6: #{vae_forward.4} parent=0 // loop_footer
    %s20 = sadd.s32 1, %s16
  $region7: #{vae_forward.4} parent=0 // loop_footer_branch
    %15 = sbr.rel target = $region3
  $region8: #{vae_forward.4} parent=0 // loop_exit
    _

// kernel: vae_forward.3
$region0: #{vae_forward.3}
  #allocation0 [shape = 'u32[]', space=smem, size = 0x4, offset = 0x4, fixed_abs, tag = 'smem constant byte address 0x4 - core index']
  #allocation1 [shape = 'u32[144,128]{1,0:T(1,128)}', space=vmem, size = 0x12000, scoped, tag = 'internal scratch']
  #allocation2 [shape = 'f32[32,128]{1,0:T(8,128)}', space=vmem, size = 0x4000, scoped, tag = 'scratch operand']
  #allocation3 [shape = 'f32[32,128]{1,0:T(8,128)}', space=vmem, size = 0x4000, scoped, tag = 'scratch operand']
  #allocation4 [shape = 'f32[16,32]{1,0:T(8,128)}', space=vmem, size = 0x2000, scoped, tag = 'scratch operand']
  #allocation5 [shape = 'f32[16,32]{1,0:T(8,128)}', space=vmem, size = 0x2000, scoped, tag = 'scratch operand']
  #allocation6 [shape = 'f32[16,32]{1,0:T(8,128)}', space=vmem, size = 0x2000, scoped, tag = 'scratch operand']
  #allocation7 [shape = 'f32[16,32]{1,0:T(8,128)}', space=vmem, size = 0x2000, scoped, tag = 'scratch operand']
  %s0 = inlined_call_operand.vmem [shape: bf16[128,16], index: 0, kind: input, shape index: {}, may-alias: {0,1}]
  %s1 = inlined_call_operand.vmem [shape: bf16[128,16], index: 1, kind: input, shape index: {}, may-alias: {0,1}]
  %s2 = inlined_call_operand.vmem [shape: bf16[16,128], index: 2, kind: input, shape index: {}]
  %s3 = inlined_call_operand.vmem [shape: bf16[32,128], index: 3, kind: input, shape index: {}]
  %s4 = inlined_call_operand.vmem [shape: f32[1,128], index: 4, kind: input, shape index: {}]
  %s5 = inlined_call_operand.vmem [shape: bf16[16,128], index: 5, kind: input, shape index: {}]
  %s6 = inlined_call_operand.vmem [shape: bf16[32,128], index: 6, kind: input, shape index: {}]
  %s7 = inlined_call_operand.vmem [shape: f32[1,128], index: 7, kind: input, shape index: {}]
  %s8 = inlined_call_operand.vmem [shape: bf16[64,16], index: 8, kind: input, shape index: {}]
  %s9 = inlined_call_operand.vmem [shape: f32[1,16], index: 9, kind: input, shape index: {}]
  %s10 = inlined_call_operand.vmem [shape: f32[16,8], index: 10, kind: output, shape index: {0}]
  %s11 = inlined_call_operand.vmem [shape: f32[16,8], index: 11, kind: output, shape index: {1}]
  %12 = xla_tuple %s10, %s11
  %s13 = sld [smem:[#allocation0]]
  $region89: #{vae_forward.3} parent=0
    _
  %s15 = ssub.s32 1, %s13
  %s16 = scalar_select 0, %s15, %s13
  loop: start=0, step=1, limit=6
  $region2: #{vae_forward.3} parent=0 // loop_pre_header
    _
  $region3: #{vae_forward.3} parent=0 // loop_header
    %s18 = sphi 0, %s22
    %p19 = scmp.ge.s32.totalorder %s18, 6
    %s28 = sphi 0, %s30
    %s31 = sphi 0, %s28
    %s32 = sphi 0, %s31
    %s48 = sphi 0, %s32
    %s56 = sphi 0, %s58
    %s59 = sphi 0, %s56
    %s60 = sphi 0, %s59
    %s76 = sphi 0, %s60
    %s80 = sphi 0, %s80
    %s82 = sphi 0, %s80
    %s83 = sphi 0, %s82
    %s97 = sphi 0, %s83
    %s101 = sphi 0, %s101
    %s103 = sphi 0, %s101
    %s104 = sphi 0, %s103
    %s118 = sphi 0, %s104
    %s122 = sphi 0, %s122
    %s124 = sphi 0, %s122
    %s125 = sphi 0, %s124
    %s139 = sphi 0, %s125
    %s143 = sphi 0, %s143
    %s145 = sphi 0, %s143
    %s146 = sphi 0, %s145
    %s160 = sphi 0, %s146
    %s164 = sphi 0, %s164
    %s166 = sphi 0, %s164
    %s167 = sphi 0, %s166
    %s181 = sphi 0, %s167
    %s185 = sphi 0, %s185
    %s187 = sphi 0, %s185
    %s188 = sphi 0, %s187
    %s202 = sphi 0, %s188
    %s206 = sphi 0, %s206
    %s208 = sphi 0, %s206
    %s209 = sphi 0, %s208
    %s223 = sphi 0, %s209
    %s227 = sphi 0, %s227
    %s229 = sphi 0, %s227
    %s230 = sphi 0, %s229
    %s244 = sphi 0, %s230
    %s248 = sphi 0, %s248
    %s250 = sphi 0, %s248
    %s251 = sphi 0, %s250
    %s265 = sphi 0, %s251
    %s269 = sphi 0, %s269
    %s271 = sphi 0, %s269
    %s272 = sphi 0, %s271
    %s286 = sphi 0, %s272
  $region4: #{vae_forward.3} parent=0 // loop_header_branch
    %21 = sbr.rel (%p19) target = $region8
  $region5: #{vae_forward.3} parent=0 // loop_body
    %s23 = ssub.s32 %s18, 1
    %s24 = ssub.s32 %s18, 2
    %s25 = sadd.s32 %s18, 1
    %s26 = ssub.s32 %s18, %s25
    %p27 = scmp.eq.s32.totalorder %s26, 0
    %s29 = sadd.s32 %s28, 1
    %s30 = scalar_select %p27, %s28, %s29
    %p33 = pneg %p27
    %p34 = scmp.eq.s32.totalorder %s18, 3
    %p35 = por %p33, %p34
    %p36 = scmp.ne.s32.totalorder %s28, %s31
    %p37 = scmp.eq.s32.totalorder %s18, 0
    %p38 = por %p36, %p37
    %p39 = scmp.ne.s32.totalorder %s28, %s31
    %p40 = scmp.eq.s32.totalorder %s23, 3
    %p41 = por %p39, %p40
    %p42 = scmp.ne.s32.totalorder %s31, %s32
    %p43 = scmp.eq.s32.totalorder %s23, 0
    %p44 = por %p42, %p43
    %p45 = scmp.ne.s32.totalorder %s31, %s32
    %p46 = scmp.eq.s32.totalorder %s24, 3
    %p47 = por %p45, %p46
    %p49 = scmp.ne.s32.totalorder %s32, %s48
    %p50 = scmp.eq.s32.totalorder %s24, 0
    %p51 = por %p49, %p50
    %s52 = ssub.s32 3, %s18
    %s53 = ssub.s32 3, %s25
    %s54 = ssub.s32 %s52, %s53
    %p55 = scmp.eq.s32.totalorder %s54, 0
    %s57 = sadd.s32 %s56, 1
    %s58 = scalar_select %p55, %s56, %s57
    %p61 = pneg %p55
    %p62 = scmp.eq.s32.totalorder %s18, 3
    %p63 = por %p61, %p62
    %p64 = scmp.ne.s32.totalorder %s56, %s59
    %p65 = scmp.eq.s32.totalorder %s18, 0
    %p66 = por %p64, %p65
    %p67 = scmp.ne.s32.totalorder %s56, %s59
    %p68 = scmp.eq.s32.totalorder %s23, 3
    %p69 = por %p67, %p68
    %p70 = scmp.ne.s32.totalorder %s59, %s60
    %p71 = scmp.eq.s32.totalorder %s23, 0
    %p72 = por %p70, %p71
    %p73 = scmp.ne.s32.totalorder %s59, %s60
    %p74 = scmp.eq.s32.totalorder %s24, 3
    %p75 = por %p73, %p74
    %p77 = scmp.ne.s32.totalorder %s60, %s76
    %p78 = scmp.eq.s32.totalorder %s24, 0
    %p79 = por %p77, %p78
    %s81 = sadd.s32 %s80, 1
    %p84 = scmp.eq.s32.totalorder %s18, 3
    %p85 = scmp.ne.s32.totalorder %s80, %s82
    %p86 = scmp.eq.s32.totalorder %s18, 0
    %p87 = por %p85, %p86
    %p88 = scmp.ne.s32.totalorder %s80, %s82
    %p89 = scmp.eq.s32.totalorder %s23, 3
    %p90 = por %p88, %p89
    %p91 = scmp.ne.s32.totalorder %s82, %s83
    %p92 = scmp.eq.s32.totalorder %s23, 0
    %p93 = por %p91, %p92
    %p94 = scmp.ne.s32.totalorder %s82, %s83
    %p95 = scmp.eq.s32.totalorder %s24, 3
    %p96 = por %p94, %p95
    %p98 = scmp.ne.s32.totalorder %s83, %s97
    %p99 = scmp.eq.s32.totalorder %s24, 0
    %p100 = por %p98, %p99
    %s102 = sadd.s32 %s101, 1
    %p105 = scmp.eq.s32.totalorder %s18, 3
    %p106 = scmp.ne.s32.totalorder %s101, %s103
    %p107 = scmp.eq.s32.totalorder %s18, 0
    %p108 = por %p106, %p107
    %p109 = scmp.ne.s32.totalorder %s101, %s103
    %p110 = scmp.eq.s32.totalorder %s23, 3
    %p111 = por %p109, %p110
    %p112 = scmp.ne.s32.totalorder %s103, %s104
    %p113 = scmp.eq.s32.totalorder %s23, 0
    %p114 = por %p112, %p113
    %p115 = scmp.ne.s32.totalorder %s103, %s104
    %p116 = scmp.eq.s32.totalorder %s24, 3
    %p117 = por %p115, %p116
    %p119 = scmp.ne.s32.totalorder %s104, %s118
    %p120 = scmp.eq.s32.totalorder %s24, 0
    %p121 = por %p119, %p120
    %s123 = sadd.s32 %s122, 1
    %p126 = scmp.eq.s32.totalorder %s18, 3
    %p127 = scmp.ne.s32.totalorder %s122, %s124
    %p128 = scmp.eq.s32.totalorder %s18, 0
    %p129 = por %p127, %p128
    %p130 = scmp.ne.s32.totalorder %s122, %s124
    %p131 = scmp.eq.s32.totalorder %s23, 3
    %p132 = por %p130, %p131
    %p133 = scmp.ne.s32.totalorder %s124, %s125
    %p134 = scmp.eq.s32.totalorder %s23, 0
    %p135 = por %p133, %p134
    %p136 = scmp.ne.s32.totalorder %s124, %s125
    %p137 = scmp.eq.s32.totalorder %s24, 3
    %p138 = por %p136, %p137
    %p140 = scmp.ne.s32.totalorder %s125, %s139
    %p141 = scmp.eq.s32.totalorder %s24, 0
    %p142 = por %p140, %p141
    %s144 = sadd.s32 %s143, 1
    %p147 = scmp.eq.s32.totalorder %s18, 3
    %p148 = scmp.ne.s32.totalorder %s143, %s145
    %p149 = scmp.eq.s32.totalorder %s18, 0
    %p150 = por %p148, %p149
    %p151 = scmp.ne.s32.totalorder %s143, %s145
    %p152 = scmp.eq.s32.totalorder %s23, 3
    %p153 = por %p151, %p152
    %p154 = scmp.ne.s32.totalorder %s145, %s146
    %p155 = scmp.eq.s32.totalorder %s23, 0
    %p156 = por %p154, %p155
    %p157 = scmp.ne.s32.totalorder %s145, %s146
    %p158 = scmp.eq.s32.totalorder %s24, 3
    %p159 = por %p157, %p158
    %p161 = scmp.ne.s32.totalorder %s146, %s160
    %p162 = scmp.eq.s32.totalorder %s24, 0
    %p163 = por %p161, %p162
    %s165 = sadd.s32 %s164, 1
    %p168 = scmp.eq.s32.totalorder %s18, 3
    %p169 = scmp.ne.s32.totalorder %s164, %s166
    %p170 = scmp.eq.s32.totalorder %s18, 0
    %p171 = por %p169, %p170
    %p172 = scmp.ne.s32.totalorder %s164, %s166
    %p173 = scmp.eq.s32.totalorder %s23, 3
    %p174 = por %p172, %p173
    %p175 = scmp.ne.s32.totalorder %s166, %s167
    %p176 = scmp.eq.s32.totalorder %s23, 0
    %p177 = por %p175, %p176
    %p178 = scmp.ne.s32.totalorder %s166, %s167
    %p179 = scmp.eq.s32.totalorder %s24, 3
    %p180 = por %p178, %p179
    %p182 = scmp.ne.s32.totalorder %s167, %s181
    %p183 = scmp.eq.s32.totalorder %s24, 0
    %p184 = por %p182, %p183
    %s186 = sadd.s32 %s185, 1
    %p189 = scmp.eq.s32.totalorder %s18, 3
    %p190 = scmp.ne.s32.totalorder %s185, %s187
    %p191 = scmp.eq.s32.totalorder %s18, 0
    %p192 = por %p190, %p191
    %p193 = scmp.ne.s32.totalorder %s185, %s187
    %p194 = scmp.eq.s32.totalorder %s23, 3
    %p195 = por %p193, %p194
    %p196 = scmp.ne.s32.totalorder %s187, %s188
    %p197 = scmp.eq.s32.totalorder %s23, 0
    %p198 = por %p196, %p197
    %p199 = scmp.ne.s32.totalorder %s187, %s188
    %p200 = scmp.eq.s32.totalorder %s24, 3
    %p201 = por %p199, %p200
    %p203 = scmp.ne.s32.totalorder %s188, %s202
    %p204 = scmp.eq.s32.totalorder %s24, 0
    %p205 = por %p203, %p204
    %s207 = sadd.s32 %s206, 1
    %p210 = scmp.eq.s32.totalorder %s18, 3
    %p211 = scmp.ne.s32.totalorder %s206, %s208
    %p212 = scmp.eq.s32.totalorder %s18, 0
    %p213 = por %p211, %p212
    %p214 = scmp.ne.s32.totalorder %s206, %s208
    %p215 = scmp.eq.s32.totalorder %s23, 3
    %p216 = por %p214, %p215
    %p217 = scmp.ne.s32.totalorder %s208, %s209
    %p218 = scmp.eq.s32.totalorder %s23, 0
    %p219 = por %p217, %p218
    %p220 = scmp.ne.s32.totalorder %s208, %s209
    %p221 = scmp.eq.s32.totalorder %s24, 3
    %p222 = por %p220, %p221
    %p224 = scmp.ne.s32.totalorder %s209, %s223
    %p225 = scmp.eq.s32.totalorder %s24, 0
    %p226 = por %p224, %p225
    %s228 = sadd.s32 %s227, 1
    %p231 = scmp.eq.s32.totalorder %s18, 3
    %p232 = scmp.ne.s32.totalorder %s227, %s229
    %p233 = scmp.eq.s32.totalorder %s18, 0
    %p234 = por %p232, %p233
    %p235 = scmp.ne.s32.totalorder %s227, %s229
    %p236 = scmp.eq.s32.totalorder %s23, 3
    %p237 = por %p235, %p236
    %p238 = scmp.ne.s32.totalorder %s229, %s230
    %p239 = scmp.eq.s32.totalorder %s23, 0
    %p240 = por %p238, %p239
    %p241 = scmp.ne.s32.totalorder %s229, %s230
    %p242 = scmp.eq.s32.totalorder %s24, 3
    %p243 = por %p241, %p242
    %p245 = scmp.ne.s32.totalorder %s230, %s244
    %p246 = scmp.eq.s32.totalorder %s24, 0
    %p247 = por %p245, %p246
    %s249 = sadd.s32 %s248, 1
    %p252 = scmp.eq.s32.totalorder %s18, 3
    %p253 = scmp.ne.s32.totalorder %s248, %s250
    %p254 = scmp.eq.s32.totalorder %s18, 0
    %p255 = por %p253, %p254
    %p256 = scmp.ne.s32.totalorder %s248, %s250
    %p257 = scmp.eq.s32.totalorder %s23, 3
    %p258 = por %p256, %p257
    %p259 = scmp.ne.s32.totalorder %s250, %s251
    %p260 = scmp.eq.s32.totalorder %s23, 0
    %p261 = por %p259, %p260
    %p262 = scmp.ne.s32.totalorder %s250, %s251
    %p263 = scmp.eq.s32.totalorder %s24, 3
    %p264 = por %p262, %p263
    %p266 = scmp.ne.s32.totalorder %s251, %s265
    %p267 = scmp.eq.s32.totalorder %s24, 0
    %p268 = por %p266, %p267
    %s270 = sadd.s32 %s269, 1
    %p273 = scmp.eq.s32.totalorder %s18, 3
    %p274 = scmp.ne.s32.totalorder %s269, %s271
    %p275 = scmp.eq.s32.totalorder %s18, 0
    %p276 = por %p274, %p275
    %p277 = scmp.ne.s32.totalorder %s269, %s271
    %p278 = scmp.eq.s32.totalorder %s23, 3
    %p279 = por %p277, %p278
    %p280 = scmp.ne.s32.totalorder %s271, %s272
    %p281 = scmp.eq.s32.totalorder %s23, 0
    %p282 = por %p280, %p281
    %p283 = scmp.ne.s32.totalorder %s271, %s272
    %p284 = scmp.eq.s32.totalorder %s24, 3
    %p285 = por %p283, %p284
    %p287 = scmp.ne.s32.totalorder %s272, %s286
    %p288 = scmp.eq.s32.totalorder %s24, 0
    %p289 = por %p287, %p288
    %p290 = scmp.le.s32.totalorder 1, %s18
    %p291 = scmp.lt.s32.totalorder %s18, 5
    %p292 = pnand %p290, %p291
    %p293 = pneg %p292
    // Predicated region
    $region9: #{vae_forward.3} parent=5 // pred_check
      _
    $region10: #{vae_forward.3} parent=5 // pred_check_branch
      %295 = sbr.rel (%p292) target = $region12
    $region11: #{vae_forward.3} parent=5 // pred_region
      %s296 = ssub.s32 %s18, 1
      // Predicated region
      $region13: #{vae_forward.3} parent=11 // pred_check
        %p297 = pneg %p93
      $region14: #{vae_forward.3} parent=11 // pred_check_branch
        %299 = sbr.rel (%p297) target = $region16
      $region15: #{vae_forward.3} parent=11 // pred_region
        _
      $region16: #{vae_forward.3} parent=11 // pred_fallthru
        _
      // Predicated region
      $region17: #{vae_forward.3} parent=11 // pred_check
        %p300 = pneg %p114
      $region18: #{vae_forward.3} parent=11 // pred_check_branch
        %302 = sbr.rel (%p300) target = $region20
      $region19: #{vae_forward.3} parent=11 // pred_region
        _
      $region20: #{vae_forward.3} parent=11 // pred_fallthru
        _
      // Predicated region
      $region21: #{vae_forward.3} parent=11 // pred_check
        %p303 = pneg %p135
      $region22: #{vae_forward.3} parent=11 // pred_check_branch
        %305 = sbr.rel (%p303) target = $region24
      $region23: #{vae_forward.3} parent=11 // pred_region
        _
      $region24: #{vae_forward.3} parent=11 // pred_fallthru
        _
      // Predicated region
      $region25: #{vae_forward.3} parent=11 // pred_check
        %p306 = pneg %p156
      $region26: #{vae_forward.3} parent=11 // pred_check_branch
        %308 = sbr.rel (%p306) target = $region28
      $region27: #{vae_forward.3} parent=11 // pred_region
        _
      $region28: #{vae_forward.3} parent=11 // pred_fallthru
        _
      // Predicated region
      $region29: #{vae_forward.3} parent=11 // pred_check
        %p309 = pneg %p177
      $region30: #{vae_forward.3} parent=11 // pred_check_branch
        %311 = sbr.rel (%p309) target = $region32
      $region31: #{vae_forward.3} parent=11 // pred_region
        _
      $region32: #{vae_forward.3} parent=11 // pred_fallthru
        _
      // Predicated region
      $region33: #{vae_forward.3} parent=11 // pred_check
        %p312 = pneg %p198
      $region34: #{vae_forward.3} parent=11 // pred_check_branch
        %314 = sbr.rel (%p312) target = $region36
      $region35: #{vae_forward.3} parent=11 // pred_region
        _
      $region36: #{vae_forward.3} parent=11 // pred_fallthru
        _
      // Predicated region
      $region37: #{vae_forward.3} parent=11 // pred_check
        %p315 = pneg %p219
      $region38: #{vae_forward.3} parent=11 // pred_check_branch
        %317 = sbr.rel (%p315) target = $region40
      $region39: #{vae_forward.3} parent=11 // pred_region
        _
      $region40: #{vae_forward.3} parent=11 // pred_fallthru
        _
      // Predicated region
      $region41: #{vae_forward.3} parent=11 // pred_check
        %p318 = pneg %p240
      $region42: #{vae_forward.3} parent=11 // pred_check_branch
        %320 = sbr.rel (%p318) target = $region44
      $region43: #{vae_forward.3} parent=11 // pred_region
        _
      $region44: #{vae_forward.3} parent=11 // pred_fallthru
        _
    $region12: #{vae_forward.3} parent=5 // pred_fallthru
      _
    %p321 = scmp.lt.s32.totalorder %s18, 4
    // Predicated region
    $region45: #{vae_forward.3} parent=5 // pred_check
      %p322 = pneg %p321
    $region46: #{vae_forward.3} parent=5 // pred_check_branch
      %324 = sbr.rel (%p322) target = $region48
    $region47: #{vae_forward.3} parent=5 // pred_region
      // Predicated region
      $region49: #{vae_forward.3} parent=47 // pred_check
        %p325 = pneg %p38
      $region50: #{vae_forward.3} parent=47 // pred_check_branch
        %327 = sbr.rel (%p325) target = $region52
      $region51: #{vae_forward.3} parent=47 // pred_region
        %s328 = smul.u32 4, %s18
        %p329 = scmp.lt.s32.totalorder %s328, 15
        %s330 = scalar_select %p329, %s328, 15
        %s331 = smul.addr %s330, 4
        %s332 = scalar_lea.vmem %s0, %s331
        %s333 = smul.u32 4, %s18
      $region52: #{vae_forward.3} parent=47 // pred_fallthru
        _
      // Predicated region
      $region53: #{vae_forward.3} parent=47 // pred_check
        %p334 = pneg %p66
      $region54: #{vae_forward.3} parent=47 // pred_check_branch
        %336 = sbr.rel (%p334) target = $region56
      $region55: #{vae_forward.3} parent=47 // pred_region
        %s337 = ssub.s32 3, %s18
        %s338 = smul.u32 4, %s337
        %p339 = scmp.lt.s32.totalorder %s338, 15
        %s340 = scalar_select %p339, %s338, 15
        %s341 = smul.addr %s340, 4
        %s342 = scalar_lea.vmem %s1, %s341
        %s343 = ssub.s32 3, %s18
        %s344 = smul.u32 4, %s343
      $region56: #{vae_forward.3} parent=47 // pred_fallthru
        _
    $region48: #{vae_forward.3} parent=5 // pred_fallthru
      _
    %p345 = scmp.le.s32.totalorder 1, %s18
    %p346 = scmp.lt.s32.totalorder %s18, 5
    %p347 = pnand %p345, %p346
    %p348 = pneg %p347
    // Predicated region
    $region57: #{vae_forward.3} parent=5 // pred_check
      _
    $region58: #{vae_forward.3} parent=5 // pred_check_branch
      %350 = sbr.rel (%p347) target = $region60
    $region59: #{vae_forward.3} parent=5 // pred_region
      %s351 = ssub.s32 %s18, 1
      %s352 = smul.u32 4, %s23
      %p353 = scmp.lt.s32.totalorder %s352, 15
      %s354 = scalar_select %p353, %s352, 15
      %s355 = smul.addr %s354, 4
      %s356 = scalar_lea.vmem %s0, %s355
      %p357 = pneg %p44
      %p358 = pneg %p41
      %s359 = ssub.s32 3, %s23
      %s360 = smul.u32 4, %s359
      %p361 = scmp.lt.s32.totalorder %s360, 15
      %s362 = scalar_select %p361, %s360, 15
      %s363 = smul.addr %s362, 4
      %s364 = scalar_lea.vmem %s1, %s363
      %p365 = pneg %p72
      %p366 = pneg %p69
      %p367 = pneg %p93
      %p368 = pneg %p90
      %p369 = pneg %p114
      %p370 = pneg %p111
      %p371 = pneg %p135
      %p372 = pneg %p132
      %p373 = pneg %p156
      %p374 = pneg %p153
      %p375 = pneg %p177
      %p376 = pneg %p174
      %p377 = pneg %p198
      %p378 = pneg %p195
      %p379 = pneg %p219
      %p380 = pneg %p216
      %p381 = pneg %p240
      %p382 = pneg %p237
      %p383 = pneg %p261
      %p384 = pneg %p258
      %p385 = pneg %p282
      %p386 = pneg %p279
      %s387 = smul.u32 4, %s23
      %p388 = scmp.lt.s32.totalorder %s387, 15
      %s389 = scalar_select %p388, %s387, 15
      %s390 = smul.addr %s389, 4
      %s391 = scalar_lea.vmem %s0, %s390
      %s392 = smul.u32 4, %s23
      %s393 = ssub.s32 3, %s23
      %s394 = smul.u32 4, %s393
      %p395 = scmp.lt.s32.totalorder %s394, 15
      %s396 = scalar_select %p395, %s394, 15
      %s397 = smul.addr %s396, 4
      %s398 = scalar_lea.vmem %s1, %s397
      %s399 = ssub.s32 3, %s23
      %s400 = smul.u32 4, %s399
      %p402 = scmp.eq.s32.totalorder %s23, 0
      // Predicated region
      $region61: #{vae_forward.3} parent=59 // pred_check
        %p403 = pneg %p402
      $region62: #{vae_forward.3} parent=59 // pred_check_branch
        %405 = sbr.rel (%p403) target = $region64
      $region63: #{vae_forward.3} parent=59 // pred_region
        %vm406 = vcmask 261120
        %407 = vst.msk [vmem:[#allocation4] sm:$0xff] %vm406, 0.0
        %408 = vst.msk [vmem:[#allocation4 + $0x8] sm:$0xff] %vm406, 0.0
        %409 = vst.msk [vmem:[#allocation5] sm:$0xff] %vm406, 0.0
        %410 = vst.msk [vmem:[#allocation5 + $0x8] sm:$0xff] %vm406, 0.0
        %411 = vst.msk [vmem:[#allocation6] sm:$0xff] %vm406, 0.0
        %412 = vst.msk [vmem:[#allocation6 + $0x8] sm:$0xff] %vm406, 0.0
        %413 = vst.msk [vmem:[#allocation7] sm:$0xff] %vm406, 0.0
        %414 = vst.msk [vmem:[#allocation7 + $0x8] sm:$0xff] %vm406, 0.0
      $region64: #{vae_forward.3} parent=59 // pred_fallthru
        _
      %v415 = vld [vmem:[%s391] sm:$0xf]
      %v416 = vld [vmem:[%s391 + $0x4] sm:$0xf]
      %v417 = vld [vmem:[%s391 + $0x8] sm:$0xf]
      %v418 = vld [vmem:[%s391 + $0xc] sm:$0xf]
      %v419 = vld [vmem:[%s2] sm:$0xf]
      %v420 = vld [vmem:[%s2 + $0x4] sm:$0xf]
      %v421 = vld [vmem:[%s4] sm:$0x1]
      %v423 = vlaneseq
      %v424 = vshrl.u32 %v423, 7
      %v425 = vsub.s32 0, %v424
      %v426 = vrot.slane %v421, %v425
      %v432 = vunpack.c.l.b16 %v415
      %v433 = vunpack.c.l.b16 %v416
      %v434 = vunpack.c.l.b16 %v417
      %v435 = vunpack.c.l.b16 %v418
      %v436 = vpack.c.b16 %v433, %v432
      %v437 = vpack.c.b16 %v435, %v434
      %v440 = vunpack.c.l.b16 %v419
      %v441 = vunpack.c.l.b16 %v420
      %v442 = vpack.c.b16 %v441, %v440
      %vm444 = vcmask 130048
      %v446 = vsel %vm444, %v436, 0
      %v449 = vsel %vm444, %v437, 0
      %451 = vmatprep.subr.bf16.mxu0 0
      %452 = vmatpush1.bf16.msra.mxu0 %v442
      %453 = vmatprep.subr.bf16.mxu0 0
      %454 = vmatpush1.bf16.msra.mxu0 0
      %455 = vmatprep.subr.bf16.mxu0 0
      %456 = vmatpush1.bf16.msra.mxu0 0
      %457 = vmatprep.subr.bf16.mxu0 0
      %458 = vmatpush1.bf16.msra.mxu0 0
      %459 = vmatprep.subr.bf16.mxu0 0
      %460 = vmatpush1.bf16.msra.mxu0 0
      %461 = vmatprep.subr.bf16.mxu0 0
      %462 = vmatpush1.bf16.msra.mxu0 0
      %463 = vmatprep.subr.bf16.mxu0 0
      %464 = vmatpush1.bf16.msra.mxu0 0
      %465 = vmatprep.subr.bf16.mxu0 0
      %466 = vmatpush1.bf16.msra.mxu0 0
      %467 = vmatprep.subr.bf16.mxu0 0
      %468 = vmatpush1.bf16.msra.mxu0 0
      %469 = vmatprep.subr.bf16.mxu0 0
      %470 = vmatpush1.bf16.msra.mxu0 0
      %471 = vmatprep.subr.bf16.mxu0 0
      %472 = vmatpush1.bf16.msra.mxu0 0
      %473 = vmatprep.subr.bf16.mxu0 0
      %474 = vmatpush1.bf16.msra.mxu0 0
      %475 = vmatprep.subr.bf16.mxu0 0
      %476 = vmatpush1.bf16.msra.mxu0 0
      %477 = vmatprep.subr.bf16.mxu0 0
      %478 = vmatpush1.bf16.msra.mxu0 0
      %479 = vmatprep.subr.bf16.mxu0 0
      %480 = vmatpush1.bf16.msra.mxu0 0
      %481 = vmatprep.subr.bf16.mxu0 0
      %482 = vmatpush1.bf16.msra.mxu0 0
      %483 = vmatprep.mubr.bf16.mxu0 0
      %484 = vmatmul.mubr.bf16.gmra.mrb[0].mxu0 %v446
      %v485 = vpop.f32.mrb[0].mxu0
      %v486 = vadd.f32 %v426, %v485
      %v487 = vpop.f32.mrb[0].mxu0
      %v488 = vpop.f32.mrb[0].mxu0
      %v489 = vadd.f32 %v426, %v488
      %v490 = vpop.f32.mrb[0].mxu0
      %491 = vmatprep.mubr.bf16.mxu0 0
      %492 = vmatmul.mubr.bf16.gmra.mrb[0].mxu0 %v449
      %v493 = vpop.f32.mrb[0].mxu0
      %v494 = vadd.f32 %v426, %v493
      %v495 = vpop.f32.mrb[0].mxu0
      %v496 = vpop.f32.mrb[0].mxu0
      %v497 = vadd.f32 %v426, %v496
      %v498 = vpop.f32.mrb[0].mxu0
      %499 = vdwg.mxu0
      %500 = vst [vmem:[#allocation2] sm:$0xff] %v486
      %501 = vst [vmem:[#allocation2 + $0x8] sm:$0xff] %v489
      %502 = vst [vmem:[#allocation2 + $0x10] sm:$0xff] %v494
      %503 = vst [vmem:[#allocation2 + $0x18] sm:$0xff] %v497
      %v504 = vld [vmem:[%s398] sm:$0xf]
      %v505 = vld [vmem:[%s398 + $0x4] sm:$0xf]
      %v506 = vld [vmem:[%s398 + $0x8] sm:$0xf]
      %v507 = vld [vmem:[%s398 + $0xc] sm:$0xf]
      %v508 = vld [vmem:[%s5] sm:$0xf]
      %v509 = vld [vmem:[%s5 + $0x4] sm:$0xf]
      %v510 = vld [vmem:[%s7] sm:$0x1]
      %v512 = vlaneseq
      %v513 = vshrl.u32 %v512, 7
      %v514 = vsub.s32 0, %v513
      %v515 = vrot.slane %v510, %v514
      %v521 = vunpack.c.l.b16 %v504
      %v522 = vunpack.c.l.b16 %v505
      %v523 = vunpack.c.l.b16 %v506
      %v524 = vunpack.c.l.b16 %v507
      %v525 = vpack.c.b16 %v522, %v521
      %v526 = vpack.c.b16 %v524, %v523
      %v529 = vunpack.c.l.b16 %v508
      %v530 = vunpack.c.l.b16 %v509
      %v531 = vpack.c.b16 %v530, %v529
      %v534 = vsel %vm444, %v525, 0
      %v537 = vsel %vm444, %v526, 0
      %539 = vmatprep.subr.bf16.mxu0 0
      %540 = vmatpush1.bf16.msra.mxu0 %v531
      %541 = vmatprep.subr.bf16.mxu0 0
      %542 = vmatpush1.bf16.msra.mxu0 0
      %543 = vmatprep.subr.bf16.mxu0 0
      %544 = vmatpush1.bf16.msra.mxu0 0
      %545 = vmatprep.subr.bf16.mxu0 0
      %546 = vmatpush1.bf16.msra.mxu0 0
      %547 = vmatprep.subr.bf16.mxu0 0
      %548 = vmatpush1.bf16.msra.mxu0 0
      %549 = vmatprep.subr.bf16.mxu0 0
      %550 = vmatpush1.bf16.msra.mxu0 0
      %551 = vmatprep.subr.bf16.mxu0 0
      %552 = vmatpush1.bf16.msra.mxu0 0
      %553 = vmatprep.subr.bf16.mxu0 0
      %554 = vmatpush1.bf16.msra.mxu0 0
      %555 = vmatprep.subr.bf16.mxu0 0
      %556 = vmatpush1.bf16.msra.mxu0 0
      %557 = vmatprep.subr.bf16.mxu0 0
      %558 = vmatpush1.bf16.msra.mxu0 0
      %559 = vmatprep.subr.bf16.mxu0 0
      %560 = vmatpush1.bf16.msra.mxu0 0
      %561 = vmatprep.subr.bf16.mxu0 0
      %562 = vmatpush1.bf16.msra.mxu0 0
      %563 = vmatprep.subr.bf16.mxu0 0
      %564 = vmatpush1.bf16.msra.mxu0 0
      %565 = vmatprep.subr.bf16.mxu0 0
      %566 = vmatpush1.bf16.msra.mxu0 0
      %567 = vmatprep.subr.bf16.mxu0 0
      %568 = vmatpush1.bf16.msra.mxu0 0
      %569 = vmatprep.subr.bf16.mxu0 0
      %570 = vmatpush1.bf16.msra.mxu0 0
      %571 = vmatprep.mubr.bf16.mxu0 0
      %572 = vmatmul.mubr.bf16.gmra.mrb[0].mxu0 %v534
      %v573 = vpop.f32.mrb[0].mxu0
      %v574 = vadd.f32 %v515, %v573
      %v575 = vpop.f32.mrb[0].mxu0
      %v576 = vpop.f32.mrb[0].mxu0
      %v577 = vadd.f32 %v515, %v576
      %v578 = vpop.f32.mrb[0].mxu0
      %579 = vmatprep.mubr.bf16.mxu0 0
      %580 = vmatmul.mubr.bf16.gmra.mrb[0].mxu0 %v537
      %v581 = vpop.f32.mrb[0].mxu0
      %v582 = vadd.f32 %v515, %v581
      %v583 = vpop.f32.mrb[0].mxu0
      %v584 = vpop.f32.mrb[0].mxu0
      %v585 = vadd.f32 %v515, %v584
      %v586 = vpop.f32.mrb[0].mxu0
      %587 = vdwg.mxu0
      %588 = vst [vmem:[#allocation3] sm:$0xff] %v574
      %589 = vst [vmem:[#allocation3 + $0x8] sm:$0xff] %v577
      %590 = vst [vmem:[#allocation3 + $0x10] sm:$0xff] %v582
      %591 = vst [vmem:[#allocation3 + $0x18] sm:$0xff] %v585
      %v592 = vld [vmem:[%s3] sm:$0xf]
      %v593 = vld [vmem:[%s3 + $0x4] sm:$0xf]
      %v594 = vld [vmem:[%s3 + $0x8] sm:$0xf]
      %v595 = vld [vmem:[%s3 + $0xc] sm:$0xf]
      %v596 = vld [vmem:[%s6] sm:$0xf]
      %v597 = vld [vmem:[%s6 + $0x4] sm:$0xf]
      %v598 = vld [vmem:[%s6 + $0x8] sm:$0xf]
      %v599 = vld [vmem:[%s6 + $0xc] sm:$0xf]
      %v600 = vld [vmem:[#allocation4] sm:$0xff]
      %v601 = vld [vmem:[#allocation4 + $0x8] sm:$0xff]
      %v602 = vld [vmem:[#allocation5] sm:$0xff]
      %v603 = vld [vmem:[#allocation5 + $0x8] sm:$0xff]
      %v604 = vld [vmem:[#allocation6] sm:$0xff]
      %v605 = vld [vmem:[#allocation6 + $0x8] sm:$0xff]
      %v606 = vld [vmem:[#allocation7] sm:$0xff]
      %v607 = vld [vmem:[#allocation7 + $0x8] sm:$0xff]
      %v608 = vld [vmem:[#allocation2] sm:$0xff]
      %v609 = vld [vmem:[#allocation2 + $0x8] sm:$0xff]
      %v610 = vpack.c.bf16 %v601, %v600
      %v615 = vunpack.c.l.b16 %v592
      %v616 = vunpack.c.l.b16 %v593
      %v617 = vunpack.c.l.b16 %v594
      %v618 = vunpack.c.l.b16 %v595
      %v619 = vpack.c.b16 %v616, %v615
      %v620 = vpack.c.b16 %v618, %v617
      %vm623 = vcmask 261120
      %v625 = vsel %vm623, %v610, 0
      %627 = vmatprep.subr.bf16.mxu0 0
      %628 = vmatpush1.bf16.msra.mxu0 %v619
      %629 = vmatprep.subr.bf16.mxu0 0
      %630 = vmatpush1.bf16.msra.mxu0 %v620
      %631 = vmatprep.subr.bf16.mxu0 0
      %632 = vmatpush1.bf16.msra.mxu0 0
      %633 = vmatprep.subr.bf16.mxu0 0
      %634 = vmatpush1.bf16.msra.mxu0 0
      %635 = vmatprep.subr.bf16.mxu0 0
      %636 = vmatpush1.bf16.msra.mxu0 0
      %637 = vmatprep.subr.bf16.mxu0 0
      %638 = vmatpush1.bf16.msra.mxu0 0
      %639 = vmatprep.subr.bf16.mxu0 0
      %640 = vmatpush1.bf16.msra.mxu0 0
      %641 = vmatprep.subr.bf16.mxu0 0
      %642 = vmatpush1.bf16.msra.mxu0 0
      %643 = vmatprep.subr.bf16.mxu0 0
      %644 = vmatpush1.bf16.msra.mxu0 0
      %645 = vmatprep.subr.bf16.mxu0 0
      %646 = vmatpush1.bf16.msra.mxu0 0
      %647 = vmatprep.subr.bf16.mxu0 0
      %648 = vmatpush1.bf16.msra.mxu0 0
      %649 = vmatprep.subr.bf16.mxu0 0
      %650 = vmatpush1.bf16.msra.mxu0 0
      %651 = vmatprep.subr.bf16.mxu0 0
      %652 = vmatpush1.bf16.msra.mxu0 0
      %653 = vmatprep.subr.bf16.mxu0 0
      %654 = vmatpush1.bf16.msra.mxu0 0
      %655 = vmatprep.subr.bf16.mxu0 0
      %656 = vmatpush1.bf16.msra.mxu0 0
      %657 = vmatprep.subr.bf16.mxu0 0
      %658 = vmatpush1.bf16.msra.mxu0 0
      %659 = vmatprep.mubr.bf16.mxu0 0
      %660 = vmatmul.mubr.bf16.gmra.mrb[0].mxu0 %v625
      %v661 = vpop.f32.mrb[0].mxu0
      %v662 = vadd.f32 0.0, %v661
      %v663 = vpop.f32.mrb[0].mxu0
      %v664 = vpop.f32.mrb[0].mxu0
      %v665 = vadd.f32 0.0, %v664
      %v666 = vpop.f32.mrb[0].mxu0
      %667 = vdwg.mxu0
      %v668 = vadd.f32 %v608, %v662
      %v669 = vadd.f32 %v609, %v665
      %v670 = vxor.u32 %v668, 2147483648
      %v671 = vxor.u32 %v669, 2147483648
      %v672 = vmul.f32 %v670, 1.442695
      %v673 = vpow.pop %v672
      %v674 = vmul.f32 %v671, 1.442695
      %v675 = vpow.pop %v674
      %v676 = vadd.f32 %v673, 1.0
      %v677 = vadd.f32 %v675, 1.0
      %v678 = vrcp.pop %v676
      %v679 = vmul.f32 1.0, %v678
      %v680 = vrcp.pop %v677
      %v681 = vmul.f32 1.0, %v680
      %v682 = vtanh.pop %v668
      %v683 = vtanh.pop %v669
      %686 = vrot.lane.b32.xlu0 %v602, 32
      %v687 = vpop.permute.xlu0 %686
      %688 = vrot.lane.b32.xlu0 %v603, 32
      %v689 = vpop.permute.xlu0 %688
      %v692 = vmul.f32 %v679, %v687
      %v693 = vmul.f32 %v681, %v689
      %696 = vrot.lane.b32.xlu0 %v682, 64
      %v697 = vpop.permute.xlu0 %696
      %698 = vrot.lane.b32.xlu0 %v683, 64
      %v699 = vpop.permute.xlu0 %698
      %v702 = vmul.f32 %v679, %v697
      %v703 = vmul.f32 %v681, %v699
      %706 = vrot.lane.b32.xlu0 %v702, 32
      %v707 = vpop.permute.xlu0 %706
      %708 = vrot.lane.b32.xlu0 %v703, 32
      %v709 = vpop.permute.xlu0 %708
      %v712 = vadd.f32 %v692, %v707
      %v713 = vadd.f32 %v693, %v709
      %v714 = vtanh.pop %v712
      %v715 = vtanh.pop %v713
      %718 = vrot.lane.b32.xlu0 %v714, 64
      %v719 = vpop.permute.xlu0 %718
      %720 = vrot.lane.b32.xlu0 %v715, 64
      %v721 = vpop.permute.xlu0 %720
      %v724 = vmul.f32 %v679, %v719
      %v725 = vmul.f32 %v681, %v721
      %s726 = scalar_lea.vmem [#allocation3], 16
      %v727 = vld [vmem:[%s726] sm:$0xff]
      %v728 = vld [vmem:[%s726 + $0x8] sm:$0xff]
      %v729 = vpack.c.bf16 %v605, %v604
      %v734 = vunpack.c.l.b16 %v596
      %v735 = vunpack.c.l.b16 %v597
      %v736 = vunpack.c.l.b16 %v598
      %v737 = vunpack.c.l.b16 %v599
      %v738 = vpack.c.b16 %v735, %v734
      %v739 = vpack.c.b16 %v737, %v736
      %v743 = vsel %vm623, %v729, 0
      %745 = vmatprep.subr.bf16.mxu0 0
      %746 = vmatpush1.bf16.msra.mxu0 %v738
      %747 = vmatprep.subr.bf16.mxu0 0
      %748 = vmatpush1.bf16.msra.mxu0 %v739
      %749 = vmatprep.subr.bf16.mxu0 0
      %750 = vmatpush1.bf16.msra.mxu0 0
      %751 = vmatprep.subr.bf16.mxu0 0
      %752 = vmatpush1.bf16.msra.mxu0 0
      %753 = vmatprep.subr.bf16.mxu0 0
      %754 = vmatpush1.bf16.msra.mxu0 0
      %755 = vmatprep.subr.bf16.mxu0 0
      %756 = vmatpush1.bf16.msra.mxu0 0
      %757 = vmatprep.subr.bf16.mxu0 0
      %758 = vmatpush1.bf16.msra.mxu0 0
      %759 = vmatprep.subr.bf16.mxu0 0
      %760 = vmatpush1.bf16.msra.mxu0 0
      %761 = vmatprep.subr.bf16.mxu0 0
      %762 = vmatpush1.bf16.msra.mxu0 0
      %763 = vmatprep.subr.bf16.mxu0 0
      %764 = vmatpush1.bf16.msra.mxu0 0
      %765 = vmatprep.subr.bf16.mxu0 0
      %766 = vmatpush1.bf16.msra.mxu0 0
      %767 = vmatprep.subr.bf16.mxu0 0
      %768 = vmatpush1.bf16.msra.mxu0 0
      %769 = vmatprep.subr.bf16.mxu0 0
      %770 = vmatpush1.bf16.msra.mxu0 0
      %771 = vmatprep.subr.bf16.mxu0 0
      %772 = vmatpush1.bf16.msra.mxu0 0
      %773 = vmatprep.subr.bf16.mxu0 0
      %774 = vmatpush1.bf16.msra.mxu0 0
      %775 = vmatprep.subr.bf16.mxu0 0
      %776 = vmatpush1.bf16.msra.mxu0 0
      %777 = vmatprep.mubr.bf16.mxu0 0
      %778 = vmatmul.mubr.bf16.gmra.mrb[0].mxu0 %v743
      %v779 = vpop.f32.mrb[0].mxu0
      %v780 = vadd.f32 0.0, %v779
      %v781 = vpop.f32.mrb[0].mxu0
      %v782 = vpop.f32.mrb[0].mxu0
      %v783 = vadd.f32 0.0, %v782
      %v784 = vpop.f32.mrb[0].mxu0
      %785 = vdwg.mxu0
      %v786 = vadd.f32 %v727, %v780
      %v787 = vadd.f32 %v728, %v783
      %v788 = vxor.u32 %v786, 2147483648
      %v789 = vxor.u32 %v787, 2147483648
      %v790 = vmul.f32 %v788, 1.442695
      %v791 = vpow.pop %v790
      %v792 = vmul.f32 %v789, 1.442695
      %v793 = vpow.pop %v792
      %v794 = vadd.f32 %v791, 1.0
      %v795 = vadd.f32 %v793, 1.0
      %v796 = vrcp.pop %v794
      %v797 = vmul.f32 1.0, %v796
      %v798 = vrcp.pop %v795
      %v799 = vmul.f32 1.0, %v798
      %v800 = vtanh.pop %v786
      %v801 = vtanh.pop %v787
      %804 = vrot.lane.b32.xlu0 %v606, 32
      %v805 = vpop.permute.xlu0 %804
      %806 = vrot.lane.b32.xlu0 %v607, 32
      %v807 = vpop.permute.xlu0 %806
      %v810 = vmul.f32 %v797, %v805
      %v811 = vmul.f32 %v799, %v807
      %814 = vrot.lane.b32.xlu0 %v800, 64
      %v815 = vpop.permute.xlu0 %814
      %816 = vrot.lane.b32.xlu0 %v801, 64
      %v817 = vpop.permute.xlu0 %816
      %v820 = vmul.f32 %v797, %v815
      %v821 = vmul.f32 %v799, %v817
      %824 = vrot.lane.b32.xlu0 %v820, 32
      %v825 = vpop.permute.xlu0 %824
      %826 = vrot.lane.b32.xlu0 %v821, 32
      %v827 = vpop.permute.xlu0 %826
      %v830 = vadd.f32 %v810, %v825
      %v831 = vadd.f32 %v811, %v827
      %v832 = vtanh.pop %v830
      %v833 = vtanh.pop %v831
      %836 = vrot.lane.b32.xlu0 %v832, 64
      %v837 = vpop.permute.xlu0 %836
      %838 = vrot.lane.b32.xlu0 %v833, 64
      %v839 = vpop.permute.xlu0 %838
      %v842 = vmul.f32 %v797, %v837
      %v843 = vmul.f32 %v799, %v839
      %s844 = scalar_lea.vmem [#allocation2], 16
      %v845 = vld [vmem:[%s844] sm:$0xff]
      %v846 = vld [vmem:[%s844 + $0x8] sm:$0xff]
      %v847 = vpack.c.bf16 %v725, %v724
      %849 = vrot.lane.b32.xlu0 %v847, 32
      %v850 = vpop.permute.xlu0 %849
      %v852 = vsel %vm623, %v850, 0
      %854 = vmatprep.subr.bf16.mxu0 0
      %855 = vmatpush1.bf16.msra.mxu0 %v619
      %856 = vmatprep.subr.bf16.mxu0 0
      %857 = vmatpush1.bf16.msra.mxu0 %v620
      %858 = vmatprep.subr.bf16.mxu0 0
      %859 = vmatpush1.bf16.msra.mxu0 0
      %860 = vmatprep.subr.bf16.mxu0 0
      %861 = vmatpush1.bf16.msra.mxu0 0
      %862 = vmatprep.subr.bf16.mxu0 0
      %863 = vmatpush1.bf16.msra.mxu0 0
      %864 = vmatprep.subr.bf16.mxu0 0
      %865 = vmatpush1.bf16.msra.mxu0 0
      %866 = vmatprep.subr.bf16.mxu0 0
      %867 = vmatpush1.bf16.msra.mxu0 0
      %868 = vmatprep.subr.bf16.mxu0 0
      %869 = vmatpush1.bf16.msra.mxu0 0
      %870 = vmatprep.subr.bf16.mxu0 0
      %871 = vmatpush1.bf16.msra.mxu0 0
      %872 = vmatprep.subr.bf16.mxu0 0
      %873 = vmatpush1.bf16.msra.mxu0 0
      %874 = vmatprep.subr.bf16.mxu0 0
      %875 = vmatpush1.bf16.msra.mxu0 0
      %876 = vmatprep.subr.bf16.mxu0 0
      %877 = vmatpush1.bf16.msra.mxu0 0
      %878 = vmatprep.subr.bf16.mxu0 0
      %879 = vmatpush1.bf16.msra.mxu0 0
      %880 = vmatprep.subr.bf16.mxu0 0
      %881 = vmatpush1.bf16.msra.mxu0 0
      %882 = vmatprep.subr.bf16.mxu0 0
      %883 = vmatpush1.bf16.msra.mxu0 0
      %884 = vmatprep.subr.bf16.mxu0 0
      %885 = vmatpush1.bf16.msra.mxu0 0
      %886 = vmatprep.mubr.bf16.mxu0 0
      %887 = vmatmul.mubr.bf16.gmra.mrb[0].mxu0 %v852
      %v888 = vpop.f32.mrb[0].mxu0
      %v889 = vadd.f32 0.0, %v888
      %v890 = vpop.f32.mrb[0].mxu0
      %v891 = vpop.f32.mrb[0].mxu0
      %v892 = vadd.f32 0.0, %v891
      %v893 = vpop.f32.mrb[0].mxu0
      %894 = vdwg.mxu0
      %v895 = vadd.f32 %v845, %v889
      %v896 = vadd.f32 %v846, %v892
      %v897 = vxor.u32 %v895, 2147483648
      %v898 = vxor.u32 %v896, 2147483648
      %v899 = vmul.f32 %v897, 1.442695
      %v900 = vpow.pop %v899
      %v901 = vmul.f32 %v898, 1.442695
      %v902 = vpow.pop %v901
      %v903 = vadd.f32 %v900, 1.0
      %v904 = vadd.f32 %v902, 1.0
      %v905 = vrcp.pop %v903
      %v906 = vmul.f32 1.0, %v905
      %v907 = vrcp.pop %v904
      %v908 = vmul.f32 1.0, %v907
      %v909 = vtanh.pop %v895
      %v910 = vtanh.pop %v896
      %v911 = vmul.f32 %v906, %v712
      %v912 = vmul.f32 %v908, %v713
      %915 = vrot.lane.b32.xlu0 %v909, 64
      %v916 = vpop.permute.xlu0 %915
      %917 = vrot.lane.b32.xlu0 %v910, 64
      %v918 = vpop.permute.xlu0 %917
      %v921 = vmul.f32 %v906, %v916
      %v922 = vmul.f32 %v908, %v918
      %925 = vrot.lane.b32.xlu0 %v921, 32
      %v926 = vpop.permute.xlu0 %925
      %927 = vrot.lane.b32.xlu0 %v922, 32
      %v928 = vpop.permute.xlu0 %927
      %v931 = vadd.f32 %v911, %v926
      %v932 = vadd.f32 %v912, %v928
      %v933 = vtanh.pop %v931
      %v934 = vtanh.pop %v932
      %937 = vrot.lane.b32.xlu0 %v933, 64
      %v938 = vpop.permute.xlu0 %937
      %939 = vrot.lane.b32.xlu0 %v934, 64
      %v940 = vpop.permute.xlu0 %939
      %v943 = vmul.f32 %v906, %v938
      %v944 = vmul.f32 %v908, %v940
      %v945 = vld [vmem:[#allocation3] sm:$0xff]
      %v946 = vld [vmem:[#allocation3 + $0x8] sm:$0xff]
      %v947 = vpack.c.bf16 %v843, %v842
      %949 = vrot.lane.b32.xlu0 %v947, 32
      %v950 = vpop.permute.xlu0 %949
      %v952 = vsel %vm623, %v950, 0
      %954 = vmatprep.subr.bf16.mxu0 0
      %955 = vmatpush1.bf16.msra.mxu0 %v738
      %956 = vmatprep.subr.bf16.mxu0 0
      %957 = vmatpush1.bf16.msra.mxu0 %v739
      %958 = vmatprep.subr.bf16.mxu0 0
      %959 = vmatpush1.bf16.msra.mxu0 0
      %960 = vmatprep.subr.bf16.mxu0 0
      %961 = vmatpush1.bf16.msra.mxu0 0
      %962 = vmatprep.subr.bf16.mxu0 0
      %963 = vmatpush1.bf16.msra.mxu0 0
      %964 = vmatprep.subr.bf16.mxu0 0
      %965 = vmatpush1.bf16.msra.mxu0 0
      %966 = vmatprep.subr.bf16.mxu0 0
      %967 = vmatpush1.bf16.msra.mxu0 0
      %968 = vmatprep.subr.bf16.mxu0 0
      %969 = vmatpush1.bf16.msra.mxu0 0
      %970 = vmatprep.subr.bf16.mxu0 0
      %971 = vmatpush1.bf16.msra.mxu0 0
      %972 = vmatprep.subr.bf16.mxu0 0
      %973 = vmatpush1.bf16.msra.mxu0 0
      %974 = vmatprep.subr.bf16.mxu0 0
      %975 = vmatpush1.bf16.msra.mxu0 0
      %976 = vmatprep.subr.bf16.mxu0 0
      %977 = vmatpush1.bf16.msra.mxu0 0
      %978 = vmatprep.subr.bf16.mxu0 0
      %979 = vmatpush1.bf16.msra.mxu0 0
      %980 = vmatprep.subr.bf16.mxu0 0
      %981 = vmatpush1.bf16.msra.mxu0 0
      %982 = vmatprep.subr.bf16.mxu0 0
      %983 = vmatpush1.bf16.msra.mxu0 0
      %984 = vmatprep.subr.bf16.mxu0 0
      %985 = vmatpush1.bf16.msra.mxu0 0
      %986 = vmatprep.mubr.bf16.mxu0 0
      %987 = vmatmul.mubr.bf16.gmra.mrb[0].mxu0 %v952
      %v988 = vpop.f32.mrb[0].mxu0
      %v989 = vadd.f32 0.0, %v988
      %v990 = vpop.f32.mrb[0].mxu0
      %v991 = vpop.f32.mrb[0].mxu0
      %v992 = vadd.f32 0.0, %v991
      %v993 = vpop.f32.mrb[0].mxu0
      %994 = vdwg.mxu0
      %v995 = vadd.f32 %v945, %v989
      %v996 = vadd.f32 %v946, %v992
      %v997 = vxor.u32 %v995, 2147483648
      %v998 = vxor.u32 %v996, 2147483648
      %v999 = vmul.f32 %v997, 1.442695
      %v1000 = vpow.pop %v999
      %v1001 = vmul.f32 %v998, 1.442695
      %v1002 = vpow.pop %v1001
      %v1003 = vadd.f32 %v1000, 1.0
      %v1004 = vadd.f32 %v1002, 1.0
      %v1005 = vrcp.pop %v1003
      %v1006 = vmul.f32 1.0, %v1005
      %v1007 = vrcp.pop %v1004
      %v1008 = vmul.f32 1.0, %v1007
      %v1009 = vtanh.pop %v995
      %v1010 = vtanh.pop %v996
      %v1011 = vmul.f32 %v1006, %v830
      %v1012 = vmul.f32 %v1008, %v831
      %1015 = vrot.lane.b32.xlu0 %v1009, 64
      %v1016 = vpop.permute.xlu0 %1015
      %1017 = vrot.lane.b32.xlu0 %v1010, 64
      %v1018 = vpop.permute.xlu0 %1017
      %v1021 = vmul.f32 %v1006, %v1016
      %v1022 = vmul.f32 %v1008, %v1018
      %1025 = vrot.lane.b32.xlu0 %v1021, 32
      %v1026 = vpop.permute.xlu0 %1025
      %1027 = vrot.lane.b32.xlu0 %v1022, 32
      %v1028 = vpop.permute.xlu0 %1027
      %v1031 = vadd.f32 %v1011, %v1026
      %v1032 = vadd.f32 %v1012, %v1028
      %v1033 = vtanh.pop %v1031
      %v1034 = vtanh.pop %v1032
      %1037 = vrot.lane.b32.xlu0 %v1033, 64
      %v1038 = vpop.permute.xlu0 %1037
      %1039 = vrot.lane.b32.xlu0 %v1034, 64
      %v1040 = vpop.permute.xlu0 %1039
      %v1043 = vmul.f32 %v1006, %v1038
      %v1044 = vmul.f32 %v1008, %v1040
      %1047 = vrot.lane.b32.xlu0 %v943, 32
      %v1048 = vpop.permute.xlu0 %1047
      %1049 = vrot.lane.b32.xlu0 %v944, 32
      %v1050 = vpop.permute.xlu0 %1049
      %1053 = vst.msk [vmem:[#allocation4] sm:$0xff] %vm623, %v1048
      %1054 = vst.msk [vmem:[#allocation4 + $0x8] sm:$0xff] %vm623, %v1050
      %1057 = vrot.lane.b32.xlu0 %v931, 96
      %v1058 = vpop.permute.xlu0 %1057
      %1059 = vrot.lane.b32.xlu0 %v932, 96
      %v1060 = vpop.permute.xlu0 %1059
      %1063 = vst.msk [vmem:[#allocation5] sm:$0xff] %vm623, %v1058
      %1064 = vst.msk [vmem:[#allocation5 + $0x8] sm:$0xff] %vm623, %v1060
      %1067 = vrot.lane.b32.xlu0 %v1043, 32
      %v1068 = vpop.permute.xlu0 %1067
      %1069 = vrot.lane.b32.xlu0 %v1044, 32
      %v1070 = vpop.permute.xlu0 %1069
      %1073 = vst.msk [vmem:[#allocation6] sm:$0xff] %vm623, %v1068
      %1074 = vst.msk [vmem:[#allocation6 + $0x8] sm:$0xff] %vm623, %v1070
      %1077 = vrot.lane.b32.xlu0 %v1031, 96
      %v1078 = vpop.permute.xlu0 %1077
      %1079 = vrot.lane.b32.xlu0 %v1032, 96
      %v1080 = vpop.permute.xlu0 %1079
      %1083 = vst.msk [vmem:[#allocation7] sm:$0xff] %vm623, %v1078
      %1084 = vst.msk [vmem:[#allocation7 + $0x8] sm:$0xff] %vm623, %v1080
      %p1085 = scmp.eq.s32.totalorder %s23, 3
      // Predicated region
      $region65: #{vae_forward.3} parent=59 // pred_check
        %p1086 = pneg %p1085
      $region66: #{vae_forward.3} parent=59 // pred_check_branch
        %1088 = sbr.rel (%p1086) target = $region68
      $region67: #{vae_forward.3} parent=59 // pred_region
        %v1089 = vld [vmem:[#allocation4] sm:$0xff]
        %v1090 = vld [vmem:[#allocation4 + $0x8] sm:$0xff]
        %v1091 = vld [vmem:[#allocation6] sm:$0xff]
        %v1092 = vld [vmem:[#allocation6 + $0x8] sm:$0xff]
        %1095 = vrot.lane.b32.xlu0 %v1091, 32
        %v1096 = vpop.permute.xlu0 %1095
        %1097 = vrot.lane.b32.xlu0 %v1092, 32
        %v1098 = vpop.permute.xlu0 %1097
        %v1101 = vsel %vm623, %v1089, %v1096
        %v1102 = vsel %vm623, %v1090, %v1098
        %v1103 = vpack.c.bf16 %v1102, %v1101
        %v1104 = vld [vmem:[%s8] sm:$0xf]
        %v1105 = vld [vmem:[%s8 + $0x4] sm:$0xf]
        %v1106 = vld [vmem:[%s8 + $0x8] sm:$0xf]
        %v1107 = vld [vmem:[%s8 + $0xc] sm:$0xf]
        %v1108 = vld [vmem:[%s8 + $0x10] sm:$0xf]
        %v1109 = vld [vmem:[%s8 + $0x14] sm:$0xf]
        %v1110 = vld [vmem:[%s8 + $0x18] sm:$0xf]
        %v1111 = vld [vmem:[%s8 + $0x1c] sm:$0xf]
        %v1112 = vld [vmem:[%s9] sm:$0x1]
        %v1114 = vlaneseq
        %v1115 = vshrl.u32 %v1114, 7
        %v1116 = vsub.s32 0, %v1115
        %v1117 = vrot.slane %v1112, %v1116
        %v1127 = vunpack.c.l.b16 %v1104
        %v1128 = vunpack.c.l.b16 %v1105
        %v1129 = vunpack.c.l.b16 %v1106
        %v1130 = vunpack.c.l.b16 %v1107
        %v1131 = vunpack.c.l.b16 %v1108
        %v1132 = vunpack.c.l.b16 %v1109
        %v1133 = vunpack.c.l.b16 %v1110
        %v1134 = vunpack.c.l.b16 %v1111
        %v1135 = vpack.c.b16 %v1128, %v1127
        %v1136 = vpack.c.b16 %v1130, %v1129
        %v1137 = vpack.c.b16 %v1132, %v1131
        %v1138 = vpack.c.b16 %v1134, %v1133
        %vm1143 = vcmask 523264
        %v1145 = vsel %vm1143, %v1103, 0
        %1147 = vmatprep.subr.bf16.mxu0 0
        %1148 = vmatpush1.bf16.msra.mxu0 %v1135
        %1149 = vmatprep.subr.bf16.mxu0 0
        %1150 = vmatpush1.bf16.msra.mxu0 %v1136
        %1151 = vmatprep.subr.bf16.mxu0 0
        %1152 = vmatpush1.bf16.msra.mxu0 %v1137
        %1153 = vmatprep.subr.bf16.mxu0 0
        %1154 = vmatpush1.bf16.msra.mxu0 %v1138
        %1155 = vmatprep.subr.bf16.mxu0 0
        %1156 = vmatpush1.bf16.msra.mxu0 0
        %1157 = vmatprep.subr.bf16.mxu0 0
        %1158 = vmatpush1.bf16.msra.mxu0 0
        %1159 = vmatprep.subr.bf16.mxu0 0
        %1160 = vmatpush1.bf16.msra.mxu0 0
        %1161 = vmatprep.subr.bf16.mxu0 0
        %1162 = vmatpush1.bf16.msra.mxu0 0
        %1163 = vmatprep.subr.bf16.mxu0 0
        %1164 = vmatpush1.bf16.msra.mxu0 0
        %1165 = vmatprep.subr.bf16.mxu0 0
        %1166 = vmatpush1.bf16.msra.mxu0 0
        %1167 = vmatprep.subr.bf16.mxu0 0
        %1168 = vmatpush1.bf16.msra.mxu0 0
        %1169 = vmatprep.subr.bf16.mxu0 0
        %1170 = vmatpush1.bf16.msra.mxu0 0
        %1171 = vmatprep.subr.bf16.mxu0 0
        %1172 = vmatpush1.bf16.msra.mxu0 0
        %1173 = vmatprep.subr.bf16.mxu0 0
        %1174 = vmatpush1.bf16.msra.mxu0 0
        %1175 = vmatprep.subr.bf16.mxu0 0
        %1176 = vmatpush1.bf16.msra.mxu0 0
        %1177 = vmatprep.subr.bf16.mxu0 0
        %1178 = vmatpush1.bf16.msra.mxu0 0
        %1179 = vmatprep.mubr.bf16.mxu0 0
        %1180 = vmatmul.mubr.bf16.gmra.mrb[0].mxu0 %v1145
        %v1181 = vpop.f32.mrb[0].mxu0
        %v1182 = vadd.f32 %v1117, %v1181
        %v1183 = vpop.f32.mrb[0].mxu0
        %v1184 = vpop.f32.mrb[0].mxu0
        %v1185 = vadd.f32 %v1117, %v1184
        %v1186 = vpop.f32.mrb[0].mxu0
        %1187 = vdwg.mxu0
        %vm1188 = vcmask 64512
        %1189 = vst.msk [vmem:[%s10] sm:$0xff] %vm1188, %v1182
        %1190 = vst.msk [vmem:[%s10 + $0x8] sm:$0xff] %vm1188, %v1185
        %1193 = vrot.lane.b32.xlu0 %v1182, 120
        %v1194 = vpop.permute.xlu0 %1193
        %1195 = vrot.lane.b32.xlu0 %v1185, 120
        %v1196 = vpop.permute.xlu0 %1195
        %1199 = vst.msk [vmem:[%s11] sm:$0xff] %vm1188, %v1194
        %1200 = vst.msk [vmem:[%s11 + $0x8] sm:$0xff] %vm1188, %v1196
      $region68: #{vae_forward.3} parent=59 // pred_fallthru
        _
      // Predicated region
      $region69: #{vae_forward.3} parent=59 // pred_check
        %p1201 = pneg %p258
      $region70: #{vae_forward.3} parent=59 // pred_check_branch
        %1203 = sbr.rel (%p1201) target = $region72
      $region71: #{vae_forward.3} parent=59 // pred_region
        _
      $region72: #{vae_forward.3} parent=59 // pred_fallthru
        _
      // Predicated region
      $region73: #{vae_forward.3} parent=59 // pred_check
        %p1204 = pneg %p279
      $region74: #{vae_forward.3} parent=59 // pred_check_branch
        %1206 = sbr.rel (%p1204) target = $region76
      $region75: #{vae_forward.3} parent=59 // pred_region
        _
      $region76: #{vae_forward.3} parent=59 // pred_fallthru
        _
      // Predicated region
      $region77: #{vae_forward.3} parent=59 // pred_check
        %p1207 = pneg %p258
      $region78: #{vae_forward.3} parent=59 // pred_check_branch
        %1209 = sbr.rel (%p1207) target = $region80
      $region79: #{vae_forward.3} parent=59 // pred_region
        _
      $region80: #{vae_forward.3} parent=59 // pred_fallthru
        _
      // Predicated region
      $region81: #{vae_forward.3} parent=59 // pred_check
        %p1210 = pneg %p279
      $region82: #{vae_forward.3} parent=59 // pred_check_branch
        %1212 = sbr.rel (%p1210) target = $region84
      $region83: #{vae_forward.3} parent=59 // pred_region
        _
      $region84: #{vae_forward.3} parent=59 // pred_fallthru
        _
    $region60: #{vae_forward.3} parent=5 // pred_fallthru
      _
    %p1213 = scmp.le.s32.totalorder 2, %s18
    // Predicated region
    $region85: #{vae_forward.3} parent=5 // pred_check
      %p1214 = pneg %p1213
    $region86: #{vae_forward.3} parent=5 // pred_check_branch
      %1216 = sbr.rel (%p1214) target = $region88
    $region87: #{vae_forward.3} parent=5 // pred_region
      %s1217 = ssub.s32 %s18, 2
    $region88: #{vae_forward.3} parent=5 // pred_fallthru
      _
  $region6: #{vae_forward.3} parent=0 // loop_footer
    %s22 = sadd.s32 1, %s18
  $region7: #{vae_forward.3} parent=0 // loop_footer_branch
    %17 = sbr.rel target = $region3
  $region8: #{vae_forward.3} parent=0 // loop_exit
    _

</llo_original>
